<compile_context>
chip_gen: v6e
topology: v6e:2x2x1
jax: 0.10.0
libtpu: 0.0.40
codegen_flags: <defaults>
</compile_context>

<pallas_src>
import functools

import jax
import jax.numpy as jnp
from jax import lax
from jax.experimental import pallas as pl
from jax.experimental.pallas import tpu as pltpu


def _mm(a, b):
    return jnp.dot(a, b, preferred_element_type=jnp.float32)


def rmsnet_kernel(
    num_class, t,
    feat_ref,                                    # (bblk*T, 2048) f32 block
    wn_ref, bn_ref,                              # neck : (2048, 512) bf16, (1, 512) f32
    w1_ref, b1_ref,                              # fc1  : (512, 256)  bf16, (1, 256) f32
    wc1_ref, bc1_ref,                            # conv1: (3*256, 256) bf16, (1, 256) f32
    wc2_ref, bc2_ref,                            # conv2: (3*256, 128) bf16, (1, 128) f32
    wh_ref, bh_ref,                              # fused fc2+heads: (128, 128) bf16, (1, 128) f32
    out_ref,                                     # (bblk, 128) f32, lane-dense head
):
    rows, _ = feat_ref.shape
    bblk = rows // t
    bf16 = jnp.bfloat16

    # Cast after the VMEM load (input streams in as f32; one HBM read, no
    # wrapper-side cast pass).
    x = feat_ref[...].astype(bf16)                                # (rows, 2048)

    # neck: Linear(2048 -> 512) + ReLU   (bf16 MXU operands, f32 accum/VPU)
    h = jnp.maximum(_mm(x, wn_ref[...]) + bn_ref[...], 0.0)       # (rows, 512) f32
    # fc1: Linear(512 -> 256)
    a = _mm(h.astype(bf16), w1_ref[...]) + b1_ref[...]            # (rows, 256) f32

    # Sequence-boundary masks: rows are bblk sequences of length T laid out
    # back to back; conv taps must not leak across adjacent sequences (this
    # also fences off any stale rows in a partial last block).
    row = lax.broadcasted_iota(jnp.int32, (rows, 1), 0)
    is_first = (row % t) == 0
    is_last = (row % t) == (t - 1)

    def conv3(v, w_ref, b_ref):
        # k=3, padding=1 temporal conv as three accumulating matmuls against
        # static row-slices of the fused (3*Cin, Cout) weight — no lane-concat
        # temp.  Taps via XLU roll (sublane rotation) + boundary zero-mask.
        cin_c = v.shape[-1]
        prev = jnp.where(is_first, 0.0, pltpu.roll(v, 1, 0))          # v[j-1]
        nxt = jnp.where(is_last, 0.0, pltpu.roll(v, rows - 1, 0))     # v[j+1]
        return (_mm(prev.astype(bf16), w_ref[:cin_c, :])
                + _mm(v.astype(bf16), w_ref[cin_c:2 * cin_c, :])
                + _mm(nxt.astype(bf16), w_ref[2 * cin_c:, :])
                + b_ref[...])

    c1 = jnp.maximum(conv3(a, wc1_ref, bc1_ref), 0.0)             # (rows, 256)
    c2 = conv3(c1, wc2_ref, bc2_ref)                              # (rows, 128)
    # Dropout(p=0.1) is identity in eval mode.

    # max over time, per sequence.  With T a multiple of 8 this reshape is a
    # pure layout no-op on the (8,128) tiling.
    m = jnp.max(c2.reshape(bblk, t, c2.shape[-1]), axis=1)        # (bblk, 128)

    # fused fc2 @ (fc_cls | fc_reg): single (bblk,128)@(128,128) tail matmul
    y = _mm(m.astype(bf16), wh_ref[...]) + bh_ref[...]            # (bblk, 128)
    lane = lax.broadcasted_iota(jnp.int32, (1, y.shape[-1]), 1)
    y = jnp.where(lane == num_class, jax.nn.sigmoid(y), y)        # sigmoid only on reg lane
    out_ref[...] = y.astype(out_ref.dtype)


def prepare_params(params, num_class=4):
    """One-time (load-time) weight re-layout: transpose to (in, out), fuse the
    k=3 conv taps into (3*Cin, Cout), pack fc_cls/fc_reg into one lane-dense
    head, algebraically fuse fc2 into that head (computed in f32, then cast),
    and cast all MXU operands to bf16 (biases stay f32)."""
    f32, bf16 = jnp.float32, jnp.bfloat16

    def kio_fused(w_pt):                     # (O, I, K) -> (K*I, O), k-major rows
        o, i, k = w_pt.shape
        return jnp.transpose(w_pt, (2, 1, 0)).reshape(k * i, o)

    d_head = params["Wcls_pt"].shape[1]                       # 64
    head_w = ((num_class + 1 + 127) // 128) * 128             # lane-dense width
    wh = jnp.zeros((d_head, head_w), f32)
    wh = wh.at[:, :num_class].set(params["Wcls_pt"].T.astype(f32))
    wh = wh.at[:, num_class].set(params["Wreg_pt"][0].astype(f32))
    bh = jnp.zeros((1, head_w), f32)
    bh = bh.at[0, :num_class].set(params["bcls"].astype(f32))
    bh = bh.at[0, num_class].set(params["breg"][0].astype(f32))

    # Fuse fc2 into the packed head (no nonlinearity between them):
    #   y = (m @ W2^T + b2) @ Wh + bh = m @ (W2^T @ Wh) + (b2 @ Wh + bh)
    w2t = params["W2_pt"].T.astype(f32)                       # (128, 64)
    wh_fused = w2t @ wh                                       # (128, head_w), f32
    bh_fused = (params["b2"].astype(f32) @ wh)[None, :] + bh  # (1, head_w)

    return {
        "wn": params["Wn_pt"].T.astype(bf16),
        "bn": params["bn"].reshape(1, -1).astype(f32),
        "w1": params["W1_pt"].T.astype(bf16),
        "b1": params["b1"].reshape(1, -1).astype(f32),
        "wc1": kio_fused(params["Wc1_pt"]).astype(bf16),
        "bc1": params["bc1"].reshape(1, -1).astype(f32),
        "wc2": kio_fused(params["Wc2_pt"]).astype(bf16),
        "bc2": params["bc2"].reshape(1, -1).astype(f32),
        "wh": wh_fused.astype(bf16),
        "bh": bh_fused,
    }


@functools.partial(jax.jit, static_argnames=("num_class",))
def rmsnet_forward(feat, prepped, *, num_class=4):
    """feat: (B, T, 2048) f32 (or bf16) — pooled backbone features per frame.
    Returns (out_cls (B, num_class), out_reg (B, 1))."""
    b, t, cin = feat.shape
    head_w = prepped["wh"].shape[1]

    # ~1024 MXU rows per grid step (generation-safe: the f32 feature tile is
    # 8 MiB, 16 MiB double-buffered; total working set ~30 MiB < v7x 64 MiB).
    target_rows = 1024
    bblk = max(1, target_rows // max(t, 1))
    if bblk >= b:
        if b >= 16:
            # Split into >=2 balanced steps so both v7x TensorCores get work
            # on the "parallel" grid axis; keep bblk a multiple of 8 so every
            # row block stays (8,128)-aligned.
            bblk = (((b + 1) // 2) + 7) // 8 * 8
        else:
            bblk = b          # single full block: block shape == array dims
    else:
        bblk = max(8, (bblk // 8) * 8)
    grid_n = -(-b // bblk)    # partial last block handled by Pallas masking
    rows_blk = bblk * t

    # Free reshape of a contiguous array: present the features as a 2-D slab
    # so the feature BlockSpec is trivially (8,128)-aligned for any T and no
    # in-kernel (bblk, T, C) -> (rows, C) relayout is needed.
    feat2d = feat.reshape(b * t, cin)

    # NOTE: weight index_maps are grid-invariant, so Pallas keeps them
    # resident in VMEM and does not re-DMA them per grid step.
    def wfull(arr):
        nd = arr.ndim
        return pl.BlockSpec(arr.shape, lambda i, _nd=nd: (0,) * _nd)

    weight_order = ("wn", "bn", "w1", "b1", "wc1", "bc1", "wc2", "bc2", "wh", "bh")
    weights = [prepped[k] for k in weight_order]

    in_specs = [pl.BlockSpec((rows_blk, cin), lambda i: (i, 0))]
    in_specs += [wfull(w) for w in weights]
    out_specs = pl.BlockSpec((bblk, head_w), lambda i: (i, 0))

    out = pl.pallas_call(
        functools.partial(rmsnet_kernel, num_class, t),
        out_shape=jax.ShapeDtypeStruct((b, head_w), jnp.float32),
        grid_spec=pltpu.PrefetchScalarGridSpec(
            num_scalar_prefetch=0,
            grid=(grid_n,),
            in_specs=in_specs,
            out_specs=out_specs,
        ),
        compiler_params=pltpu.CompilerParams(
            dimension_semantics=("parallel",),
            vmem_limit_bytes=48 * 1024 * 1024,   # > working set, < v7x 64 MiB/TC
        ),
    )(feat2d, *weights)

    out_cls = out[:, :num_class]
    out_reg = out[:, num_class:num_class + 1]
    return out_cls, out_reg


def rmsnet_reference(feat, params):
    """Pure-JAX f32 reference mirroring the PyTorch forward exactly (eval mode)."""
    h = jax.nn.relu(feat @ params["Wn_pt"].T + params["bn"])      # neck
    h = h @ params["W1_pt"].T + params["b1"]                      # fc1, (B,T,256)
    x = jnp.transpose(h, (0, 2, 1))                               # (B,256,T)
    y = lax.conv_general_dilated(
        x, params["Wc1_pt"], window_strides=(1,), padding=[(1, 1)],
        dimension_numbers=("NCH", "OIH", "NCH")) + params["bc1"][None, :, None]
    y = jax.nn.relu(y)
    y = lax.conv_general_dilated(
        y, params["Wc2_pt"], window_strides=(1,), padding=[(1, 1)],
        dimension_numbers=("NCH", "OIH", "NCH")) + params["bc2"][None, :, None]
    y = jnp.max(y, axis=-1)                                       # (B,128)
    f = y @ params["W2_pt"].T + params["b2"]                      # (B,64)
    out_cls = f @ params["Wcls_pt"].T + params["bcls"]
    out_reg = jax.nn.sigmoid(f @ params["Wreg_pt"].T + params["breg"])
    return out_cls, out_reg


def init_params(key, num_class=4):
    ks = jax.random.split(key, 14)
    s = 0.05
    f32 = jnp.float32
    return {
        "Wn_pt":  jax.random.normal(ks[0], (512, 2048), f32) * s,
        "bn":     jax.random.normal(ks[1], (512,), f32) * s,
        "W1_pt":  jax.random.normal(ks[2], (256, 512), f32) * s,
        "b1":     jax.random.normal(ks[3], (256,), f32) * s,
        "Wc1_pt": jax.random.normal(ks[4], (256, 256, 3), f32) * s,
        "bc1":    jax.random.normal(ks[5], (256,), f32) * s,
        "Wc2_pt": jax.random.normal(ks[6], (128, 256, 3), f32) * s,
        "bc2":    jax.random.normal(ks[7], (128,), f32) * s,
        "W2_pt":  jax.random.normal(ks[8], (64, 128), f32) * s,
        "b2":     jax.random.normal(ks[9], (64,), f32) * s,
        "Wcls_pt": jax.random.normal(ks[10], (num_class, 64), f32) * s,
        "bcls":   jax.random.normal(ks[11], (num_class,), f32) * s,
        "Wreg_pt": jax.random.normal(ks[12], (1, 64), f32) * s,
        "breg":   jax.random.normal(ks[13], (1,), f32) * s,
    }


if __name__ == "__main__":
    key = jax.random.PRNGKey(0)
    kp, kf, kf2 = jax.random.split(key, 3)

    B, T, NUM_CLASS = 2, 8, 4
    params = init_params(kp, num_class=NUM_CLASS)
    prepped = prepare_params(params, num_class=NUM_CLASS)   # one-time weight re-layout

    # Per-frame pooled ResNet-50 features (stand-in for the frozen backbone).
    feat = jax.random.normal(kf, (B, T, 2048), jnp.float32)

    out_cls, out_reg = rmsnet_forward(feat, prepped, num_class=NUM_CLASS)
    jax.block_until_ready((out_cls, out_reg))

    ref_cls, ref_reg = rmsnet_reference(feat, params)
    assert out_cls.shape == (B, NUM_CLASS) and out_reg.shape == (B, 1)
    # bf16 MXU operands (f32 accumulation) -> slightly looser tolerance vs f32 ref.
    assert jnp.allclose(out_cls, ref_cls, rtol=3e-2, atol=3e-2)
    assert jnp.allclose(out_reg, ref_reg, rtol=3e-2, atol=3e-2)

    # Second check exercising the multi-step grid + partial-last-block path
    # (70 sequences -> 2 steps of 40/30, no wrapper-side padding).
    B2 = 70
    feat2 = jax.random.normal(kf2, (B2, T, 2048), jnp.float32)
    cls2, reg2 = rmsnet_forward(feat2, prepped, num_class=NUM_CLASS)
    jax.block_until_ready((cls2, reg2))
    rcls2, rreg2 = rmsnet_reference(feat2, params)
    assert cls2.shape == (B2, NUM_CLASS) and reg2.shape == (B2, 1)
    assert jnp.allclose(cls2, rcls2, rtol=3e-2, atol=3e-2)
    assert jnp.allclose(reg2, rreg2, rtol=3e-2, atol=3e-2)

    print("KERNEL_OK")
</pallas_src>

<mosaic_0001>
module attributes {stable_mosaic.version = 11 : i64} {
  func.func @rmsnet_kernel(%arg0: i32, %arg1: memref<16x2048xf32, #tpu.memory_space<vmem>>, %arg2: memref<2048x512xbf16, #tpu.memory_space<vmem>>, %arg3: memref<1x512xf32, #tpu.memory_space<vmem>>, %arg4: memref<512x256xbf16, #tpu.memory_space<vmem>>, %arg5: memref<1x256xf32, #tpu.memory_space<vmem>>, %arg6: memref<768x256xbf16, #tpu.memory_space<vmem>>, %arg7: memref<1x256xf32, #tpu.memory_space<vmem>>, %arg8: memref<768x128xbf16, #tpu.memory_space<vmem>>, %arg9: memref<1x128xf32, #tpu.memory_space<vmem>>, %arg10: memref<128x128xbf16, #tpu.memory_space<vmem>>, %arg11: memref<1x128xf32, #tpu.memory_space<vmem>>, %arg12: memref<2x128xf32, #tpu.memory_space<vmem>>) attributes {dimension_semantics = [#tpu.dimension_semantics<parallel>], iteration_bounds = array<i64: 1>, scalar_prefetch = 0 : i64, scratch_operands = 0 : i64, tpu.core_type = #tpu.core_type<tc>, window_params = [{transform_indices = @transform_0, window_bounds = array<i64: 16, 2048>}, {pipeline_mode = #tpu.pipeline_mode<synchronous>, transform_indices = @transform_1, window_bounds = array<i64: 2048, 512>}, {pipeline_mode = #tpu.pipeline_mode<synchronous>, transform_indices = @transform_2, window_bounds = array<i64: 1, 512>}, {pipeline_mode = #tpu.pipeline_mode<synchronous>, transform_indices = @transform_3, window_bounds = array<i64: 512, 256>}, {pipeline_mode = #tpu.pipeline_mode<synchronous>, transform_indices = @transform_4, window_bounds = array<i64: 1, 256>}, {pipeline_mode = #tpu.pipeline_mode<synchronous>, transform_indices = @transform_5, window_bounds = array<i64: 768, 256>}, {pipeline_mode = #tpu.pipeline_mode<synchronous>, transform_indices = @transform_6, window_bounds = array<i64: 1, 256>}, {pipeline_mode = #tpu.pipeline_mode<synchronous>, transform_indices = @transform_7, window_bounds = array<i64: 768, 128>}, {pipeline_mode = #tpu.pipeline_mode<synchronous>, transform_indices = @transform_8, window_bounds = array<i64: 1, 128>}, {pipeline_mode = #tpu.pipeline_mode<synchronous>, transform_indices = @transform_9, window_bounds = array<i64: 128, 128>}, {pipeline_mode = #tpu.pipeline_mode<synchronous>, transform_indices = @transform_10, window_bounds = array<i64: 1, 128>}, {transform_indices = @transform_11, window_bounds = array<i64: 2, 128>}]} {
    %c0 = arith.constant 0 : index
    %c0_0 = arith.constant 0 : index
    %0 = vector.load %arg1[%c0, %c0_0] : memref<16x2048xf32, #tpu.memory_space<vmem>>, vector<16x2048xf32>
    %1 = arith.truncf %0 : vector<16x2048xf32> to vector<16x2048xbf16>
    %c0_1 = arith.constant 0 : index
    %c0_2 = arith.constant 0 : index
    %2 = vector.load %arg2[%c0_1, %c0_2] : memref<2048x512xbf16, #tpu.memory_space<vmem>>, vector<2048x512xbf16>
    %cst = arith.constant dense<0.000000e+00> : vector<16x512xf32>
    %3 = tpu.matmul %1, %2, %cst {dimension_numbers = #tpu.dot_dimension_numbers<[1], [0], [0], [1], [0, 0, 1, 1], [], []>} : vector<16x2048xbf16>, vector<2048x512xbf16>, vector<16x512xf32> -> vector<16x512xf32>
    %c0_3 = arith.constant 0 : index
    %c0_4 = arith.constant 0 : index
    %4 = vector.load %arg3[%c0_3, %c0_4] : memref<1x512xf32, #tpu.memory_space<vmem>>, vector<1x512xf32>
    %5 = vector.broadcast %4 : vector<1x512xf32> to vector<16x512xf32>
    %6 = arith.addf %3, %5 : vector<16x512xf32>
    %cst_5 = arith.constant 0.000000e+00 : f32
    %7 = vector.broadcast %cst_5 : f32 to vector<16x512xf32>
    %8 = arith.maximumf %6, %7 : vector<16x512xf32>
    %9 = arith.truncf %8 : vector<16x512xf32> to vector<16x512xbf16>
    %c0_6 = arith.constant 0 : index
    %c0_7 = arith.constant 0 : index
    %10 = vector.load %arg4[%c0_6, %c0_7] : memref<512x256xbf16, #tpu.memory_space<vmem>>, vector<512x256xbf16>
    %cst_8 = arith.constant dense<0.000000e+00> : vector<16x256xf32>
    %11 = tpu.matmul %9, %10, %cst_8 {dimension_numbers = #tpu.dot_dimension_numbers<[1], [0], [0], [1], [0, 0, 1, 1], [], []>} : vector<16x512xbf16>, vector<512x256xbf16>, vector<16x256xf32> -> vector<16x256xf32>
    %c0_9 = arith.constant 0 : index
    %c0_10 = arith.constant 0 : index
    %12 = vector.load %arg5[%c0_9, %c0_10] : memref<1x256xf32, #tpu.memory_space<vmem>>, vector<1x256xf32>
    %13 = vector.broadcast %12 : vector<1x256xf32> to vector<16x256xf32>
    %14 = arith.addf %11, %13 : vector<16x256xf32>
    %15 = tpu.iota {dimensions = array<i32: 0>} : vector<16x1xi32>
    %c8_i32 = arith.constant 8 : i32
    %c0_i32 = arith.constant 0 : i32
    %16 = arith.cmpi eq, %c8_i32, %c0_i32 : i32
    %c1_i32 = arith.constant 1 : i32
    %17 = arith.select %16, %c1_i32, %c8_i32 : i32
    %18 = vector.broadcast %17 : i32 to vector<16x1xi32>
    %19 = arith.remsi %15, %18 : vector<16x1xi32>
    %c0_i32_11 = arith.constant 0 : i32
    %20 = vector.broadcast %c0_i32_11 : i32 to vector<16x1xi32>
    %21 = arith.cmpi ne, %19, %20 : vector<16x1xi32>
    %c0_i32_12 = arith.constant 0 : i32
    %22 = vector.broadcast %c0_i32_12 : i32 to vector<16x1xi32>
    %23 = arith.cmpi slt, %19, %22 : vector<16x1xi32>
    %c0_i32_13 = arith.constant 0 : i32
    %24 = arith.cmpi slt, %17, %c0_i32_13 : i32
    %25 = vector.broadcast %24 : i1 to vector<16x1xi1>
    %26 = vector.broadcast %25 : vector<16x1xi1> to vector<16x1xi1>
    %27 = arith.xori %23, %26 : vector<16x1xi1>
    %28 = arith.andi %27, %21 : vector<16x1xi1>
    %29 = vector.broadcast %17 : i32 to vector<16x1xi32>
    %30 = arith.addi %19, %29 : vector<16x1xi32>
    %31 = arith.select %28, %30, %19 : vector<16x1xi1>, vector<16x1xi32>
    %c0_i32_14 = arith.constant 0 : i32
    %32 = vector.broadcast %c0_i32_14 : i32 to vector<16x1xi32>
    %33 = arith.cmpi eq, %31, %32 : vector<16x1xi32>
    %c8_i32_15 = arith.constant 8 : i32
    %c0_i32_16 = arith.constant 0 : i32
    %34 = arith.cmpi eq, %c8_i32_15, %c0_i32_16 : i32
    %c1_i32_17 = arith.constant 1 : i32
    %35 = arith.select %34, %c1_i32_17, %c8_i32_15 : i32
    %36 = vector.broadcast %35 : i32 to vector<16x1xi32>
    %37 = arith.remsi %15, %36 : vector<16x1xi32>
    %c0_i32_18 = arith.constant 0 : i32
    %38 = vector.broadcast %c0_i32_18 : i32 to vector<16x1xi32>
    %39 = arith.cmpi ne, %37, %38 : vector<16x1xi32>
    %c0_i32_19 = arith.constant 0 : i32
    %40 = vector.broadcast %c0_i32_19 : i32 to vector<16x1xi32>
    %41 = arith.cmpi slt, %37, %40 : vector<16x1xi32>
    %c0_i32_20 = arith.constant 0 : i32
    %42 = arith.cmpi slt, %35, %c0_i32_20 : i32
    %43 = vector.broadcast %42 : i1 to vector<16x1xi1>
    %44 = vector.broadcast %43 : vector<16x1xi1> to vector<16x1xi1>
    %45 = arith.xori %41, %44 : vector<16x1xi1>
    %46 = arith.andi %45, %39 : vector<16x1xi1>
    %47 = vector.broadcast %35 : i32 to vector<16x1xi32>
    %48 = arith.addi %37, %47 : vector<16x1xi32>
    %49 = arith.select %46, %48, %37 : vector<16x1xi1>, vector<16x1xi32>
    %c7_i32 = arith.constant 7 : i32
    %50 = vector.broadcast %c7_i32 : i32 to vector<16x1xi32>
    %51 = arith.cmpi eq, %49, %50 : vector<16x1xi32>
    %c1_i32_21 = arith.constant 1 : i32
    %52 = tpu.dynamic_rotate %14 by %c1_i32_21 dim 0 : vector<16x256xf32>, i32 -> vector<16x256xf32>
    %cst_22 = arith.constant 0.000000e+00 : f32
    %53 = vector.shape_cast %33 : vector<16x1xi1> to vector<16x1xi1>
    %54 = vector.broadcast %53 : vector<16x1xi1> to vector<16x256xi1>
    %55 = vector.broadcast %cst_22 : f32 to vector<16x256xf32>
    %56 = arith.select %54, %55, %52 : vector<16x256xi1>, vector<16x256xf32>
    %c15_i32 = arith.constant 15 : i32
    %57 = tpu.dynamic_rotate %14 by %c15_i32 dim 0 : vector<16x256xf32>, i32 -> vector<16x256xf32>
    %cst_23 = arith.constant 0.000000e+00 : f32
    %58 = vector.shape_cast %51 : vector<16x1xi1> to vector<16x1xi1>
    %59 = vector.broadcast %58 : vector<16x1xi1> to vector<16x256xi1>
    %60 = vector.broadcast %cst_23 : f32 to vector<16x256xf32>
    %61 = arith.select %59, %60, %57 : vector<16x256xi1>, vector<16x256xf32>
    %62 = arith.truncf %56 : vector<16x256xf32> to vector<16x256xbf16>
    %c0_24 = arith.constant 0 : index
    %c0_25 = arith.constant 0 : index
    %63 = vector.load %arg6[%c0_24, %c0_25] : memref<768x256xbf16, #tpu.memory_space<vmem>>, vector<256x256xbf16>
    %cst_26 = arith.constant dense<0.000000e+00> : vector<16x256xf32>
    %64 = tpu.matmul %62, %63, %cst_26 {dimension_numbers = #tpu.dot_dimension_numbers<[1], [0], [0], [1], [0, 0, 1, 1], [], []>} : vector<16x256xbf16>, vector<256x256xbf16>, vector<16x256xf32> -> vector<16x256xf32>
    %65 = arith.truncf %14 : vector<16x256xf32> to vector<16x256xbf16>
    %c256 = arith.constant 256 : index
    %c0_27 = arith.constant 0 : index
    %66 = vector.load %arg6[%c256, %c0_27] : memref<768x256xbf16, #tpu.memory_space<vmem>>, vector<256x256xbf16>
    %cst_28 = arith.constant dense<0.000000e+00> : vector<16x256xf32>
    %67 = tpu.matmul %65, %66, %cst_28 {dimension_numbers = #tpu.dot_dimension_numbers<[1], [0], [0], [1], [0, 0, 1, 1], [], []>} : vector<16x256xbf16>, vector<256x256xbf16>, vector<16x256xf32> -> vector<16x256xf32>
    %68 = arith.addf %64, %67 : vector<16x256xf32>
    %69 = arith.truncf %61 : vector<16x256xf32> to vector<16x256xbf16>
    %c512 = arith.constant 512 : index
    %c0_29 = arith.constant 0 : index
    %70 = vector.load %arg6[%c512, %c0_29] : memref<768x256xbf16, #tpu.memory_space<vmem>>, vector<256x256xbf16>
    %cst_30 = arith.constant dense<0.000000e+00> : vector<16x256xf32>
    %71 = tpu.matmul %69, %70, %cst_30 {dimension_numbers = #tpu.dot_dimension_numbers<[1], [0], [0], [1], [0, 0, 1, 1], [], []>} : vector<16x256xbf16>, vector<256x256xbf16>, vector<16x256xf32> -> vector<16x256xf32>
    %72 = arith.addf %68, %71 : vector<16x256xf32>
    %c0_31 = arith.constant 0 : index
    %c0_32 = arith.constant 0 : index
    %73 = vector.load %arg7[%c0_31, %c0_32] : memref<1x256xf32, #tpu.memory_space<vmem>>, vector<1x256xf32>
    %74 = vector.broadcast %73 : vector<1x256xf32> to vector<16x256xf32>
    %75 = arith.addf %72, %74 : vector<16x256xf32>
    %cst_33 = arith.constant 0.000000e+00 : f32
    %76 = vector.broadcast %cst_33 : f32 to vector<16x256xf32>
    %77 = arith.maximumf %75, %76 : vector<16x256xf32>
    %c1_i32_34 = arith.constant 1 : i32
    %78 = tpu.dynamic_rotate %77 by %c1_i32_34 dim 0 : vector<16x256xf32>, i32 -> vector<16x256xf32>
    %cst_35 = arith.constant 0.000000e+00 : f32
    %79 = vector.shape_cast %33 : vector<16x1xi1> to vector<16x1xi1>
    %80 = vector.broadcast %79 : vector<16x1xi1> to vector<16x256xi1>
    %81 = vector.broadcast %cst_35 : f32 to vector<16x256xf32>
    %82 = arith.select %80, %81, %78 : vector<16x256xi1>, vector<16x256xf32>
    %c15_i32_36 = arith.constant 15 : i32
    %83 = tpu.dynamic_rotate %77 by %c15_i32_36 dim 0 : vector<16x256xf32>, i32 -> vector<16x256xf32>
    %cst_37 = arith.constant 0.000000e+00 : f32
    %84 = vector.shape_cast %51 : vector<16x1xi1> to vector<16x1xi1>
    %85 = vector.broadcast %84 : vector<16x1xi1> to vector<16x256xi1>
    %86 = vector.broadcast %cst_37 : f32 to vector<16x256xf32>
    %87 = arith.select %85, %86, %83 : vector<16x256xi1>, vector<16x256xf32>
    %88 = arith.truncf %82 : vector<16x256xf32> to vector<16x256xbf16>
    %c0_38 = arith.constant 0 : index
    %c0_39 = arith.constant 0 : index
    %89 = vector.load %arg8[%c0_38, %c0_39] : memref<768x128xbf16, #tpu.memory_space<vmem>>, vector<256x128xbf16>
    %cst_40 = arith.constant dense<0.000000e+00> : vector<16x128xf32>
    %90 = tpu.matmul %88, %89, %cst_40 {dimension_numbers = #tpu.dot_dimension_numbers<[1], [0], [0], [1], [0, 0, 1, 1], [], []>} : vector<16x256xbf16>, vector<256x128xbf16>, vector<16x128xf32> -> vector<16x128xf32>
    %91 = arith.truncf %77 : vector<16x256xf32> to vector<16x256xbf16>
    %c256_41 = arith.constant 256 : index
    %c0_42 = arith.constant 0 : index
    %92 = vector.load %arg8[%c256_41, %c0_42] : memref<768x128xbf16, #tpu.memory_space<vmem>>, vector<256x128xbf16>
    %cst_43 = arith.constant dense<0.000000e+00> : vector<16x128xf32>
    %93 = tpu.matmul %91, %92, %cst_43 {dimension_numbers = #tpu.dot_dimension_numbers<[1], [0], [0], [1], [0, 0, 1, 1], [], []>} : vector<16x256xbf16>, vector<256x128xbf16>, vector<16x128xf32> -> vector<16x128xf32>
    %94 = arith.addf %90, %93 : vector<16x128xf32>
    %95 = arith.truncf %87 : vector<16x256xf32> to vector<16x256xbf16>
    %c512_44 = arith.constant 512 : index
    %c0_45 = arith.constant 0 : index
    %96 = vector.load %arg8[%c512_44, %c0_45] : memref<768x128xbf16, #tpu.memory_space<vmem>>, vector<256x128xbf16>
    %cst_46 = arith.constant dense<0.000000e+00> : vector<16x128xf32>
    %97 = tpu.matmul %95, %96, %cst_46 {dimension_numbers = #tpu.dot_dimension_numbers<[1], [0], [0], [1], [0, 0, 1, 1], [], []>} : vector<16x256xbf16>, vector<256x128xbf16>, vector<16x128xf32> -> vector<16x128xf32>
    %98 = arith.addf %94, %97 : vector<16x128xf32>
    %c0_47 = arith.constant 0 : index
    %c0_48 = arith.constant 0 : index
    %99 = vector.load %arg9[%c0_47, %c0_48] : memref<1x128xf32, #tpu.memory_space<vmem>>, vector<1x128xf32>
    %100 = vector.broadcast %99 : vector<1x128xf32> to vector<16x128xf32>
    %101 = arith.addf %98, %100 : vector<16x128xf32>
    %102 = vector.shape_cast %101 : vector<16x128xf32> to vector<2x8x128xf32>
    %cst_49 = arith.constant dense<0xFF800000> : vector<2x128xf32>
    %103 = vector.multi_reduction <maximumf>, %102, %cst_49 [1] : vector<2x8x128xf32> to vector<2x128xf32>
    %104 = arith.truncf %103 : vector<2x128xf32> to vector<2x128xbf16>
    %c0_50 = arith.constant 0 : index
    %c0_51 = arith.constant 0 : index
    %105 = vector.load %arg10[%c0_50, %c0_51] : memref<128x128xbf16, #tpu.memory_space<vmem>>, vector<128x128xbf16>
    %cst_52 = arith.constant dense<0.000000e+00> : vector<2x128xf32>
    %106 = tpu.matmul %104, %105, %cst_52 {dimension_numbers = #tpu.dot_dimension_numbers<[1], [0], [0], [1], [0, 0, 1, 1], [], []>} : vector<2x128xbf16>, vector<128x128xbf16>, vector<2x128xf32> -> vector<2x128xf32>
    %c0_53 = arith.constant 0 : index
    %c0_54 = arith.constant 0 : index
    %107 = vector.load %arg11[%c0_53, %c0_54] : memref<1x128xf32, #tpu.memory_space<vmem>>, vector<1x128xf32>
    %108 = vector.broadcast %107 : vector<1x128xf32> to vector<2x128xf32>
    %109 = arith.addf %106, %108 : vector<2x128xf32>
    %110 = tpu.iota {dimensions = array<i32: 1>} : vector<1x128xi32>
    %c4_i32 = arith.constant 4 : i32
    %111 = vector.broadcast %c4_i32 : i32 to vector<1x128xi32>
    %112 = arith.cmpi eq, %110, %111 : vector<1x128xi32>
    %113 = arith.negf %109 : vector<2x128xf32>
    %114 = math.exp %113 : vector<2x128xf32>
    %cst_55 = arith.constant 1.000000e+00 : f32
    %115 = vector.broadcast %cst_55 : f32 to vector<2x128xf32>
    %116 = arith.addf %115, %114 : vector<2x128xf32>
    %117 = arith.divf %115, %116 : vector<2x128xf32>
    %118 = vector.shape_cast %112 : vector<1x128xi1> to vector<1x128xi1>
    %119 = vector.broadcast %118 : vector<1x128xi1> to vector<2x128xi1>
    %120 = arith.select %119, %117, %109 : vector<2x128xi1>, vector<2x128xf32>
    %c0_56 = arith.constant 0 : index
    %c0_57 = arith.constant 0 : index
    %121 = vector.load %arg12[%c0_56, %c0_57] : memref<2x128xf32, #tpu.memory_space<vmem>>, vector<2x128xf32>
    tpu.vector_store %arg12[%c0_56, %c0_57], %120 {strides = array<i32>} : memref<2x128xf32, #tpu.memory_space<vmem>>, vector<2x128xf32>,
    return
  }
  func.func @transform_0(%arg0: i32) -> (i32, i32) {
    %c0_i32 = arith.constant 0 : i32
    %c0_i32_0 = arith.constant 0 : i32
    return %arg0, %c0_i32 : i32, i32
  }
  func.func @transform_1(%arg0: i32) -> (i32, i32) {
    %c0_i32 = arith.constant 0 : i32
    %c0_i32_0 = arith.constant 0 : i32
    %c0_i32_1 = arith.constant 0 : i32
    return %c0_i32, %c0_i32_0 : i32, i32
  }
  func.func @transform_2(%arg0: i32) -> (i32, i32) {
    %c0_i32 = arith.constant 0 : i32
    %c0_i32_0 = arith.constant 0 : i32
    %c0_i32_1 = arith.constant 0 : i32
    return %c0_i32, %c0_i32_0 : i32, i32
  }
  func.func @transform_3(%arg0: i32) -> (i32, i32) {
    %c0_i32 = arith.constant 0 : i32
    %c0_i32_0 = arith.constant 0 : i32
    %c0_i32_1 = arith.constant 0 : i32
    return %c0_i32, %c0_i32_0 : i32, i32
  }
  func.func @transform_4(%arg0: i32) -> (i32, i32) {
    %c0_i32 = arith.constant 0 : i32
    %c0_i32_0 = arith.constant 0 : i32
    %c0_i32_1 = arith.constant 0 : i32
    return %c0_i32, %c0_i32_0 : i32, i32
  }
  func.func @transform_5(%arg0: i32) -> (i32, i32) {
    %c0_i32 = arith.constant 0 : i32
    %c0_i32_0 = arith.constant 0 : i32
    %c0_i32_1 = arith.constant 0 : i32
    return %c0_i32, %c0_i32_0 : i32, i32
  }
  func.func @transform_6(%arg0: i32) -> (i32, i32) {
    %c0_i32 = arith.constant 0 : i32
    %c0_i32_0 = arith.constant 0 : i32
    %c0_i32_1 = arith.constant 0 : i32
    return %c0_i32, %c0_i32_0 : i32, i32
  }
  func.func @transform_7(%arg0: i32) -> (i32, i32) {
    %c0_i32 = arith.constant 0 : i32
    %c0_i32_0 = arith.constant 0 : i32
    %c0_i32_1 = arith.constant 0 : i32
    return %c0_i32, %c0_i32_0 : i32, i32
  }
  func.func @transform_8(%arg0: i32) -> (i32, i32) {
    %c0_i32 = arith.constant 0 : i32
    %c0_i32_0 = arith.constant 0 : i32
    %c0_i32_1 = arith.constant 0 : i32
    return %c0_i32, %c0_i32_0 : i32, i32
  }
  func.func @transform_9(%arg0: i32) -> (i32, i32) {
    %c0_i32 = arith.constant 0 : i32
    %c0_i32_0 = arith.constant 0 : i32
    %c0_i32_1 = arith.constant 0 : i32
    return %c0_i32, %c0_i32_0 : i32, i32
  }
  func.func @transform_10(%arg0: i32) -> (i32, i32) {
    %c0_i32 = arith.constant 0 : i32
    %c0_i32_0 = arith.constant 0 : i32
    %c0_i32_1 = arith.constant 0 : i32
    return %c0_i32, %c0_i32_0 : i32, i32
  }
  func.func @transform_11(%arg0: i32) -> (i32, i32) {
    %c0_i32 = arith.constant 0 : i32
    %c0_i32_0 = arith.constant 0 : i32
    return %arg0, %c0_i32 : i32, i32
  }
}

</mosaic_0001>

<llo_original>
// kernel: rmsnet_forward.1
$region0: #{rmsnet_forward.1}
  #allocation0 [shape = 'u32[]', space=smem, size = 0x4, offset = 0x4, fixed_abs, tag = 'smem constant byte address 0x4 - core index']
  #allocation1 [shape = 'u32[144,128]{1,0:T(1,128)}', space=vmem, size = 0x12000, scoped, tag = 'internal scratch']
  %s0 = inlined_call_operand.hbm [shape: f32[16,2048], index: 0, kind: input, shape index: {}]
  %s1 = inlined_call_operand.hbm [shape: bf16[2048,512], index: 1, kind: input, shape index: {}]
  %s2 = inlined_call_operand.hbm [shape: f32[1,512], index: 2, kind: input, shape index: {}]
  %s3 = inlined_call_operand.hbm [shape: bf16[512,256], index: 3, kind: input, shape index: {}]
  %s4 = inlined_call_operand.hbm [shape: f32[1,256], index: 4, kind: input, shape index: {}]
  %s5 = inlined_call_operand.hbm [shape: bf16[768,256], index: 5, kind: input, shape index: {}]
  %s6 = inlined_call_operand.hbm [shape: f32[1,256], index: 6, kind: input, shape index: {}]
  %s7 = inlined_call_operand.hbm [shape: bf16[768,128], index: 7, kind: input, shape index: {}]
  %s8 = inlined_call_operand.hbm [shape: f32[1,128], index: 8, kind: input, shape index: {}]
  %s9 = inlined_call_operand.hbm [shape: bf16[128,128], index: 9, kind: input, shape index: {}]
  %s10 = inlined_call_operand.hbm [shape: f32[1,128], index: 10, kind: input, shape index: {}]
  %s11 = inlined_call_operand.vmem [shape: f32[2,128], index: 11, kind: output, shape index: {}]
  %s12 = sld [smem:[#allocation0]]
  $region98: #{rmsnet_forward.1} parent=0
    _
  %s14 = ssub.s32 1, %s12
  %s15 = scalar_select 0, %s14, %s12
  $region1: #{rmsnet_forward.1} parent=0
    #allocation2 [shape = 'u8[131072]{0}', space=vmem, size = 0x20000, scoped, tag = 'input window, operand 0, single buffered']
    #allocation3 [shape = 's32[1]{0}', space=sflag, size = 0x4, scoped, tag = 'scoped memory for rmsnet_forward.1']
    #allocation4 [shape = 'u8[2097152]{0}', space=vmem, size = 0x200000, scoped, tag = 'input window, operand 1, single buffered']
    #allocation5 [shape = 's32[1]{0}', space=sflag, size = 0x4, scoped, tag = 'scoped memory for rmsnet_forward.1']
    #allocation6 [shape = 'u8[2048]{0}', space=vmem, size = 0x800, scoped, tag = 'input window, operand 2, single buffered']
    #allocation7 [shape = 'u8[262144]{0}', space=vmem, size = 0x40000, scoped, tag = 'input window, operand 3, single buffered']
    #allocation8 [shape = 's32[1]{0}', space=sflag, size = 0x4, scoped, tag = 'scoped memory for rmsnet_forward.1']
    #allocation9 [shape = 'u8[1024]{0}', space=vmem, size = 0x400, scoped, tag = 'input window, operand 4, single buffered']
    #allocation10 [shape = 'u8[393216]{0}', space=vmem, size = 0x60000, scoped, tag = 'input window, operand 5, single buffered']
    #allocation11 [shape = 's32[1]{0}', space=sflag, size = 0x4, scoped, tag = 'scoped memory for rmsnet_forward.1']
    #allocation12 [shape = 'u8[1024]{0}', space=vmem, size = 0x400, scoped, tag = 'input window, operand 6, single buffered']
    #allocation13 [shape = 'u8[196608]{0}', space=vmem, size = 0x30000, scoped, tag = 'input window, operand 7, single buffered']
    #allocation14 [shape = 's32[1]{0}', space=sflag, size = 0x4, scoped, tag = 'scoped memory for rmsnet_forward.1']
    #allocation15 [shape = 'u8[512]{0}', space=vmem, size = 0x400, scoped, tag = 'input window, operand 8, single buffered']
    #allocation16 [shape = 'u8[32768]{0}', space=vmem, size = 0x8000, scoped, tag = 'input window, operand 9, single buffered']
    #allocation17 [shape = 's32[1]{0}', space=sflag, size = 0x4, scoped, tag = 'scoped memory for rmsnet_forward.1']
    #allocation18 [shape = 'u8[512]{0}', space=vmem, size = 0x400, scoped, tag = 'input window, operand 10, single buffered']
    %16 = vsyncpa [#allocation3], 0
    %17 = vsyncpa [#allocation5], 0
    %18 = vsyncpa [#allocation8], 0
    %19 = vsyncpa [#allocation11], 0
    %20 = vsyncpa [#allocation14], 0
    %21 = vsyncpa [#allocation17], 0
    // Predicated region
    $region2: #{rmsnet_forward.1} parent=1 // pred_check
      _
    $region3: #{rmsnet_forward.1} parent=1 // pred_check_branch
      %23 = sbr.rel (0) target = $region5
    $region4: #{rmsnet_forward.1} parent=1 // pred_region
      %s25 = ssub.s32 4096, 4096
      %26 = vsyncadd [#allocation3], %s25
      %s27 = sshll.u32 [#allocation2], 4
      %s28 = int_to_ptr.vmem [resolvable:$true] %s27
      %33 = dma.hbm_to_vmem [thread:$0]  %s0, 4096, %s28, [#allocation3], 2048, 2048, 128
    $region5: #{rmsnet_forward.1} parent=1 // pred_fallthru
      _
    // Predicated region
    $region6: #{rmsnet_forward.1} parent=1 // pred_check
      _
    $region7: #{rmsnet_forward.1} parent=1 // pred_check_branch
      %35 = sbr.rel (0) target = $region9
    $region8: #{rmsnet_forward.1} parent=1 // pred_region
      %s37 = ssub.s32 65536, 65536
      %38 = vsyncadd [#allocation5], %s37
      %s39 = sshll.u32 [#allocation4], 4
      %s40 = int_to_ptr.vmem [resolvable:$true] %s39
      %45 = dma.hbm_to_vmem [thread:$0]  %s1, 65536, %s40, [#allocation5], 256, 256, 16
    $region9: #{rmsnet_forward.1} parent=1 // pred_fallthru
      _
    // Predicated region
    $region10: #{rmsnet_forward.1} parent=1 // pred_check
      _
    $region11: #{rmsnet_forward.1} parent=1 // pred_check_branch
      %47 = sbr.rel (0) target = $region13
    $region12: #{rmsnet_forward.1} parent=1 // pred_region
      %s49 = ssub.s32 64, 64
      %50 = vsyncadd [#allocation5], %s49
      %s52 = sshll.u32 [#allocation6], 4
      %s53 = int_to_ptr.vmem [resolvable:$true] %s52
      %55 = dma.hbm_to_vmem [thread:$0]  %s2, 64, %s53, [#allocation5]
    $region13: #{rmsnet_forward.1} parent=1 // pred_fallthru
      _
    // Predicated region
    $region14: #{rmsnet_forward.1} parent=1 // pred_check
      _
    $region15: #{rmsnet_forward.1} parent=1 // pred_check_branch
      %57 = sbr.rel (0) target = $region17
    $region16: #{rmsnet_forward.1} parent=1 // pred_region
      %s59 = ssub.s32 8192, 8192
      %60 = vsyncadd [#allocation8], %s59
      %s61 = sshll.u32 [#allocation7], 4
      %s62 = int_to_ptr.vmem [resolvable:$true] %s61
      %67 = dma.hbm_to_vmem [thread:$0]  %s3, 8192, %s62, [#allocation8], 128, 128, 8
    $region17: #{rmsnet_forward.1} parent=1 // pred_fallthru
      _
    // Predicated region
    $region18: #{rmsnet_forward.1} parent=1 // pred_check
      _
    $region19: #{rmsnet_forward.1} parent=1 // pred_check_branch
      %69 = sbr.rel (0) target = $region21
    $region20: #{rmsnet_forward.1} parent=1 // pred_region
      %s71 = ssub.s32 32, 32
      %72 = vsyncadd [#allocation8], %s71
      %s74 = sshll.u32 [#allocation9], 4
      %s75 = int_to_ptr.vmem [resolvable:$true] %s74
      %77 = dma.hbm_to_vmem [thread:$0]  %s4, 32, %s75, [#allocation8]
    $region21: #{rmsnet_forward.1} parent=1 // pred_fallthru
      _
    // Predicated region
    $region22: #{rmsnet_forward.1} parent=1 // pred_check
      _
    $region23: #{rmsnet_forward.1} parent=1 // pred_check_branch
      %79 = sbr.rel (0) target = $region25
    $region24: #{rmsnet_forward.1} parent=1 // pred_region
      %s81 = ssub.s32 12288, 12288
      %82 = vsyncadd [#allocation11], %s81
      %s83 = sshll.u32 [#allocation10], 4
      %s84 = int_to_ptr.vmem [resolvable:$true] %s83
      %89 = dma.hbm_to_vmem [thread:$0]  %s5, 12288, %s84, [#allocation11], 128, 128, 8
    $region25: #{rmsnet_forward.1} parent=1 // pred_fallthru
      _
    // Predicated region
    $region26: #{rmsnet_forward.1} parent=1 // pred_check
      _
    $region27: #{rmsnet_forward.1} parent=1 // pred_check_branch
      %91 = sbr.rel (0) target = $region29
    $region28: #{rmsnet_forward.1} parent=1 // pred_region
      %s93 = ssub.s32 32, 32
      %94 = vsyncadd [#allocation11], %s93
      %s96 = sshll.u32 [#allocation12], 4
      %s97 = int_to_ptr.vmem [resolvable:$true] %s96
      %99 = dma.hbm_to_vmem [thread:$0]  %s6, 32, %s97, [#allocation11]
    $region29: #{rmsnet_forward.1} parent=1 // pred_fallthru
      _
    // Predicated region
    $region30: #{rmsnet_forward.1} parent=1 // pred_check
      _
    $region31: #{rmsnet_forward.1} parent=1 // pred_check_branch
      %101 = sbr.rel (0) target = $region33
    $region32: #{rmsnet_forward.1} parent=1 // pred_region
      %s103 = ssub.s32 6144, 6144
      %104 = vsyncadd [#allocation14], %s103
      %s105 = sshll.u32 [#allocation13], 4
      %s106 = int_to_ptr.vmem [resolvable:$true] %s105
      %111 = dma.hbm_to_vmem [thread:$0]  %s7, 6144, %s106, [#allocation14], 64, 64, 4
    $region33: #{rmsnet_forward.1} parent=1 // pred_fallthru
      _
    // Predicated region
    $region34: #{rmsnet_forward.1} parent=1 // pred_check
      _
    $region35: #{rmsnet_forward.1} parent=1 // pred_check_branch
      %113 = sbr.rel (0) target = $region37
    $region36: #{rmsnet_forward.1} parent=1 // pred_region
      %s115 = ssub.s32 16, 16
      %116 = vsyncadd [#allocation14], %s115
      %s118 = sshll.u32 [#allocation15], 4
      %s119 = int_to_ptr.vmem [resolvable:$true] %s118
      %121 = dma.hbm_to_vmem [thread:$0]  %s8, 16, %s119, [#allocation14]
    $region37: #{rmsnet_forward.1} parent=1 // pred_fallthru
      _
    // Predicated region
    $region38: #{rmsnet_forward.1} parent=1 // pred_check
      _
    $region39: #{rmsnet_forward.1} parent=1 // pred_check_branch
      %123 = sbr.rel (0) target = $region41
    $region40: #{rmsnet_forward.1} parent=1 // pred_region
      %s125 = ssub.s32 1024, 1024
      %126 = vsyncadd [#allocation17], %s125
      %s127 = sshll.u32 [#allocation16], 4
      %s128 = int_to_ptr.vmem [resolvable:$true] %s127
      %133 = dma.hbm_to_vmem [thread:$0]  %s9, 1024, %s128, [#allocation17], 64, 64, 4
    $region41: #{rmsnet_forward.1} parent=1 // pred_fallthru
      _
    // Predicated region
    $region42: #{rmsnet_forward.1} parent=1 // pred_check
      _
    $region43: #{rmsnet_forward.1} parent=1 // pred_check_branch
      %135 = sbr.rel (0) target = $region45
    $region44: #{rmsnet_forward.1} parent=1 // pred_region
      %s137 = ssub.s32 16, 16
      %138 = vsyncadd [#allocation17], %s137
      %s140 = sshll.u32 [#allocation18], 4
      %s141 = int_to_ptr.vmem [resolvable:$true] %s140
      %143 = dma.hbm_to_vmem [thread:$0]  %s10, 16, %s141, [#allocation17]
    $region45: #{rmsnet_forward.1} parent=1 // pred_fallthru
      _
    // Predicated region
    $region46: #{rmsnet_forward.1} parent=1 // pred_check
      _
    $region47: #{rmsnet_forward.1} parent=1 // pred_check_branch
      %145 = sbr.rel (0) target = $region49
    $region48: #{rmsnet_forward.1} parent=1 // pred_region
      %146 = dma.done [#allocation3], 4096
    $region49: #{rmsnet_forward.1} parent=1 // pred_fallthru
      _
    // Predicated region
    $region50: #{rmsnet_forward.1} parent=1 // pred_check
      _
    $region51: #{rmsnet_forward.1} parent=1 // pred_check_branch
      %148 = sbr.rel (0) target = $region53
    $region52: #{rmsnet_forward.1} parent=1 // pred_region
      %149 = dma.done [#allocation5], 65536
    $region53: #{rmsnet_forward.1} parent=1 // pred_fallthru
      _
    // Predicated region
    $region54: #{rmsnet_forward.1} parent=1 // pred_check
      _
    $region55: #{rmsnet_forward.1} parent=1 // pred_check_branch
      %151 = sbr.rel (0) target = $region57
    $region56: #{rmsnet_forward.1} parent=1 // pred_region
      %152 = dma.done [#allocation5], 64
    $region57: #{rmsnet_forward.1} parent=1 // pred_fallthru
      _
    // Predicated region
    $region58: #{rmsnet_forward.1} parent=1 // pred_check
      _
    $region59: #{rmsnet_forward.1} parent=1 // pred_check_branch
      %154 = sbr.rel (0) target = $region61
    $region60: #{rmsnet_forward.1} parent=1 // pred_region
      %155 = dma.done [#allocation8], 8192
    $region61: #{rmsnet_forward.1} parent=1 // pred_fallthru
      _
    // Predicated region
    $region62: #{rmsnet_forward.1} parent=1 // pred_check
      _
    $region63: #{rmsnet_forward.1} parent=1 // pred_check_branch
      %157 = sbr.rel (0) target = $region65
    $region64: #{rmsnet_forward.1} parent=1 // pred_region
      %158 = dma.done [#allocation8], 32
    $region65: #{rmsnet_forward.1} parent=1 // pred_fallthru
      _
    // Predicated region
    $region66: #{rmsnet_forward.1} parent=1 // pred_check
      _
    $region67: #{rmsnet_forward.1} parent=1 // pred_check_branch
      %160 = sbr.rel (0) target = $region69
    $region68: #{rmsnet_forward.1} parent=1 // pred_region
      %161 = dma.done [#allocation11], 12288
    $region69: #{rmsnet_forward.1} parent=1 // pred_fallthru
      _
    // Predicated region
    $region70: #{rmsnet_forward.1} parent=1 // pred_check
      _
    $region71: #{rmsnet_forward.1} parent=1 // pred_check_branch
      %163 = sbr.rel (0) target = $region73
    $region72: #{rmsnet_forward.1} parent=1 // pred_region
      %164 = dma.done [#allocation11], 32
    $region73: #{rmsnet_forward.1} parent=1 // pred_fallthru
      _
    // Predicated region
    $region74: #{rmsnet_forward.1} parent=1 // pred_check
      _
    $region75: #{rmsnet_forward.1} parent=1 // pred_check_branch
      %166 = sbr.rel (0) target = $region77
    $region76: #{rmsnet_forward.1} parent=1 // pred_region
      %167 = dma.done [#allocation14], 6144
    $region77: #{rmsnet_forward.1} parent=1 // pred_fallthru
      _
    // Predicated region
    $region78: #{rmsnet_forward.1} parent=1 // pred_check
      _
    $region79: #{rmsnet_forward.1} parent=1 // pred_check_branch
      %169 = sbr.rel (0) target = $region81
    $region80: #{rmsnet_forward.1} parent=1 // pred_region
      %170 = dma.done [#allocation14], 16
    $region81: #{rmsnet_forward.1} parent=1 // pred_fallthru
      _
    // Predicated region
    $region82: #{rmsnet_forward.1} parent=1 // pred_check
      _
    $region83: #{rmsnet_forward.1} parent=1 // pred_check_branch
      %172 = sbr.rel (0) target = $region85
    $region84: #{rmsnet_forward.1} parent=1 // pred_region
      %173 = dma.done [#allocation17], 1024
    $region85: #{rmsnet_forward.1} parent=1 // pred_fallthru
      _
    // Predicated region
    $region86: #{rmsnet_forward.1} parent=1 // pred_check
      _
    $region87: #{rmsnet_forward.1} parent=1 // pred_check_branch
      %175 = sbr.rel (0) target = $region89
    $region88: #{rmsnet_forward.1} parent=1 // pred_region
      %176 = dma.done [#allocation17], 16
    $region89: #{rmsnet_forward.1} parent=1 // pred_fallthru
      _
    %v178 = vld [vmem:[#allocation2] sm:$0xff]
    %v179 = vld [vmem:[#allocation2 + $0x8] sm:$0xff]
    %v180 = vld [vmem:[#allocation2 + $0x10] sm:$0xff]
    %v181 = vld [vmem:[#allocation2 + $0x18] sm:$0xff]
    %v182 = vld [vmem:[#allocation2 + $0x20] sm:$0xff]
    %v183 = vld [vmem:[#allocation2 + $0x28] sm:$0xff]
    %v184 = vld [vmem:[#allocation2 + $0x30] sm:$0xff]
    %v185 = vld [vmem:[#allocation2 + $0x38] sm:$0xff]
    %v186 = vld [vmem:[#allocation2 + $0x40] sm:$0xff]
    %v187 = vld [vmem:[#allocation2 + $0x48] sm:$0xff]
    %v188 = vld [vmem:[#allocation2 + $0x50] sm:$0xff]
    %v189 = vld [vmem:[#allocation2 + $0x58] sm:$0xff]
    %v190 = vld [vmem:[#allocation2 + $0x60] sm:$0xff]
    %v191 = vld [vmem:[#allocation2 + $0x68] sm:$0xff]
    %v192 = vld [vmem:[#allocation2 + $0x70] sm:$0xff]
    %v193 = vld [vmem:[#allocation2 + $0x78] sm:$0xff]
    %v194 = vld [vmem:[#allocation2 + $0x80] sm:$0xff]
    %v195 = vld [vmem:[#allocation2 + $0x88] sm:$0xff]
    %v196 = vld [vmem:[#allocation2 + $0x90] sm:$0xff]
    %v197 = vld [vmem:[#allocation2 + $0x98] sm:$0xff]
    %v198 = vld [vmem:[#allocation2 + $0xa0] sm:$0xff]
    %v199 = vld [vmem:[#allocation2 + $0xa8] sm:$0xff]
    %v200 = vld [vmem:[#allocation2 + $0xb0] sm:$0xff]
    %v201 = vld [vmem:[#allocation2 + $0xb8] sm:$0xff]
    %v202 = vld [vmem:[#allocation2 + $0xc0] sm:$0xff]
    %v203 = vld [vmem:[#allocation2 + $0xc8] sm:$0xff]
    %v204 = vld [vmem:[#allocation2 + $0xd0] sm:$0xff]
    %v205 = vld [vmem:[#allocation2 + $0xd8] sm:$0xff]
    %v206 = vld [vmem:[#allocation2 + $0xe0] sm:$0xff]
    %v207 = vld [vmem:[#allocation2 + $0xe8] sm:$0xff]
    %v208 = vld [vmem:[#allocation2 + $0xf0] sm:$0xff]
    %v209 = vld [vmem:[#allocation2 + $0xf8] sm:$0xff]
    %v210 = vpack.c.bf16 %v194, %v178
    %v211 = vpack.c.bf16 %v195, %v179
    %v212 = vpack.c.bf16 %v196, %v180
    %v213 = vpack.c.bf16 %v197, %v181
    %v214 = vpack.c.bf16 %v198, %v182
    %v215 = vpack.c.bf16 %v199, %v183
    %v216 = vpack.c.bf16 %v200, %v184
    %v217 = vpack.c.bf16 %v201, %v185
    %v218 = vpack.c.bf16 %v202, %v186
    %v219 = vpack.c.bf16 %v203, %v187
    %v220 = vpack.c.bf16 %v204, %v188
    %v221 = vpack.c.bf16 %v205, %v189
    %v222 = vpack.c.bf16 %v206, %v190
    %v223 = vpack.c.bf16 %v207, %v191
    %v224 = vpack.c.bf16 %v208, %v192
    %v225 = vpack.c.bf16 %v209, %v193
    %v226 = vld [vmem:[#allocation4] sm:$0xff]
    %v227 = vld [vmem:[#allocation4 + $0x8] sm:$0xff]
    %v228 = vld [vmem:[#allocation4 + $0x10] sm:$0xff]
    %v229 = vld [vmem:[#allocation4 + $0x18] sm:$0xff]
    %v230 = vld [vmem:[#allocation4 + $0x20] sm:$0xff]
    %v231 = vld [vmem:[#allocation4 + $0x28] sm:$0xff]
    %v232 = vld [vmem:[#allocation4 + $0x30] sm:$0xff]
    %v233 = vld [vmem:[#allocation4 + $0x38] sm:$0xff]
    %v234 = vld [vmem:[#allocation4 + $0x40] sm:$0xff]
    %v235 = vld [vmem:[#allocation4 + $0x48] sm:$0xff]
    %v236 = vld [vmem:[#allocation4 + $0x50] sm:$0xff]
    %v237 = vld [vmem:[#allocation4 + $0x58] sm:$0xff]
    %v238 = vld [vmem:[#allocation4 + $0x60] sm:$0xff]
    %v239 = vld [vmem:[#allocation4 + $0x68] sm:$0xff]
    %v240 = vld [vmem:[#allocation4 + $0x70] sm:$0xff]
    %v241 = vld [vmem:[#allocation4 + $0x78] sm:$0xff]
    %v242 = vld [vmem:[#allocation4 + $0x80] sm:$0xff]
    %v243 = vld [vmem:[#allocation4 + $0x88] sm:$0xff]
    %v244 = vld [vmem:[#allocation4 + $0x90] sm:$0xff]
    %v245 = vld [vmem:[#allocation4 + $0x98] sm:$0xff]
    %v246 = vld [vmem:[#allocation4 + $0xa0] sm:$0xff]
    %v247 = vld [vmem:[#allocation4 + $0xa8] sm:$0xff]
    %v248 = vld [vmem:[#allocation4 + $0xb0] sm:$0xff]
    %v249 = vld [vmem:[#allocation4 + $0xb8] sm:$0xff]
    %v250 = vld [vmem:[#allocation4 + $0xc0] sm:$0xff]
    %v251 = vld [vmem:[#allocation4 + $0xc8] sm:$0xff]
    %v252 = vld [vmem:[#allocation4 + $0xd0] sm:$0xff]
    %v253 = vld [vmem:[#allocation4 + $0xd8] sm:$0xff]
    %v254 = vld [vmem:[#allocation4 + $0xe0] sm:$0xff]
    %v255 = vld [vmem:[#allocation4 + $0xe8] sm:$0xff]
    %v256 = vld [vmem:[#allocation4 + $0xf0] sm:$0xff]
    %v257 = vld [vmem:[#allocation4 + $0xf8] sm:$0xff]
    %v258 = vld [vmem:[#allocation4 + $0x100] sm:$0xff]
    %v259 = vld [vmem:[#allocation4 + $0x108] sm:$0xff]
    %v260 = vld [vmem:[#allocation4 + $0x110] sm:$0xff]
    %v261 = vld [vmem:[#allocation4 + $0x118] sm:$0xff]
    %v262 = vld [vmem:[#allocation4 + $0x120] sm:$0xff]
    %v263 = vld [vmem:[#allocation4 + $0x128] sm:$0xff]
    %v264 = vld [vmem:[#allocation4 + $0x130] sm:$0xff]
    %v265 = vld [vmem:[#allocation4 + $0x138] sm:$0xff]
    %v266 = vld [vmem:[#allocation4 + $0x140] sm:$0xff]
    %v267 = vld [vmem:[#allocation4 + $0x148] sm:$0xff]
    %v268 = vld [vmem:[#allocation4 + $0x150] sm:$0xff]
    %v269 = vld [vmem:[#allocation4 + $0x158] sm:$0xff]
    %v270 = vld [vmem:[#allocation4 + $0x160] sm:$0xff]
    %v271 = vld [vmem:[#allocation4 + $0x168] sm:$0xff]
    %v272 = vld [vmem:[#allocation4 + $0x170] sm:$0xff]
    %v273 = vld [vmem:[#allocation4 + $0x178] sm:$0xff]
    %v274 = vld [vmem:[#allocation4 + $0x180] sm:$0xff]
    %v275 = vld [vmem:[#allocation4 + $0x188] sm:$0xff]
    %v276 = vld [vmem:[#allocation4 + $0x190] sm:$0xff]
    %v277 = vld [vmem:[#allocation4 + $0x198] sm:$0xff]
    %v278 = vld [vmem:[#allocation4 + $0x1a0] sm:$0xff]
    %v279 = vld [vmem:[#allocation4 + $0x1a8] sm:$0xff]
    %v280 = vld [vmem:[#allocation4 + $0x1b0] sm:$0xff]
    %v281 = vld [vmem:[#allocation4 + $0x1b8] sm:$0xff]
    %v282 = vld [vmem:[#allocation4 + $0x1c0] sm:$0xff]
    %v283 = vld [vmem:[#allocation4 + $0x1c8] sm:$0xff]
    %v284 = vld [vmem:[#allocation4 + $0x1d0] sm:$0xff]
    %v285 = vld [vmem:[#allocation4 + $0x1d8] sm:$0xff]
    %v286 = vld [vmem:[#allocation4 + $0x1e0] sm:$0xff]
    %v287 = vld [vmem:[#allocation4 + $0x1e8] sm:$0xff]
    %v288 = vld [vmem:[#allocation4 + $0x1f0] sm:$0xff]
    %v289 = vld [vmem:[#allocation4 + $0x1f8] sm:$0xff]
    %v290 = vld [vmem:[#allocation4 + $0x200] sm:$0xff]
    %v291 = vld [vmem:[#allocation4 + $0x208] sm:$0xff]
    %v292 = vld [vmem:[#allocation4 + $0x210] sm:$0xff]
    %v293 = vld [vmem:[#allocation4 + $0x218] sm:$0xff]
    %v294 = vld [vmem:[#allocation4 + $0x220] sm:$0xff]
    %v295 = vld [vmem:[#allocation4 + $0x228] sm:$0xff]
    %v296 = vld [vmem:[#allocation4 + $0x230] sm:$0xff]
    %v297 = vld [vmem:[#allocation4 + $0x238] sm:$0xff]
    %v298 = vld [vmem:[#allocation4 + $0x240] sm:$0xff]
    %v299 = vld [vmem:[#allocation4 + $0x248] sm:$0xff]
    %v300 = vld [vmem:[#allocation4 + $0x250] sm:$0xff]
    %v301 = vld [vmem:[#allocation4 + $0x258] sm:$0xff]
    %v302 = vld [vmem:[#allocation4 + $0x260] sm:$0xff]
    %v303 = vld [vmem:[#allocation4 + $0x268] sm:$0xff]
    %v304 = vld [vmem:[#allocation4 + $0x270] sm:$0xff]
    %v305 = vld [vmem:[#allocation4 + $0x278] sm:$0xff]
    %v306 = vld [vmem:[#allocation4 + $0x280] sm:$0xff]
    %v307 = vld [vmem:[#allocation4 + $0x288] sm:$0xff]
    %v308 = vld [vmem:[#allocation4 + $0x290] sm:$0xff]
    %v309 = vld [vmem:[#allocation4 + $0x298] sm:$0xff]
    %v310 = vld [vmem:[#allocation4 + $0x2a0] sm:$0xff]
    %v311 = vld [vmem:[#allocation4 + $0x2a8] sm:$0xff]
    %v312 = vld [vmem:[#allocation4 + $0x2b0] sm:$0xff]
    %v313 = vld [vmem:[#allocation4 + $0x2b8] sm:$0xff]
    %v314 = vld [vmem:[#allocation4 + $0x2c0] sm:$0xff]
    %v315 = vld [vmem:[#allocation4 + $0x2c8] sm:$0xff]
    %v316 = vld [vmem:[#allocation4 + $0x2d0] sm:$0xff]
    %v317 = vld [vmem:[#allocation4 + $0x2d8] sm:$0xff]
    %v318 = vld [vmem:[#allocation4 + $0x2e0] sm:$0xff]
    %v319 = vld [vmem:[#allocation4 + $0x2e8] sm:$0xff]
    %v320 = vld [vmem:[#allocation4 + $0x2f0] sm:$0xff]
    %v321 = vld [vmem:[#allocation4 + $0x2f8] sm:$0xff]
    %v322 = vld [vmem:[#allocation4 + $0x300] sm:$0xff]
    %v323 = vld [vmem:[#allocation4 + $0x308] sm:$0xff]
    %v324 = vld [vmem:[#allocation4 + $0x310] sm:$0xff]
    %v325 = vld [vmem:[#allocation4 + $0x318] sm:$0xff]
    %v326 = vld [vmem:[#allocation4 + $0x320] sm:$0xff]
    %v327 = vld [vmem:[#allocation4 + $0x328] sm:$0xff]
    %v328 = vld [vmem:[#allocation4 + $0x330] sm:$0xff]
    %v329 = vld [vmem:[#allocation4 + $0x338] sm:$0xff]
    %v330 = vld [vmem:[#allocation4 + $0x340] sm:$0xff]
    %v331 = vld [vmem:[#allocation4 + $0x348] sm:$0xff]
    %v332 = vld [vmem:[#allocation4 + $0x350] sm:$0xff]
    %v333 = vld [vmem:[#allocation4 + $0x358] sm:$0xff]
    %v334 = vld [vmem:[#allocation4 + $0x360] sm:$0xff]
    %v335 = vld [vmem:[#allocation4 + $0x368] sm:$0xff]
    %v336 = vld [vmem:[#allocation4 + $0x370] sm:$0xff]
    %v337 = vld [vmem:[#allocation4 + $0x378] sm:$0xff]
    %v338 = vld [vmem:[#allocation4 + $0x380] sm:$0xff]
    %v339 = vld [vmem:[#allocation4 + $0x388] sm:$0xff]
    %v340 = vld [vmem:[#allocation4 + $0x390] sm:$0xff]
    %v341 = vld [vmem:[#allocation4 + $0x398] sm:$0xff]
    %v342 = vld [vmem:[#allocation4 + $0x3a0] sm:$0xff]
    %v343 = vld [vmem:[#allocation4 + $0x3a8] sm:$0xff]
    %v344 = vld [vmem:[#allocation4 + $0x3b0] sm:$0xff]
    %v345 = vld [vmem:[#allocation4 + $0x3b8] sm:$0xff]
    %v346 = vld [vmem:[#allocation4 + $0x3c0] sm:$0xff]
    %v347 = vld [vmem:[#allocation4 + $0x3c8] sm:$0xff]
    %v348 = vld [vmem:[#allocation4 + $0x3d0] sm:$0xff]
    %v349 = vld [vmem:[#allocation4 + $0x3d8] sm:$0xff]
    %v350 = vld [vmem:[#allocation4 + $0x3e0] sm:$0xff]
    %v351 = vld [vmem:[#allocation4 + $0x3e8] sm:$0xff]
    %v352 = vld [vmem:[#allocation4 + $0x3f0] sm:$0xff]
    %v353 = vld [vmem:[#allocation4 + $0x3f8] sm:$0xff]
    %v354 = vld [vmem:[#allocation4 + $0x400] sm:$0xff]
    %v355 = vld [vmem:[#allocation4 + $0x408] sm:$0xff]
    %v356 = vld [vmem:[#allocation4 + $0x410] sm:$0xff]
    %v357 = vld [vmem:[#allocation4 + $0x418] sm:$0xff]
    %v358 = vld [vmem:[#allocation4 + $0x420] sm:$0xff]
    %v359 = vld [vmem:[#allocation4 + $0x428] sm:$0xff]
    %v360 = vld [vmem:[#allocation4 + $0x430] sm:$0xff]
    %v361 = vld [vmem:[#allocation4 + $0x438] sm:$0xff]
    %v362 = vld [vmem:[#allocation4 + $0x440] sm:$0xff]
    %v363 = vld [vmem:[#allocation4 + $0x448] sm:$0xff]
    %v364 = vld [vmem:[#allocation4 + $0x450] sm:$0xff]
    %v365 = vld [vmem:[#allocation4 + $0x458] sm:$0xff]
    %v366 = vld [vmem:[#allocation4 + $0x460] sm:$0xff]
    %v367 = vld [vmem:[#allocation4 + $0x468] sm:$0xff]
    %v368 = vld [vmem:[#allocation4 + $0x470] sm:$0xff]
    %v369 = vld [vmem:[#allocation4 + $0x478] sm:$0xff]
    %v370 = vld [vmem:[#allocation4 + $0x480] sm:$0xff]
    %v371 = vld [vmem:[#allocation4 + $0x488] sm:$0xff]
    %v372 = vld [vmem:[#allocation4 + $0x490] sm:$0xff]
    %v373 = vld [vmem:[#allocation4 + $0x498] sm:$0xff]
    %v374 = vld [vmem:[#allocation4 + $0x4a0] sm:$0xff]
    %v375 = vld [vmem:[#allocation4 + $0x4a8] sm:$0xff]
    %v376 = vld [vmem:[#allocation4 + $0x4b0] sm:$0xff]
    %v377 = vld [vmem:[#allocation4 + $0x4b8] sm:$0xff]
    %v378 = vld [vmem:[#allocation4 + $0x4c0] sm:$0xff]
    %v379 = vld [vmem:[#allocation4 + $0x4c8] sm:$0xff]
    %v380 = vld [vmem:[#allocation4 + $0x4d0] sm:$0xff]
    %v381 = vld [vmem:[#allocation4 + $0x4d8] sm:$0xff]
    %v382 = vld [vmem:[#allocation4 + $0x4e0] sm:$0xff]
    %v383 = vld [vmem:[#allocation4 + $0x4e8] sm:$0xff]
    %v384 = vld [vmem:[#allocation4 + $0x4f0] sm:$0xff]
    %v385 = vld [vmem:[#allocation4 + $0x4f8] sm:$0xff]
    %v386 = vld [vmem:[#allocation4 + $0x500] sm:$0xff]
    %v387 = vld [vmem:[#allocation4 + $0x508] sm:$0xff]
    %v388 = vld [vmem:[#allocation4 + $0x510] sm:$0xff]
    %v389 = vld [vmem:[#allocation4 + $0x518] sm:$0xff]
    %v390 = vld [vmem:[#allocation4 + $0x520] sm:$0xff]
    %v391 = vld [vmem:[#allocation4 + $0x528] sm:$0xff]
    %v392 = vld [vmem:[#allocation4 + $0x530] sm:$0xff]
    %v393 = vld [vmem:[#allocation4 + $0x538] sm:$0xff]
    %v394 = vld [vmem:[#allocation4 + $0x540] sm:$0xff]
    %v395 = vld [vmem:[#allocation4 + $0x548] sm:$0xff]
    %v396 = vld [vmem:[#allocation4 + $0x550] sm:$0xff]
    %v397 = vld [vmem:[#allocation4 + $0x558] sm:$0xff]
    %v398 = vld [vmem:[#allocation4 + $0x560] sm:$0xff]
    %v399 = vld [vmem:[#allocation4 + $0x568] sm:$0xff]
    %v400 = vld [vmem:[#allocation4 + $0x570] sm:$0xff]
    %v401 = vld [vmem:[#allocation4 + $0x578] sm:$0xff]
    %v402 = vld [vmem:[#allocation4 + $0x580] sm:$0xff]
    %v403 = vld [vmem:[#allocation4 + $0x588] sm:$0xff]
    %v404 = vld [vmem:[#allocation4 + $0x590] sm:$0xff]
    %v405 = vld [vmem:[#allocation4 + $0x598] sm:$0xff]
    %v406 = vld [vmem:[#allocation4 + $0x5a0] sm:$0xff]
    %v407 = vld [vmem:[#allocation4 + $0x5a8] sm:$0xff]
    %v408 = vld [vmem:[#allocation4 + $0x5b0] sm:$0xff]
    %v409 = vld [vmem:[#allocation4 + $0x5b8] sm:$0xff]
    %v410 = vld [vmem:[#allocation4 + $0x5c0] sm:$0xff]
    %v411 = vld [vmem:[#allocation4 + $0x5c8] sm:$0xff]
    %v412 = vld [vmem:[#allocation4 + $0x5d0] sm:$0xff]
    %v413 = vld [vmem:[#allocation4 + $0x5d8] sm:$0xff]
    %v414 = vld [vmem:[#allocation4 + $0x5e0] sm:$0xff]
    %v415 = vld [vmem:[#allocation4 + $0x5e8] sm:$0xff]
    %v416 = vld [vmem:[#allocation4 + $0x5f0] sm:$0xff]
    %v417 = vld [vmem:[#allocation4 + $0x5f8] sm:$0xff]
    %v418 = vld [vmem:[#allocation4 + $0x600] sm:$0xff]
    %v419 = vld [vmem:[#allocation4 + $0x608] sm:$0xff]
    %v420 = vld [vmem:[#allocation4 + $0x610] sm:$0xff]
    %v421 = vld [vmem:[#allocation4 + $0x618] sm:$0xff]
    %v422 = vld [vmem:[#allocation4 + $0x620] sm:$0xff]
    %v423 = vld [vmem:[#allocation4 + $0x628] sm:$0xff]
    %v424 = vld [vmem:[#allocation4 + $0x630] sm:$0xff]
    %v425 = vld [vmem:[#allocation4 + $0x638] sm:$0xff]
    %v426 = vld [vmem:[#allocation4 + $0x640] sm:$0xff]
    %v427 = vld [vmem:[#allocation4 + $0x648] sm:$0xff]
    %v428 = vld [vmem:[#allocation4 + $0x650] sm:$0xff]
    %v429 = vld [vmem:[#allocation4 + $0x658] sm:$0xff]
    %v430 = vld [vmem:[#allocation4 + $0x660] sm:$0xff]
    %v431 = vld [vmem:[#allocation4 + $0x668] sm:$0xff]
    %v432 = vld [vmem:[#allocation4 + $0x670] sm:$0xff]
    %v433 = vld [vmem:[#allocation4 + $0x678] sm:$0xff]
    %v434 = vld [vmem:[#allocation4 + $0x680] sm:$0xff]
    %v435 = vld [vmem:[#allocation4 + $0x688] sm:$0xff]
    %v436 = vld [vmem:[#allocation4 + $0x690] sm:$0xff]
    %v437 = vld [vmem:[#allocation4 + $0x698] sm:$0xff]
    %v438 = vld [vmem:[#allocation4 + $0x6a0] sm:$0xff]
    %v439 = vld [vmem:[#allocation4 + $0x6a8] sm:$0xff]
    %v440 = vld [vmem:[#allocation4 + $0x6b0] sm:$0xff]
    %v441 = vld [vmem:[#allocation4 + $0x6b8] sm:$0xff]
    %v442 = vld [vmem:[#allocation4 + $0x6c0] sm:$0xff]
    %v443 = vld [vmem:[#allocation4 + $0x6c8] sm:$0xff]
    %v444 = vld [vmem:[#allocation4 + $0x6d0] sm:$0xff]
    %v445 = vld [vmem:[#allocation4 + $0x6d8] sm:$0xff]
    %v446 = vld [vmem:[#allocation4 + $0x6e0] sm:$0xff]
    %v447 = vld [vmem:[#allocation4 + $0x6e8] sm:$0xff]
    %v448 = vld [vmem:[#allocation4 + $0x6f0] sm:$0xff]
    %v449 = vld [vmem:[#allocation4 + $0x6f8] sm:$0xff]
    %v450 = vld [vmem:[#allocation4 + $0x700] sm:$0xff]
    %v451 = vld [vmem:[#allocation4 + $0x708] sm:$0xff]
    %v452 = vld [vmem:[#allocation4 + $0x710] sm:$0xff]
    %v453 = vld [vmem:[#allocation4 + $0x718] sm:$0xff]
    %v454 = vld [vmem:[#allocation4 + $0x720] sm:$0xff]
    %v455 = vld [vmem:[#allocation4 + $0x728] sm:$0xff]
    %v456 = vld [vmem:[#allocation4 + $0x730] sm:$0xff]
    %v457 = vld [vmem:[#allocation4 + $0x738] sm:$0xff]
    %v458 = vld [vmem:[#allocation4 + $0x740] sm:$0xff]
    %v459 = vld [vmem:[#allocation4 + $0x748] sm:$0xff]
    %v460 = vld [vmem:[#allocation4 + $0x750] sm:$0xff]
    %v461 = vld [vmem:[#allocation4 + $0x758] sm:$0xff]
    %v462 = vld [vmem:[#allocation4 + $0x760] sm:$0xff]
    %v463 = vld [vmem:[#allocation4 + $0x768] sm:$0xff]
    %v464 = vld [vmem:[#allocation4 + $0x770] sm:$0xff]
    %v465 = vld [vmem:[#allocation4 + $0x778] sm:$0xff]
    %v466 = vld [vmem:[#allocation4 + $0x780] sm:$0xff]
    %v467 = vld [vmem:[#allocation4 + $0x788] sm:$0xff]
    %v468 = vld [vmem:[#allocation4 + $0x790] sm:$0xff]
    %v469 = vld [vmem:[#allocation4 + $0x798] sm:$0xff]
    %v470 = vld [vmem:[#allocation4 + $0x7a0] sm:$0xff]
    %v471 = vld [vmem:[#allocation4 + $0x7a8] sm:$0xff]
    %v472 = vld [vmem:[#allocation4 + $0x7b0] sm:$0xff]
    %v473 = vld [vmem:[#allocation4 + $0x7b8] sm:$0xff]
    %v474 = vld [vmem:[#allocation4 + $0x7c0] sm:$0xff]
    %v475 = vld [vmem:[#allocation4 + $0x7c8] sm:$0xff]
    %v476 = vld [vmem:[#allocation4 + $0x7d0] sm:$0xff]
    %v477 = vld [vmem:[#allocation4 + $0x7d8] sm:$0xff]
    %v478 = vld [vmem:[#allocation4 + $0x7e0] sm:$0xff]
    %v479 = vld [vmem:[#allocation4 + $0x7e8] sm:$0xff]
    %v480 = vld [vmem:[#allocation4 + $0x7f0] sm:$0xff]
    %v481 = vld [vmem:[#allocation4 + $0x7f8] sm:$0xff]
    %v482 = vld [vmem:[#allocation4 + $0x800] sm:$0xff]
    %v483 = vld [vmem:[#allocation4 + $0x808] sm:$0xff]
    %v484 = vld [vmem:[#allocation4 + $0x810] sm:$0xff]
    %v485 = vld [vmem:[#allocation4 + $0x818] sm:$0xff]
    %v486 = vld [vmem:[#allocation4 + $0x820] sm:$0xff]
    %v487 = vld [vmem:[#allocation4 + $0x828] sm:$0xff]
    %v488 = vld [vmem:[#allocation4 + $0x830] sm:$0xff]
    %v489 = vld [vmem:[#allocation4 + $0x838] sm:$0xff]
    %v490 = vld [vmem:[#allocation4 + $0x840] sm:$0xff]
    %v491 = vld [vmem:[#allocation4 + $0x848] sm:$0xff]
    %v492 = vld [vmem:[#allocation4 + $0x850] sm:$0xff]
    %v493 = vld [vmem:[#allocation4 + $0x858] sm:$0xff]
    %v494 = vld [vmem:[#allocation4 + $0x860] sm:$0xff]
    %v495 = vld [vmem:[#allocation4 + $0x868] sm:$0xff]
    %v496 = vld [vmem:[#allocation4 + $0x870] sm:$0xff]
    %v497 = vld [vmem:[#allocation4 + $0x878] sm:$0xff]
    %v498 = vld [vmem:[#allocation4 + $0x880] sm:$0xff]
    %v499 = vld [vmem:[#allocation4 + $0x888] sm:$0xff]
    %v500 = vld [vmem:[#allocation4 + $0x890] sm:$0xff]
    %v501 = vld [vmem:[#allocation4 + $0x898] sm:$0xff]
    %v502 = vld [vmem:[#allocation4 + $0x8a0] sm:$0xff]
    %v503 = vld [vmem:[#allocation4 + $0x8a8] sm:$0xff]
    %v504 = vld [vmem:[#allocation4 + $0x8b0] sm:$0xff]
    %v505 = vld [vmem:[#allocation4 + $0x8b8] sm:$0xff]
    %v506 = vld [vmem:[#allocation4 + $0x8c0] sm:$0xff]
    %v507 = vld [vmem:[#allocation4 + $0x8c8] sm:$0xff]
    %v508 = vld [vmem:[#allocation4 + $0x8d0] sm:$0xff]
    %v509 = vld [vmem:[#allocation4 + $0x8d8] sm:$0xff]
    %v510 = vld [vmem:[#allocation4 + $0x8e0] sm:$0xff]
    %v511 = vld [vmem:[#allocation4 + $0x8e8] sm:$0xff]
    %v512 = vld [vmem:[#allocation4 + $0x8f0] sm:$0xff]
    %v513 = vld [vmem:[#allocation4 + $0x8f8] sm:$0xff]
    %v514 = vld [vmem:[#allocation4 + $0x900] sm:$0xff]
    %v515 = vld [vmem:[#allocation4 + $0x908] sm:$0xff]
    %v516 = vld [vmem:[#allocation4 + $0x910] sm:$0xff]
    %v517 = vld [vmem:[#allocation4 + $0x918] sm:$0xff]
    %v518 = vld [vmem:[#allocation4 + $0x920] sm:$0xff]
    %v519 = vld [vmem:[#allocation4 + $0x928] sm:$0xff]
    %v520 = vld [vmem:[#allocation4 + $0x930] sm:$0xff]
    %v521 = vld [vmem:[#allocation4 + $0x938] sm:$0xff]
    %v522 = vld [vmem:[#allocation4 + $0x940] sm:$0xff]
    %v523 = vld [vmem:[#allocation4 + $0x948] sm:$0xff]
    %v524 = vld [vmem:[#allocation4 + $0x950] sm:$0xff]
    %v525 = vld [vmem:[#allocation4 + $0x958] sm:$0xff]
    %v526 = vld [vmem:[#allocation4 + $0x960] sm:$0xff]
    %v527 = vld [vmem:[#allocation4 + $0x968] sm:$0xff]
    %v528 = vld [vmem:[#allocation4 + $0x970] sm:$0xff]
    %v529 = vld [vmem:[#allocation4 + $0x978] sm:$0xff]
    %v530 = vld [vmem:[#allocation4 + $0x980] sm:$0xff]
    %v531 = vld [vmem:[#allocation4 + $0x988] sm:$0xff]
    %v532 = vld [vmem:[#allocation4 + $0x990] sm:$0xff]
    %v533 = vld [vmem:[#allocation4 + $0x998] sm:$0xff]
    %v534 = vld [vmem:[#allocation4 + $0x9a0] sm:$0xff]
    %v535 = vld [vmem:[#allocation4 + $0x9a8] sm:$0xff]
    %v536 = vld [vmem:[#allocation4 + $0x9b0] sm:$0xff]
    %v537 = vld [vmem:[#allocation4 + $0x9b8] sm:$0xff]
    %v538 = vld [vmem:[#allocation4 + $0x9c0] sm:$0xff]
    %v539 = vld [vmem:[#allocation4 + $0x9c8] sm:$0xff]
    %v540 = vld [vmem:[#allocation4 + $0x9d0] sm:$0xff]
    %v541 = vld [vmem:[#allocation4 + $0x9d8] sm:$0xff]
    %v542 = vld [vmem:[#allocation4 + $0x9e0] sm:$0xff]
    %v543 = vld [vmem:[#allocation4 + $0x9e8] sm:$0xff]
    %v544 = vld [vmem:[#allocation4 + $0x9f0] sm:$0xff]
    %v545 = vld [vmem:[#allocation4 + $0x9f8] sm:$0xff]
    %v546 = vld [vmem:[#allocation4 + $0xa00] sm:$0xff]
    %v547 = vld [vmem:[#allocation4 + $0xa08] sm:$0xff]
    %v548 = vld [vmem:[#allocation4 + $0xa10] sm:$0xff]
    %v549 = vld [vmem:[#allocation4 + $0xa18] sm:$0xff]
    %v550 = vld [vmem:[#allocation4 + $0xa20] sm:$0xff]
    %v551 = vld [vmem:[#allocation4 + $0xa28] sm:$0xff]
    %v552 = vld [vmem:[#allocation4 + $0xa30] sm:$0xff]
    %v553 = vld [vmem:[#allocation4 + $0xa38] sm:$0xff]
    %v554 = vld [vmem:[#allocation4 + $0xa40] sm:$0xff]
    %v555 = vld [vmem:[#allocation4 + $0xa48] sm:$0xff]
    %v556 = vld [vmem:[#allocation4 + $0xa50] sm:$0xff]
    %v557 = vld [vmem:[#allocation4 + $0xa58] sm:$0xff]
    %v558 = vld [vmem:[#allocation4 + $0xa60] sm:$0xff]
    %v559 = vld [vmem:[#allocation4 + $0xa68] sm:$0xff]
    %v560 = vld [vmem:[#allocation4 + $0xa70] sm:$0xff]
    %v561 = vld [vmem:[#allocation4 + $0xa78] sm:$0xff]
    %v562 = vld [vmem:[#allocation4 + $0xa80] sm:$0xff]
    %v563 = vld [vmem:[#allocation4 + $0xa88] sm:$0xff]
    %v564 = vld [vmem:[#allocation4 + $0xa90] sm:$0xff]
    %v565 = vld [vmem:[#allocation4 + $0xa98] sm:$0xff]
    %v566 = vld [vmem:[#allocation4 + $0xaa0] sm:$0xff]
    %v567 = vld [vmem:[#allocation4 + $0xaa8] sm:$0xff]
    %v568 = vld [vmem:[#allocation4 + $0xab0] sm:$0xff]
    %v569 = vld [vmem:[#allocation4 + $0xab8] sm:$0xff]
    %v570 = vld [vmem:[#allocation4 + $0xac0] sm:$0xff]
    %v571 = vld [vmem:[#allocation4 + $0xac8] sm:$0xff]
    %v572 = vld [vmem:[#allocation4 + $0xad0] sm:$0xff]
    %v573 = vld [vmem:[#allocation4 + $0xad8] sm:$0xff]
    %v574 = vld [vmem:[#allocation4 + $0xae0] sm:$0xff]
    %v575 = vld [vmem:[#allocation4 + $0xae8] sm:$0xff]
    %v576 = vld [vmem:[#allocation4 + $0xaf0] sm:$0xff]
    %v577 = vld [vmem:[#allocation4 + $0xaf8] sm:$0xff]
    %v578 = vld [vmem:[#allocation4 + $0xb00] sm:$0xff]
    %v579 = vld [vmem:[#allocation4 + $0xb08] sm:$0xff]
    %v580 = vld [vmem:[#allocation4 + $0xb10] sm:$0xff]
    %v581 = vld [vmem:[#allocation4 + $0xb18] sm:$0xff]
    %v582 = vld [vmem:[#allocation4 + $0xb20] sm:$0xff]
    %v583 = vld [vmem:[#allocation4 + $0xb28] sm:$0xff]
    %v584 = vld [vmem:[#allocation4 + $0xb30] sm:$0xff]
    %v585 = vld [vmem:[#allocation4 + $0xb38] sm:$0xff]
    %v586 = vld [vmem:[#allocation4 + $0xb40] sm:$0xff]
    %v587 = vld [vmem:[#allocation4 + $0xb48] sm:$0xff]
    %v588 = vld [vmem:[#allocation4 + $0xb50] sm:$0xff]
    %v589 = vld [vmem:[#allocation4 + $0xb58] sm:$0xff]
    %v590 = vld [vmem:[#allocation4 + $0xb60] sm:$0xff]
    %v591 = vld [vmem:[#allocation4 + $0xb68] sm:$0xff]
    %v592 = vld [vmem:[#allocation4 + $0xb70] sm:$0xff]
    %v593 = vld [vmem:[#allocation4 + $0xb78] sm:$0xff]
    %v594 = vld [vmem:[#allocation4 + $0xb80] sm:$0xff]
    %v595 = vld [vmem:[#allocation4 + $0xb88] sm:$0xff]
    %v596 = vld [vmem:[#allocation4 + $0xb90] sm:$0xff]
    %v597 = vld [vmem:[#allocation4 + $0xb98] sm:$0xff]
    %v598 = vld [vmem:[#allocation4 + $0xba0] sm:$0xff]
    %v599 = vld [vmem:[#allocation4 + $0xba8] sm:$0xff]
    %v600 = vld [vmem:[#allocation4 + $0xbb0] sm:$0xff]
    %v601 = vld [vmem:[#allocation4 + $0xbb8] sm:$0xff]
    %v602 = vld [vmem:[#allocation4 + $0xbc0] sm:$0xff]
    %v603 = vld [vmem:[#allocation4 + $0xbc8] sm:$0xff]
    %v604 = vld [vmem:[#allocation4 + $0xbd0] sm:$0xff]
    %v605 = vld [vmem:[#allocation4 + $0xbd8] sm:$0xff]
    %v606 = vld [vmem:[#allocation4 + $0xbe0] sm:$0xff]
    %v607 = vld [vmem:[#allocation4 + $0xbe8] sm:$0xff]
    %v608 = vld [vmem:[#allocation4 + $0xbf0] sm:$0xff]
    %v609 = vld [vmem:[#allocation4 + $0xbf8] sm:$0xff]
    %v610 = vld [vmem:[#allocation4 + $0xc00] sm:$0xff]
    %v611 = vld [vmem:[#allocation4 + $0xc08] sm:$0xff]
    %v612 = vld [vmem:[#allocation4 + $0xc10] sm:$0xff]
    %v613 = vld [vmem:[#allocation4 + $0xc18] sm:$0xff]
    %v614 = vld [vmem:[#allocation4 + $0xc20] sm:$0xff]
    %v615 = vld [vmem:[#allocation4 + $0xc28] sm:$0xff]
    %v616 = vld [vmem:[#allocation4 + $0xc30] sm:$0xff]
    %v617 = vld [vmem:[#allocation4 + $0xc38] sm:$0xff]
    %v618 = vld [vmem:[#allocation4 + $0xc40] sm:$0xff]
    %v619 = vld [vmem:[#allocation4 + $0xc48] sm:$0xff]
    %v620 = vld [vmem:[#allocation4 + $0xc50] sm:$0xff]
    %v621 = vld [vmem:[#allocation4 + $0xc58] sm:$0xff]
    %v622 = vld [vmem:[#allocation4 + $0xc60] sm:$0xff]
    %v623 = vld [vmem:[#allocation4 + $0xc68] sm:$0xff]
    %v624 = vld [vmem:[#allocation4 + $0xc70] sm:$0xff]
    %v625 = vld [vmem:[#allocation4 + $0xc78] sm:$0xff]
    %v626 = vld [vmem:[#allocation4 + $0xc80] sm:$0xff]
    %v627 = vld [vmem:[#allocation4 + $0xc88] sm:$0xff]
    %v628 = vld [vmem:[#allocation4 + $0xc90] sm:$0xff]
    %v629 = vld [vmem:[#allocation4 + $0xc98] sm:$0xff]
    %v630 = vld [vmem:[#allocation4 + $0xca0] sm:$0xff]
    %v631 = vld [vmem:[#allocation4 + $0xca8] sm:$0xff]
    %v632 = vld [vmem:[#allocation4 + $0xcb0] sm:$0xff]
    %v633 = vld [vmem:[#allocation4 + $0xcb8] sm:$0xff]
    %v634 = vld [vmem:[#allocation4 + $0xcc0] sm:$0xff]
    %v635 = vld [vmem:[#allocation4 + $0xcc8] sm:$0xff]
    %v636 = vld [vmem:[#allocation4 + $0xcd0] sm:$0xff]
    %v637 = vld [vmem:[#allocation4 + $0xcd8] sm:$0xff]
    %v638 = vld [vmem:[#allocation4 + $0xce0] sm:$0xff]
    %v639 = vld [vmem:[#allocation4 + $0xce8] sm:$0xff]
    %v640 = vld [vmem:[#allocation4 + $0xcf0] sm:$0xff]
    %v641 = vld [vmem:[#allocation4 + $0xcf8] sm:$0xff]
    %v642 = vld [vmem:[#allocation4 + $0xd00] sm:$0xff]
    %v643 = vld [vmem:[#allocation4 + $0xd08] sm:$0xff]
    %v644 = vld [vmem:[#allocation4 + $0xd10] sm:$0xff]
    %v645 = vld [vmem:[#allocation4 + $0xd18] sm:$0xff]
    %v646 = vld [vmem:[#allocation4 + $0xd20] sm:$0xff]
    %v647 = vld [vmem:[#allocation4 + $0xd28] sm:$0xff]
    %v648 = vld [vmem:[#allocation4 + $0xd30] sm:$0xff]
    %v649 = vld [vmem:[#allocation4 + $0xd38] sm:$0xff]
    %v650 = vld [vmem:[#allocation4 + $0xd40] sm:$0xff]
    %v651 = vld [vmem:[#allocation4 + $0xd48] sm:$0xff]
    %v652 = vld [vmem:[#allocation4 + $0xd50] sm:$0xff]
    %v653 = vld [vmem:[#allocation4 + $0xd58] sm:$0xff]
    %v654 = vld [vmem:[#allocation4 + $0xd60] sm:$0xff]
    %v655 = vld [vmem:[#allocation4 + $0xd68] sm:$0xff]
    %v656 = vld [vmem:[#allocation4 + $0xd70] sm:$0xff]
    %v657 = vld [vmem:[#allocation4 + $0xd78] sm:$0xff]
    %v658 = vld [vmem:[#allocation4 + $0xd80] sm:$0xff]
    %v659 = vld [vmem:[#allocation4 + $0xd88] sm:$0xff]
    %v660 = vld [vmem:[#allocation4 + $0xd90] sm:$0xff]
    %v661 = vld [vmem:[#allocation4 + $0xd98] sm:$0xff]
    %v662 = vld [vmem:[#allocation4 + $0xda0] sm:$0xff]
    %v663 = vld [vmem:[#allocation4 + $0xda8] sm:$0xff]
    %v664 = vld [vmem:[#allocation4 + $0xdb0] sm:$0xff]
    %v665 = vld [vmem:[#allocation4 + $0xdb8] sm:$0xff]
    %v666 = vld [vmem:[#allocation4 + $0xdc0] sm:$0xff]
    %v667 = vld [vmem:[#allocation4 + $0xdc8] sm:$0xff]
    %v668 = vld [vmem:[#allocation4 + $0xdd0] sm:$0xff]
    %v669 = vld [vmem:[#allocation4 + $0xdd8] sm:$0xff]
    %v670 = vld [vmem:[#allocation4 + $0xde0] sm:$0xff]
    %v671 = vld [vmem:[#allocation4 + $0xde8] sm:$0xff]
    %v672 = vld [vmem:[#allocation4 + $0xdf0] sm:$0xff]
    %v673 = vld [vmem:[#allocation4 + $0xdf8] sm:$0xff]
    %v674 = vld [vmem:[#allocation4 + $0xe00] sm:$0xff]
    %v675 = vld [vmem:[#allocation4 + $0xe08] sm:$0xff]
    %v676 = vld [vmem:[#allocation4 + $0xe10] sm:$0xff]
    %v677 = vld [vmem:[#allocation4 + $0xe18] sm:$0xff]
    %v678 = vld [vmem:[#allocation4 + $0xe20] sm:$0xff]
    %v679 = vld [vmem:[#allocation4 + $0xe28] sm:$0xff]
    %v680 = vld [vmem:[#allocation4 + $0xe30] sm:$0xff]
    %v681 = vld [vmem:[#allocation4 + $0xe38] sm:$0xff]
    %v682 = vld [vmem:[#allocation4 + $0xe40] sm:$0xff]
    %v683 = vld [vmem:[#allocation4 + $0xe48] sm:$0xff]
    %v684 = vld [vmem:[#allocation4 + $0xe50] sm:$0xff]
    %v685 = vld [vmem:[#allocation4 + $0xe58] sm:$0xff]
    %v686 = vld [vmem:[#allocation4 + $0xe60] sm:$0xff]
    %v687 = vld [vmem:[#allocation4 + $0xe68] sm:$0xff]
    %v688 = vld [vmem:[#allocation4 + $0xe70] sm:$0xff]
    %v689 = vld [vmem:[#allocation4 + $0xe78] sm:$0xff]
    %v690 = vld [vmem:[#allocation4 + $0xe80] sm:$0xff]
    %v691 = vld [vmem:[#allocation4 + $0xe88] sm:$0xff]
    %v692 = vld [vmem:[#allocation4 + $0xe90] sm:$0xff]
    %v693 = vld [vmem:[#allocation4 + $0xe98] sm:$0xff]
    %v694 = vld [vmem:[#allocation4 + $0xea0] sm:$0xff]
    %v695 = vld [vmem:[#allocation4 + $0xea8] sm:$0xff]
    %v696 = vld [vmem:[#allocation4 + $0xeb0] sm:$0xff]
    %v697 = vld [vmem:[#allocation4 + $0xeb8] sm:$0xff]
    %v698 = vld [vmem:[#allocation4 + $0xec0] sm:$0xff]
    %v699 = vld [vmem:[#allocation4 + $0xec8] sm:$0xff]
    %v700 = vld [vmem:[#allocation4 + $0xed0] sm:$0xff]
    %v701 = vld [vmem:[#allocation4 + $0xed8] sm:$0xff]
    %v702 = vld [vmem:[#allocation4 + $0xee0] sm:$0xff]
    %v703 = vld [vmem:[#allocation4 + $0xee8] sm:$0xff]
    %v704 = vld [vmem:[#allocation4 + $0xef0] sm:$0xff]
    %v705 = vld [vmem:[#allocation4 + $0xef8] sm:$0xff]
    %v706 = vld [vmem:[#allocation4 + $0xf00] sm:$0xff]
    %v707 = vld [vmem:[#allocation4 + $0xf08] sm:$0xff]
    %v708 = vld [vmem:[#allocation4 + $0xf10] sm:$0xff]
    %v709 = vld [vmem:[#allocation4 + $0xf18] sm:$0xff]
    %v710 = vld [vmem:[#allocation4 + $0xf20] sm:$0xff]
    %v711 = vld [vmem:[#allocation4 + $0xf28] sm:$0xff]
    %v712 = vld [vmem:[#allocation4 + $0xf30] sm:$0xff]
    %v713 = vld [vmem:[#allocation4 + $0xf38] sm:$0xff]
    %v714 = vld [vmem:[#allocation4 + $0xf40] sm:$0xff]
    %v715 = vld [vmem:[#allocation4 + $0xf48] sm:$0xff]
    %v716 = vld [vmem:[#allocation4 + $0xf50] sm:$0xff]
    %v717 = vld [vmem:[#allocation4 + $0xf58] sm:$0xff]
    %v718 = vld [vmem:[#allocation4 + $0xf60] sm:$0xff]
    %v719 = vld [vmem:[#allocation4 + $0xf68] sm:$0xff]
    %v720 = vld [vmem:[#allocation4 + $0xf70] sm:$0xff]
    %v721 = vld [vmem:[#allocation4 + $0xf78] sm:$0xff]
    %v722 = vld [vmem:[#allocation4 + $0xf80] sm:$0xff]
    %v723 = vld [vmem:[#allocation4 + $0xf88] sm:$0xff]
    %v724 = vld [vmem:[#allocation4 + $0xf90] sm:$0xff]
    %v725 = vld [vmem:[#allocation4 + $0xf98] sm:$0xff]
    %v726 = vld [vmem:[#allocation4 + $0xfa0] sm:$0xff]
    %v727 = vld [vmem:[#allocation4 + $0xfa8] sm:$0xff]
    %v728 = vld [vmem:[#allocation4 + $0xfb0] sm:$0xff]
    %v729 = vld [vmem:[#allocation4 + $0xfb8] sm:$0xff]
    %v730 = vld [vmem:[#allocation4 + $0xfc0] sm:$0xff]
    %v731 = vld [vmem:[#allocation4 + $0xfc8] sm:$0xff]
    %v732 = vld [vmem:[#allocation4 + $0xfd0] sm:$0xff]
    %v733 = vld [vmem:[#allocation4 + $0xfd8] sm:$0xff]
    %v734 = vld [vmem:[#allocation4 + $0xfe0] sm:$0xff]
    %v735 = vld [vmem:[#allocation4 + $0xfe8] sm:$0xff]
    %v736 = vld [vmem:[#allocation4 + $0xff0] sm:$0xff]
    %v737 = vld [vmem:[#allocation4 + $0xff8] sm:$0xff]
    %v738 = vld [vmem:[#allocation6] sm:$0xf]
    %v740 = vlaneseq
    %v741 = vshrl.u32 %v740, 7
    %v742 = vsub.s32 0, %v741
    %v743 = vrot.slane %v738, %v742
    %v744 = vlaneseq
    %v745 = vshrl.u32 %v744, 7
    %v746 = vsub.s32 1, %v745
    %v747 = vrot.slane %v738, %v746
    %v748 = vlaneseq
    %v749 = vshrl.u32 %v748, 7
    %v750 = vsub.s32 2, %v749
    %v751 = vrot.slane %v738, %v750
    %v752 = vlaneseq
    %v753 = vshrl.u32 %v752, 7
    %v754 = vsub.s32 3, %v753
    %v755 = vrot.slane %v738, %v754
    %v1272 = vunpack.c.l.b16 %v226
    %v1273 = vunpack.c.h.b16 %v226
    %v1274 = vunpack.c.l.b16 %v227
    %v1275 = vunpack.c.h.b16 %v227
    %v1276 = vunpack.c.l.b16 %v228
    %v1277 = vunpack.c.h.b16 %v228
    %v1278 = vunpack.c.l.b16 %v229
    %v1279 = vunpack.c.h.b16 %v229
    %v1280 = vunpack.c.l.b16 %v230
    %v1281 = vunpack.c.h.b16 %v230
    %v1282 = vunpack.c.l.b16 %v231
    %v1283 = vunpack.c.h.b16 %v231
    %v1284 = vunpack.c.l.b16 %v232
    %v1285 = vunpack.c.h.b16 %v232
    %v1286 = vunpack.c.l.b16 %v233
    %v1287 = vunpack.c.h.b16 %v233
    %v1288 = vunpack.c.l.b16 %v234
    %v1289 = vunpack.c.h.b16 %v234
    %v1290 = vunpack.c.l.b16 %v235
    %v1291 = vunpack.c.h.b16 %v235
    %v1292 = vunpack.c.l.b16 %v236
    %v1293 = vunpack.c.h.b16 %v236
    %v1294 = vunpack.c.l.b16 %v237
    %v1295 = vunpack.c.h.b16 %v237
    %v1296 = vunpack.c.l.b16 %v238
    %v1297 = vunpack.c.h.b16 %v238
    %v1298 = vunpack.c.l.b16 %v239
    %v1299 = vunpack.c.h.b16 %v239
    %v1300 = vunpack.c.l.b16 %v240
    %v1301 = vunpack.c.h.b16 %v240
    %v1302 = vunpack.c.l.b16 %v241
    %v1303 = vunpack.c.h.b16 %v241
    %v1304 = vunpack.c.l.b16 %v242
    %v1305 = vunpack.c.h.b16 %v242
    %v1306 = vunpack.c.l.b16 %v243
    %v1307 = vunpack.c.h.b16 %v243
    %v1308 = vunpack.c.l.b16 %v244
    %v1309 = vunpack.c.h.b16 %v244
    %v1310 = vunpack.c.l.b16 %v245
    %v1311 = vunpack.c.h.b16 %v245
    %v1312 = vunpack.c.l.b16 %v246
    %v1313 = vunpack.c.h.b16 %v246
    %v1314 = vunpack.c.l.b16 %v247
    %v1315 = vunpack.c.h.b16 %v247
    %v1316 = vunpack.c.l.b16 %v248
    %v1317 = vunpack.c.h.b16 %v248
    %v1318 = vunpack.c.l.b16 %v249
    %v1319 = vunpack.c.h.b16 %v249
    %v1320 = vunpack.c.l.b16 %v250
    %v1321 = vunpack.c.h.b16 %v250
    %v1322 = vunpack.c.l.b16 %v251
    %v1323 = vunpack.c.h.b16 %v251
    %v1324 = vunpack.c.l.b16 %v252
    %v1325 = vunpack.c.h.b16 %v252
    %v1326 = vunpack.c.l.b16 %v253
    %v1327 = vunpack.c.h.b16 %v253
    %v1328 = vunpack.c.l.b16 %v254
    %v1329 = vunpack.c.h.b16 %v254
    %v1330 = vunpack.c.l.b16 %v255
    %v1331 = vunpack.c.h.b16 %v255
    %v1332 = vunpack.c.l.b16 %v256
    %v1333 = vunpack.c.h.b16 %v256
    %v1334 = vunpack.c.l.b16 %v257
    %v1335 = vunpack.c.h.b16 %v257
    %v1336 = vunpack.c.l.b16 %v258
    %v1337 = vunpack.c.h.b16 %v258
    %v1338 = vunpack.c.l.b16 %v259
    %v1339 = vunpack.c.h.b16 %v259
    %v1340 = vunpack.c.l.b16 %v260
    %v1341 = vunpack.c.h.b16 %v260
    %v1342 = vunpack.c.l.b16 %v261
    %v1343 = vunpack.c.h.b16 %v261
    %v1344 = vunpack.c.l.b16 %v262
    %v1345 = vunpack.c.h.b16 %v262
    %v1346 = vunpack.c.l.b16 %v263
    %v1347 = vunpack.c.h.b16 %v263
    %v1348 = vunpack.c.l.b16 %v264
    %v1349 = vunpack.c.h.b16 %v264
    %v1350 = vunpack.c.l.b16 %v265
    %v1351 = vunpack.c.h.b16 %v265
    %v1352 = vunpack.c.l.b16 %v266
    %v1353 = vunpack.c.h.b16 %v266
    %v1354 = vunpack.c.l.b16 %v267
    %v1355 = vunpack.c.h.b16 %v267
    %v1356 = vunpack.c.l.b16 %v268
    %v1357 = vunpack.c.h.b16 %v268
    %v1358 = vunpack.c.l.b16 %v269
    %v1359 = vunpack.c.h.b16 %v269
    %v1360 = vunpack.c.l.b16 %v270
    %v1361 = vunpack.c.h.b16 %v270
    %v1362 = vunpack.c.l.b16 %v271
    %v1363 = vunpack.c.h.b16 %v271
    %v1364 = vunpack.c.l.b16 %v272
    %v1365 = vunpack.c.h.b16 %v272
    %v1366 = vunpack.c.l.b16 %v273
    %v1367 = vunpack.c.h.b16 %v273
    %v1368 = vunpack.c.l.b16 %v274
    %v1369 = vunpack.c.h.b16 %v274
    %v1370 = vunpack.c.l.b16 %v275
    %v1371 = vunpack.c.h.b16 %v275
    %v1372 = vunpack.c.l.b16 %v276
    %v1373 = vunpack.c.h.b16 %v276
    %v1374 = vunpack.c.l.b16 %v277
    %v1375 = vunpack.c.h.b16 %v277
    %v1376 = vunpack.c.l.b16 %v278
    %v1377 = vunpack.c.h.b16 %v278
    %v1378 = vunpack.c.l.b16 %v279
    %v1379 = vunpack.c.h.b16 %v279
    %v1380 = vunpack.c.l.b16 %v280
    %v1381 = vunpack.c.h.b16 %v280
    %v1382 = vunpack.c.l.b16 %v281
    %v1383 = vunpack.c.h.b16 %v281
    %v1384 = vunpack.c.l.b16 %v282
    %v1385 = vunpack.c.h.b16 %v282
    %v1386 = vunpack.c.l.b16 %v283
    %v1387 = vunpack.c.h.b16 %v283
    %v1388 = vunpack.c.l.b16 %v284
    %v1389 = vunpack.c.h.b16 %v284
    %v1390 = vunpack.c.l.b16 %v285
    %v1391 = vunpack.c.h.b16 %v285
    %v1392 = vunpack.c.l.b16 %v286
    %v1393 = vunpack.c.h.b16 %v286
    %v1394 = vunpack.c.l.b16 %v287
    %v1395 = vunpack.c.h.b16 %v287
    %v1396 = vunpack.c.l.b16 %v288
    %v1397 = vunpack.c.h.b16 %v288
    %v1398 = vunpack.c.l.b16 %v289
    %v1399 = vunpack.c.h.b16 %v289
    %v1400 = vunpack.c.l.b16 %v290
    %v1401 = vunpack.c.h.b16 %v290
    %v1402 = vunpack.c.l.b16 %v291
    %v1403 = vunpack.c.h.b16 %v291
    %v1404 = vunpack.c.l.b16 %v292
    %v1405 = vunpack.c.h.b16 %v292
    %v1406 = vunpack.c.l.b16 %v293
    %v1407 = vunpack.c.h.b16 %v293
    %v1408 = vunpack.c.l.b16 %v294
    %v1409 = vunpack.c.h.b16 %v294
    %v1410 = vunpack.c.l.b16 %v295
    %v1411 = vunpack.c.h.b16 %v295
    %v1412 = vunpack.c.l.b16 %v296
    %v1413 = vunpack.c.h.b16 %v296
    %v1414 = vunpack.c.l.b16 %v297
    %v1415 = vunpack.c.h.b16 %v297
    %v1416 = vunpack.c.l.b16 %v298
    %v1417 = vunpack.c.h.b16 %v298
    %v1418 = vunpack.c.l.b16 %v299
    %v1419 = vunpack.c.h.b16 %v299
    %v1420 = vunpack.c.l.b16 %v300
    %v1421 = vunpack.c.h.b16 %v300
    %v1422 = vunpack.c.l.b16 %v301
    %v1423 = vunpack.c.h.b16 %v301
    %v1424 = vunpack.c.l.b16 %v302
    %v1425 = vunpack.c.h.b16 %v302
    %v1426 = vunpack.c.l.b16 %v303
    %v1427 = vunpack.c.h.b16 %v303
    %v1428 = vunpack.c.l.b16 %v304
    %v1429 = vunpack.c.h.b16 %v304
    %v1430 = vunpack.c.l.b16 %v305
    %v1431 = vunpack.c.h.b16 %v305
    %v1432 = vunpack.c.l.b16 %v306
    %v1433 = vunpack.c.h.b16 %v306
    %v1434 = vunpack.c.l.b16 %v307
    %v1435 = vunpack.c.h.b16 %v307
    %v1436 = vunpack.c.l.b16 %v308
    %v1437 = vunpack.c.h.b16 %v308
    %v1438 = vunpack.c.l.b16 %v309
    %v1439 = vunpack.c.h.b16 %v309
    %v1440 = vunpack.c.l.b16 %v310
    %v1441 = vunpack.c.h.b16 %v310
    %v1442 = vunpack.c.l.b16 %v311
    %v1443 = vunpack.c.h.b16 %v311
    %v1444 = vunpack.c.l.b16 %v312
    %v1445 = vunpack.c.h.b16 %v312
    %v1446 = vunpack.c.l.b16 %v313
    %v1447 = vunpack.c.h.b16 %v313
    %v1448 = vunpack.c.l.b16 %v314
    %v1449 = vunpack.c.h.b16 %v314
    %v1450 = vunpack.c.l.b16 %v315
    %v1451 = vunpack.c.h.b16 %v315
    %v1452 = vunpack.c.l.b16 %v316
    %v1453 = vunpack.c.h.b16 %v316
    %v1454 = vunpack.c.l.b16 %v317
    %v1455 = vunpack.c.h.b16 %v317
    %v1456 = vunpack.c.l.b16 %v318
    %v1457 = vunpack.c.h.b16 %v318
    %v1458 = vunpack.c.l.b16 %v319
    %v1459 = vunpack.c.h.b16 %v319
    %v1460 = vunpack.c.l.b16 %v320
    %v1461 = vunpack.c.h.b16 %v320
    %v1462 = vunpack.c.l.b16 %v321
    %v1463 = vunpack.c.h.b16 %v321
    %v1464 = vunpack.c.l.b16 %v322
    %v1465 = vunpack.c.h.b16 %v322
    %v1466 = vunpack.c.l.b16 %v323
    %v1467 = vunpack.c.h.b16 %v323
    %v1468 = vunpack.c.l.b16 %v324
    %v1469 = vunpack.c.h.b16 %v324
    %v1470 = vunpack.c.l.b16 %v325
    %v1471 = vunpack.c.h.b16 %v325
    %v1472 = vunpack.c.l.b16 %v326
    %v1473 = vunpack.c.h.b16 %v326
    %v1474 = vunpack.c.l.b16 %v327
    %v1475 = vunpack.c.h.b16 %v327
    %v1476 = vunpack.c.l.b16 %v328
    %v1477 = vunpack.c.h.b16 %v328
    %v1478 = vunpack.c.l.b16 %v329
    %v1479 = vunpack.c.h.b16 %v329
    %v1480 = vunpack.c.l.b16 %v330
    %v1481 = vunpack.c.h.b16 %v330
    %v1482 = vunpack.c.l.b16 %v331
    %v1483 = vunpack.c.h.b16 %v331
    %v1484 = vunpack.c.l.b16 %v332
    %v1485 = vunpack.c.h.b16 %v332
    %v1486 = vunpack.c.l.b16 %v333
    %v1487 = vunpack.c.h.b16 %v333
    %v1488 = vunpack.c.l.b16 %v334
    %v1489 = vunpack.c.h.b16 %v334
    %v1490 = vunpack.c.l.b16 %v335
    %v1491 = vunpack.c.h.b16 %v335
    %v1492 = vunpack.c.l.b16 %v336
    %v1493 = vunpack.c.h.b16 %v336
    %v1494 = vunpack.c.l.b16 %v337
    %v1495 = vunpack.c.h.b16 %v337
    %v1496 = vunpack.c.l.b16 %v338
    %v1497 = vunpack.c.h.b16 %v338
    %v1498 = vunpack.c.l.b16 %v339
    %v1499 = vunpack.c.h.b16 %v339
    %v1500 = vunpack.c.l.b16 %v340
    %v1501 = vunpack.c.h.b16 %v340
    %v1502 = vunpack.c.l.b16 %v341
    %v1503 = vunpack.c.h.b16 %v341
    %v1504 = vunpack.c.l.b16 %v342
    %v1505 = vunpack.c.h.b16 %v342
    %v1506 = vunpack.c.l.b16 %v343
    %v1507 = vunpack.c.h.b16 %v343
    %v1508 = vunpack.c.l.b16 %v344
    %v1509 = vunpack.c.h.b16 %v344
    %v1510 = vunpack.c.l.b16 %v345
    %v1511 = vunpack.c.h.b16 %v345
    %v1512 = vunpack.c.l.b16 %v346
    %v1513 = vunpack.c.h.b16 %v346
    %v1514 = vunpack.c.l.b16 %v347
    %v1515 = vunpack.c.h.b16 %v347
    %v1516 = vunpack.c.l.b16 %v348
    %v1517 = vunpack.c.h.b16 %v348
    %v1518 = vunpack.c.l.b16 %v349
    %v1519 = vunpack.c.h.b16 %v349
    %v1520 = vunpack.c.l.b16 %v350
    %v1521 = vunpack.c.h.b16 %v350
    %v1522 = vunpack.c.l.b16 %v351
    %v1523 = vunpack.c.h.b16 %v351
    %v1524 = vunpack.c.l.b16 %v352
    %v1525 = vunpack.c.h.b16 %v352
    %v1526 = vunpack.c.l.b16 %v353
    %v1527 = vunpack.c.h.b16 %v353
    %v1528 = vunpack.c.l.b16 %v354
    %v1529 = vunpack.c.h.b16 %v354
    %v1530 = vunpack.c.l.b16 %v355
    %v1531 = vunpack.c.h.b16 %v355
    %v1532 = vunpack.c.l.b16 %v356
    %v1533 = vunpack.c.h.b16 %v356
    %v1534 = vunpack.c.l.b16 %v357
    %v1535 = vunpack.c.h.b16 %v357
    %v1536 = vunpack.c.l.b16 %v358
    %v1537 = vunpack.c.h.b16 %v358
    %v1538 = vunpack.c.l.b16 %v359
    %v1539 = vunpack.c.h.b16 %v359
    %v1540 = vunpack.c.l.b16 %v360
    %v1541 = vunpack.c.h.b16 %v360
    %v1542 = vunpack.c.l.b16 %v361
    %v1543 = vunpack.c.h.b16 %v361
    %v1544 = vunpack.c.l.b16 %v362
    %v1545 = vunpack.c.h.b16 %v362
    %v1546 = vunpack.c.l.b16 %v363
    %v1547 = vunpack.c.h.b16 %v363
    %v1548 = vunpack.c.l.b16 %v364
    %v1549 = vunpack.c.h.b16 %v364
    %v1550 = vunpack.c.l.b16 %v365
    %v1551 = vunpack.c.h.b16 %v365
    %v1552 = vunpack.c.l.b16 %v366
    %v1553 = vunpack.c.h.b16 %v366
    %v1554 = vunpack.c.l.b16 %v367
    %v1555 = vunpack.c.h.b16 %v367
    %v1556 = vunpack.c.l.b16 %v368
    %v1557 = vunpack.c.h.b16 %v368
    %v1558 = vunpack.c.l.b16 %v369
    %v1559 = vunpack.c.h.b16 %v369
    %v1560 = vunpack.c.l.b16 %v370
    %v1561 = vunpack.c.h.b16 %v370
    %v1562 = vunpack.c.l.b16 %v371
    %v1563 = vunpack.c.h.b16 %v371
    %v1564 = vunpack.c.l.b16 %v372
    %v1565 = vunpack.c.h.b16 %v372
    %v1566 = vunpack.c.l.b16 %v373
    %v1567 = vunpack.c.h.b16 %v373
    %v1568 = vunpack.c.l.b16 %v374
    %v1569 = vunpack.c.h.b16 %v374
    %v1570 = vunpack.c.l.b16 %v375
    %v1571 = vunpack.c.h.b16 %v375
    %v1572 = vunpack.c.l.b16 %v376
    %v1573 = vunpack.c.h.b16 %v376
    %v1574 = vunpack.c.l.b16 %v377
    %v1575 = vunpack.c.h.b16 %v377
    %v1576 = vunpack.c.l.b16 %v378
    %v1577 = vunpack.c.h.b16 %v378
    %v1578 = vunpack.c.l.b16 %v379
    %v1579 = vunpack.c.h.b16 %v379
    %v1580 = vunpack.c.l.b16 %v380
    %v1581 = vunpack.c.h.b16 %v380
    %v1582 = vunpack.c.l.b16 %v381
    %v1583 = vunpack.c.h.b16 %v381
    %v1584 = vunpack.c.l.b16 %v382
    %v1585 = vunpack.c.h.b16 %v382
    %v1586 = vunpack.c.l.b16 %v383
    %v1587 = vunpack.c.h.b16 %v383
    %v1588 = vunpack.c.l.b16 %v384
    %v1589 = vunpack.c.h.b16 %v384
    %v1590 = vunpack.c.l.b16 %v385
    %v1591 = vunpack.c.h.b16 %v385
    %v1592 = vunpack.c.l.b16 %v386
    %v1593 = vunpack.c.h.b16 %v386
    %v1594 = vunpack.c.l.b16 %v387
    %v1595 = vunpack.c.h.b16 %v387
    %v1596 = vunpack.c.l.b16 %v388
    %v1597 = vunpack.c.h.b16 %v388
    %v1598 = vunpack.c.l.b16 %v389
    %v1599 = vunpack.c.h.b16 %v389
    %v1600 = vunpack.c.l.b16 %v390
    %v1601 = vunpack.c.h.b16 %v390
    %v1602 = vunpack.c.l.b16 %v391
    %v1603 = vunpack.c.h.b16 %v391
    %v1604 = vunpack.c.l.b16 %v392
    %v1605 = vunpack.c.h.b16 %v392
    %v1606 = vunpack.c.l.b16 %v393
    %v1607 = vunpack.c.h.b16 %v393
    %v1608 = vunpack.c.l.b16 %v394
    %v1609 = vunpack.c.h.b16 %v394
    %v1610 = vunpack.c.l.b16 %v395
    %v1611 = vunpack.c.h.b16 %v395
    %v1612 = vunpack.c.l.b16 %v396
    %v1613 = vunpack.c.h.b16 %v396
    %v1614 = vunpack.c.l.b16 %v397
    %v1615 = vunpack.c.h.b16 %v397
    %v1616 = vunpack.c.l.b16 %v398
    %v1617 = vunpack.c.h.b16 %v398
    %v1618 = vunpack.c.l.b16 %v399
    %v1619 = vunpack.c.h.b16 %v399
    %v1620 = vunpack.c.l.b16 %v400
    %v1621 = vunpack.c.h.b16 %v400
    %v1622 = vunpack.c.l.b16 %v401
    %v1623 = vunpack.c.h.b16 %v401
    %v1624 = vunpack.c.l.b16 %v402
    %v1625 = vunpack.c.h.b16 %v402
    %v1626 = vunpack.c.l.b16 %v403
    %v1627 = vunpack.c.h.b16 %v403
    %v1628 = vunpack.c.l.b16 %v404
    %v1629 = vunpack.c.h.b16 %v404
    %v1630 = vunpack.c.l.b16 %v405
    %v1631 = vunpack.c.h.b16 %v405
    %v1632 = vunpack.c.l.b16 %v406
    %v1633 = vunpack.c.h.b16 %v406
    %v1634 = vunpack.c.l.b16 %v407
    %v1635 = vunpack.c.h.b16 %v407
    %v1636 = vunpack.c.l.b16 %v408
    %v1637 = vunpack.c.h.b16 %v408
    %v1638 = vunpack.c.l.b16 %v409
    %v1639 = vunpack.c.h.b16 %v409
    %v1640 = vunpack.c.l.b16 %v410
    %v1641 = vunpack.c.h.b16 %v410
    %v1642 = vunpack.c.l.b16 %v411
    %v1643 = vunpack.c.h.b16 %v411
    %v1644 = vunpack.c.l.b16 %v412
    %v1645 = vunpack.c.h.b16 %v412
    %v1646 = vunpack.c.l.b16 %v413
    %v1647 = vunpack.c.h.b16 %v413
    %v1648 = vunpack.c.l.b16 %v414
    %v1649 = vunpack.c.h.b16 %v414
    %v1650 = vunpack.c.l.b16 %v415
    %v1651 = vunpack.c.h.b16 %v415
    %v1652 = vunpack.c.l.b16 %v416
    %v1653 = vunpack.c.h.b16 %v416
    %v1654 = vunpack.c.l.b16 %v417
    %v1655 = vunpack.c.h.b16 %v417
    %v1656 = vunpack.c.l.b16 %v418
    %v1657 = vunpack.c.h.b16 %v418
    %v1658 = vunpack.c.l.b16 %v419
    %v1659 = vunpack.c.h.b16 %v419
    %v1660 = vunpack.c.l.b16 %v420
    %v1661 = vunpack.c.h.b16 %v420
    %v1662 = vunpack.c.l.b16 %v421
    %v1663 = vunpack.c.h.b16 %v421
    %v1664 = vunpack.c.l.b16 %v422
    %v1665 = vunpack.c.h.b16 %v422
    %v1666 = vunpack.c.l.b16 %v423
    %v1667 = vunpack.c.h.b16 %v423
    %v1668 = vunpack.c.l.b16 %v424
    %v1669 = vunpack.c.h.b16 %v424
    %v1670 = vunpack.c.l.b16 %v425
    %v1671 = vunpack.c.h.b16 %v425
    %v1672 = vunpack.c.l.b16 %v426
    %v1673 = vunpack.c.h.b16 %v426
    %v1674 = vunpack.c.l.b16 %v427
    %v1675 = vunpack.c.h.b16 %v427
    %v1676 = vunpack.c.l.b16 %v428
    %v1677 = vunpack.c.h.b16 %v428
    %v1678 = vunpack.c.l.b16 %v429
    %v1679 = vunpack.c.h.b16 %v429
    %v1680 = vunpack.c.l.b16 %v430
    %v1681 = vunpack.c.h.b16 %v430
    %v1682 = vunpack.c.l.b16 %v431
    %v1683 = vunpack.c.h.b16 %v431
    %v1684 = vunpack.c.l.b16 %v432
    %v1685 = vunpack.c.h.b16 %v432
    %v1686 = vunpack.c.l.b16 %v433
    %v1687 = vunpack.c.h.b16 %v433
    %v1688 = vunpack.c.l.b16 %v434
    %v1689 = vunpack.c.h.b16 %v434
    %v1690 = vunpack.c.l.b16 %v435
    %v1691 = vunpack.c.h.b16 %v435
    %v1692 = vunpack.c.l.b16 %v436
    %v1693 = vunpack.c.h.b16 %v436
    %v1694 = vunpack.c.l.b16 %v437
    %v1695 = vunpack.c.h.b16 %v437
    %v1696 = vunpack.c.l.b16 %v438
    %v1697 = vunpack.c.h.b16 %v438
    %v1698 = vunpack.c.l.b16 %v439
    %v1699 = vunpack.c.h.b16 %v439
    %v1700 = vunpack.c.l.b16 %v440
    %v1701 = vunpack.c.h.b16 %v440
    %v1702 = vunpack.c.l.b16 %v441
    %v1703 = vunpack.c.h.b16 %v441
    %v1704 = vunpack.c.l.b16 %v442
    %v1705 = vunpack.c.h.b16 %v442
    %v1706 = vunpack.c.l.b16 %v443
    %v1707 = vunpack.c.h.b16 %v443
    %v1708 = vunpack.c.l.b16 %v444
    %v1709 = vunpack.c.h.b16 %v444
    %v1710 = vunpack.c.l.b16 %v445
    %v1711 = vunpack.c.h.b16 %v445
    %v1712 = vunpack.c.l.b16 %v446
    %v1713 = vunpack.c.h.b16 %v446
    %v1714 = vunpack.c.l.b16 %v447
    %v1715 = vunpack.c.h.b16 %v447
    %v1716 = vunpack.c.l.b16 %v448
    %v1717 = vunpack.c.h.b16 %v448
    %v1718 = vunpack.c.l.b16 %v449
    %v1719 = vunpack.c.h.b16 %v449
    %v1720 = vunpack.c.l.b16 %v450
    %v1721 = vunpack.c.h.b16 %v450
    %v1722 = vunpack.c.l.b16 %v451
    %v1723 = vunpack.c.h.b16 %v451
    %v1724 = vunpack.c.l.b16 %v452
    %v1725 = vunpack.c.h.b16 %v452
    %v1726 = vunpack.c.l.b16 %v453
    %v1727 = vunpack.c.h.b16 %v453
    %v1728 = vunpack.c.l.b16 %v454
    %v1729 = vunpack.c.h.b16 %v454
    %v1730 = vunpack.c.l.b16 %v455
    %v1731 = vunpack.c.h.b16 %v455
    %v1732 = vunpack.c.l.b16 %v456
    %v1733 = vunpack.c.h.b16 %v456
    %v1734 = vunpack.c.l.b16 %v457
    %v1735 = vunpack.c.h.b16 %v457
    %v1736 = vunpack.c.l.b16 %v458
    %v1737 = vunpack.c.h.b16 %v458
    %v1738 = vunpack.c.l.b16 %v459
    %v1739 = vunpack.c.h.b16 %v459
    %v1740 = vunpack.c.l.b16 %v460
    %v1741 = vunpack.c.h.b16 %v460
    %v1742 = vunpack.c.l.b16 %v461
    %v1743 = vunpack.c.h.b16 %v461
    %v1744 = vunpack.c.l.b16 %v462
    %v1745 = vunpack.c.h.b16 %v462
    %v1746 = vunpack.c.l.b16 %v463
    %v1747 = vunpack.c.h.b16 %v463
    %v1748 = vunpack.c.l.b16 %v464
    %v1749 = vunpack.c.h.b16 %v464
    %v1750 = vunpack.c.l.b16 %v465
    %v1751 = vunpack.c.h.b16 %v465
    %v1752 = vunpack.c.l.b16 %v466
    %v1753 = vunpack.c.h.b16 %v466
    %v1754 = vunpack.c.l.b16 %v467
    %v1755 = vunpack.c.h.b16 %v467
    %v1756 = vunpack.c.l.b16 %v468
    %v1757 = vunpack.c.h.b16 %v468
    %v1758 = vunpack.c.l.b16 %v469
    %v1759 = vunpack.c.h.b16 %v469
    %v1760 = vunpack.c.l.b16 %v470
    %v1761 = vunpack.c.h.b16 %v470
    %v1762 = vunpack.c.l.b16 %v471
    %v1763 = vunpack.c.h.b16 %v471
    %v1764 = vunpack.c.l.b16 %v472
    %v1765 = vunpack.c.h.b16 %v472
    %v1766 = vunpack.c.l.b16 %v473
    %v1767 = vunpack.c.h.b16 %v473
    %v1768 = vunpack.c.l.b16 %v474
    %v1769 = vunpack.c.h.b16 %v474
    %v1770 = vunpack.c.l.b16 %v475
    %v1771 = vunpack.c.h.b16 %v475
    %v1772 = vunpack.c.l.b16 %v476
    %v1773 = vunpack.c.h.b16 %v476
    %v1774 = vunpack.c.l.b16 %v477
    %v1775 = vunpack.c.h.b16 %v477
    %v1776 = vunpack.c.l.b16 %v478
    %v1777 = vunpack.c.h.b16 %v478
    %v1778 = vunpack.c.l.b16 %v479
    %v1779 = vunpack.c.h.b16 %v479
    %v1780 = vunpack.c.l.b16 %v480
    %v1781 = vunpack.c.h.b16 %v480
    %v1782 = vunpack.c.l.b16 %v481
    %v1783 = vunpack.c.h.b16 %v481
    %v1784 = vunpack.c.l.b16 %v482
    %v1785 = vunpack.c.h.b16 %v482
    %v1786 = vunpack.c.l.b16 %v483
    %v1787 = vunpack.c.h.b16 %v483
    %v1788 = vunpack.c.l.b16 %v484
    %v1789 = vunpack.c.h.b16 %v484
    %v1790 = vunpack.c.l.b16 %v485
    %v1791 = vunpack.c.h.b16 %v485
    %v1792 = vunpack.c.l.b16 %v486
    %v1793 = vunpack.c.h.b16 %v486
    %v1794 = vunpack.c.l.b16 %v487
    %v1795 = vunpack.c.h.b16 %v487
    %v1796 = vunpack.c.l.b16 %v488
    %v1797 = vunpack.c.h.b16 %v488
    %v1798 = vunpack.c.l.b16 %v489
    %v1799 = vunpack.c.h.b16 %v489
    %v1800 = vunpack.c.l.b16 %v490
    %v1801 = vunpack.c.h.b16 %v490
    %v1802 = vunpack.c.l.b16 %v491
    %v1803 = vunpack.c.h.b16 %v491
    %v1804 = vunpack.c.l.b16 %v492
    %v1805 = vunpack.c.h.b16 %v492
    %v1806 = vunpack.c.l.b16 %v493
    %v1807 = vunpack.c.h.b16 %v493
    %v1808 = vunpack.c.l.b16 %v494
    %v1809 = vunpack.c.h.b16 %v494
    %v1810 = vunpack.c.l.b16 %v495
    %v1811 = vunpack.c.h.b16 %v495
    %v1812 = vunpack.c.l.b16 %v496
    %v1813 = vunpack.c.h.b16 %v496
    %v1814 = vunpack.c.l.b16 %v497
    %v1815 = vunpack.c.h.b16 %v497
    %v1816 = vunpack.c.l.b16 %v498
    %v1817 = vunpack.c.h.b16 %v498
    %v1818 = vunpack.c.l.b16 %v499
    %v1819 = vunpack.c.h.b16 %v499
    %v1820 = vunpack.c.l.b16 %v500
    %v1821 = vunpack.c.h.b16 %v500
    %v1822 = vunpack.c.l.b16 %v501
    %v1823 = vunpack.c.h.b16 %v501
    %v1824 = vunpack.c.l.b16 %v502
    %v1825 = vunpack.c.h.b16 %v502
    %v1826 = vunpack.c.l.b16 %v503
    %v1827 = vunpack.c.h.b16 %v503
    %v1828 = vunpack.c.l.b16 %v504
    %v1829 = vunpack.c.h.b16 %v504
    %v1830 = vunpack.c.l.b16 %v505
    %v1831 = vunpack.c.h.b16 %v505
    %v1832 = vunpack.c.l.b16 %v506
    %v1833 = vunpack.c.h.b16 %v506
    %v1834 = vunpack.c.l.b16 %v507
    %v1835 = vunpack.c.h.b16 %v507
    %v1836 = vunpack.c.l.b16 %v508
    %v1837 = vunpack.c.h.b16 %v508
    %v1838 = vunpack.c.l.b16 %v509
    %v1839 = vunpack.c.h.b16 %v509
    %v1840 = vunpack.c.l.b16 %v510
    %v1841 = vunpack.c.h.b16 %v510
    %v1842 = vunpack.c.l.b16 %v511
    %v1843 = vunpack.c.h.b16 %v511
    %v1844 = vunpack.c.l.b16 %v512
    %v1845 = vunpack.c.h.b16 %v512
    %v1846 = vunpack.c.l.b16 %v513
    %v1847 = vunpack.c.h.b16 %v513
    %v1848 = vunpack.c.l.b16 %v514
    %v1849 = vunpack.c.h.b16 %v514
    %v1850 = vunpack.c.l.b16 %v515
    %v1851 = vunpack.c.h.b16 %v515
    %v1852 = vunpack.c.l.b16 %v516
    %v1853 = vunpack.c.h.b16 %v516
    %v1854 = vunpack.c.l.b16 %v517
    %v1855 = vunpack.c.h.b16 %v517
    %v1856 = vunpack.c.l.b16 %v518
    %v1857 = vunpack.c.h.b16 %v518
    %v1858 = vunpack.c.l.b16 %v519
    %v1859 = vunpack.c.h.b16 %v519
    %v1860 = vunpack.c.l.b16 %v520
    %v1861 = vunpack.c.h.b16 %v520
    %v1862 = vunpack.c.l.b16 %v521
    %v1863 = vunpack.c.h.b16 %v521
    %v1864 = vunpack.c.l.b16 %v522
    %v1865 = vunpack.c.h.b16 %v522
    %v1866 = vunpack.c.l.b16 %v523
    %v1867 = vunpack.c.h.b16 %v523
    %v1868 = vunpack.c.l.b16 %v524
    %v1869 = vunpack.c.h.b16 %v524
    %v1870 = vunpack.c.l.b16 %v525
    %v1871 = vunpack.c.h.b16 %v525
    %v1872 = vunpack.c.l.b16 %v526
    %v1873 = vunpack.c.h.b16 %v526
    %v1874 = vunpack.c.l.b16 %v527
    %v1875 = vunpack.c.h.b16 %v527
    %v1876 = vunpack.c.l.b16 %v528
    %v1877 = vunpack.c.h.b16 %v528
    %v1878 = vunpack.c.l.b16 %v529
    %v1879 = vunpack.c.h.b16 %v529
    %v1880 = vunpack.c.l.b16 %v530
    %v1881 = vunpack.c.h.b16 %v530
    %v1882 = vunpack.c.l.b16 %v531
    %v1883 = vunpack.c.h.b16 %v531
    %v1884 = vunpack.c.l.b16 %v532
    %v1885 = vunpack.c.h.b16 %v532
    %v1886 = vunpack.c.l.b16 %v533
    %v1887 = vunpack.c.h.b16 %v533
    %v1888 = vunpack.c.l.b16 %v534
    %v1889 = vunpack.c.h.b16 %v534
    %v1890 = vunpack.c.l.b16 %v535
    %v1891 = vunpack.c.h.b16 %v535
    %v1892 = vunpack.c.l.b16 %v536
    %v1893 = vunpack.c.h.b16 %v536
    %v1894 = vunpack.c.l.b16 %v537
    %v1895 = vunpack.c.h.b16 %v537
    %v1896 = vunpack.c.l.b16 %v538
    %v1897 = vunpack.c.h.b16 %v538
    %v1898 = vunpack.c.l.b16 %v539
    %v1899 = vunpack.c.h.b16 %v539
    %v1900 = vunpack.c.l.b16 %v540
    %v1901 = vunpack.c.h.b16 %v540
    %v1902 = vunpack.c.l.b16 %v541
    %v1903 = vunpack.c.h.b16 %v541
    %v1904 = vunpack.c.l.b16 %v542
    %v1905 = vunpack.c.h.b16 %v542
    %v1906 = vunpack.c.l.b16 %v543
    %v1907 = vunpack.c.h.b16 %v543
    %v1908 = vunpack.c.l.b16 %v544
    %v1909 = vunpack.c.h.b16 %v544
    %v1910 = vunpack.c.l.b16 %v545
    %v1911 = vunpack.c.h.b16 %v545
    %v1912 = vunpack.c.l.b16 %v546
    %v1913 = vunpack.c.h.b16 %v546
    %v1914 = vunpack.c.l.b16 %v547
    %v1915 = vunpack.c.h.b16 %v547
    %v1916 = vunpack.c.l.b16 %v548
    %v1917 = vunpack.c.h.b16 %v548
    %v1918 = vunpack.c.l.b16 %v549
    %v1919 = vunpack.c.h.b16 %v549
    %v1920 = vunpack.c.l.b16 %v550
    %v1921 = vunpack.c.h.b16 %v550
    %v1922 = vunpack.c.l.b16 %v551
    %v1923 = vunpack.c.h.b16 %v551
    %v1924 = vunpack.c.l.b16 %v552
    %v1925 = vunpack.c.h.b16 %v552
    %v1926 = vunpack.c.l.b16 %v553
    %v1927 = vunpack.c.h.b16 %v553
    %v1928 = vunpack.c.l.b16 %v554
    %v1929 = vunpack.c.h.b16 %v554
    %v1930 = vunpack.c.l.b16 %v555
    %v1931 = vunpack.c.h.b16 %v555
    %v1932 = vunpack.c.l.b16 %v556
    %v1933 = vunpack.c.h.b16 %v556
    %v1934 = vunpack.c.l.b16 %v557
    %v1935 = vunpack.c.h.b16 %v557
    %v1936 = vunpack.c.l.b16 %v558
    %v1937 = vunpack.c.h.b16 %v558
    %v1938 = vunpack.c.l.b16 %v559
    %v1939 = vunpack.c.h.b16 %v559
    %v1940 = vunpack.c.l.b16 %v560
    %v1941 = vunpack.c.h.b16 %v560
    %v1942 = vunpack.c.l.b16 %v561
    %v1943 = vunpack.c.h.b16 %v561
    %v1944 = vunpack.c.l.b16 %v562
    %v1945 = vunpack.c.h.b16 %v562
    %v1946 = vunpack.c.l.b16 %v563
    %v1947 = vunpack.c.h.b16 %v563
    %v1948 = vunpack.c.l.b16 %v564
    %v1949 = vunpack.c.h.b16 %v564
    %v1950 = vunpack.c.l.b16 %v565
    %v1951 = vunpack.c.h.b16 %v565
    %v1952 = vunpack.c.l.b16 %v566
    %v1953 = vunpack.c.h.b16 %v566
    %v1954 = vunpack.c.l.b16 %v567
    %v1955 = vunpack.c.h.b16 %v567
    %v1956 = vunpack.c.l.b16 %v568
    %v1957 = vunpack.c.h.b16 %v568
    %v1958 = vunpack.c.l.b16 %v569
    %v1959 = vunpack.c.h.b16 %v569
    %v1960 = vunpack.c.l.b16 %v570
    %v1961 = vunpack.c.h.b16 %v570
    %v1962 = vunpack.c.l.b16 %v571
    %v1963 = vunpack.c.h.b16 %v571
    %v1964 = vunpack.c.l.b16 %v572
    %v1965 = vunpack.c.h.b16 %v572
    %v1966 = vunpack.c.l.b16 %v573
    %v1967 = vunpack.c.h.b16 %v573
    %v1968 = vunpack.c.l.b16 %v574
    %v1969 = vunpack.c.h.b16 %v574
    %v1970 = vunpack.c.l.b16 %v575
    %v1971 = vunpack.c.h.b16 %v575
    %v1972 = vunpack.c.l.b16 %v576
    %v1973 = vunpack.c.h.b16 %v576
    %v1974 = vunpack.c.l.b16 %v577
    %v1975 = vunpack.c.h.b16 %v577
    %v1976 = vunpack.c.l.b16 %v578
    %v1977 = vunpack.c.h.b16 %v578
    %v1978 = vunpack.c.l.b16 %v579
    %v1979 = vunpack.c.h.b16 %v579
    %v1980 = vunpack.c.l.b16 %v580
    %v1981 = vunpack.c.h.b16 %v580
    %v1982 = vunpack.c.l.b16 %v581
    %v1983 = vunpack.c.h.b16 %v581
    %v1984 = vunpack.c.l.b16 %v582
    %v1985 = vunpack.c.h.b16 %v582
    %v1986 = vunpack.c.l.b16 %v583
    %v1987 = vunpack.c.h.b16 %v583
    %v1988 = vunpack.c.l.b16 %v584
    %v1989 = vunpack.c.h.b16 %v584
    %v1990 = vunpack.c.l.b16 %v585
    %v1991 = vunpack.c.h.b16 %v585
    %v1992 = vunpack.c.l.b16 %v586
    %v1993 = vunpack.c.h.b16 %v586
    %v1994 = vunpack.c.l.b16 %v587
    %v1995 = vunpack.c.h.b16 %v587
    %v1996 = vunpack.c.l.b16 %v588
    %v1997 = vunpack.c.h.b16 %v588
    %v1998 = vunpack.c.l.b16 %v589
    %v1999 = vunpack.c.h.b16 %v589
    %v2000 = vunpack.c.l.b16 %v590
    %v2001 = vunpack.c.h.b16 %v590
    %v2002 = vunpack.c.l.b16 %v591
    %v2003 = vunpack.c.h.b16 %v591
    %v2004 = vunpack.c.l.b16 %v592
    %v2005 = vunpack.c.h.b16 %v592
    %v2006 = vunpack.c.l.b16 %v593
    %v2007 = vunpack.c.h.b16 %v593
    %v2008 = vunpack.c.l.b16 %v594
    %v2009 = vunpack.c.h.b16 %v594
    %v2010 = vunpack.c.l.b16 %v595
    %v2011 = vunpack.c.h.b16 %v595
    %v2012 = vunpack.c.l.b16 %v596
    %v2013 = vunpack.c.h.b16 %v596
    %v2014 = vunpack.c.l.b16 %v597
    %v2015 = vunpack.c.h.b16 %v597
    %v2016 = vunpack.c.l.b16 %v598
    %v2017 = vunpack.c.h.b16 %v598
    %v2018 = vunpack.c.l.b16 %v599
    %v2019 = vunpack.c.h.b16 %v599
    %v2020 = vunpack.c.l.b16 %v600
    %v2021 = vunpack.c.h.b16 %v600
    %v2022 = vunpack.c.l.b16 %v601
    %v2023 = vunpack.c.h.b16 %v601
    %v2024 = vunpack.c.l.b16 %v602
    %v2025 = vunpack.c.h.b16 %v602
    %v2026 = vunpack.c.l.b16 %v603
    %v2027 = vunpack.c.h.b16 %v603
    %v2028 = vunpack.c.l.b16 %v604
    %v2029 = vunpack.c.h.b16 %v604
    %v2030 = vunpack.c.l.b16 %v605
    %v2031 = vunpack.c.h.b16 %v605
    %v2032 = vunpack.c.l.b16 %v606
    %v2033 = vunpack.c.h.b16 %v606
    %v2034 = vunpack.c.l.b16 %v607
    %v2035 = vunpack.c.h.b16 %v607
    %v2036 = vunpack.c.l.b16 %v608
    %v2037 = vunpack.c.h.b16 %v608
    %v2038 = vunpack.c.l.b16 %v609
    %v2039 = vunpack.c.h.b16 %v609
    %v2040 = vunpack.c.l.b16 %v610
    %v2041 = vunpack.c.h.b16 %v610
    %v2042 = vunpack.c.l.b16 %v611
    %v2043 = vunpack.c.h.b16 %v611
    %v2044 = vunpack.c.l.b16 %v612
    %v2045 = vunpack.c.h.b16 %v612
    %v2046 = vunpack.c.l.b16 %v613
    %v2047 = vunpack.c.h.b16 %v613
    %v2048 = vunpack.c.l.b16 %v614
    %v2049 = vunpack.c.h.b16 %v614
    %v2050 = vunpack.c.l.b16 %v615
    %v2051 = vunpack.c.h.b16 %v615
    %v2052 = vunpack.c.l.b16 %v616
    %v2053 = vunpack.c.h.b16 %v616
    %v2054 = vunpack.c.l.b16 %v617
    %v2055 = vunpack.c.h.b16 %v617
    %v2056 = vunpack.c.l.b16 %v618
    %v2057 = vunpack.c.h.b16 %v618
    %v2058 = vunpack.c.l.b16 %v619
    %v2059 = vunpack.c.h.b16 %v619
    %v2060 = vunpack.c.l.b16 %v620
    %v2061 = vunpack.c.h.b16 %v620
    %v2062 = vunpack.c.l.b16 %v621
    %v2063 = vunpack.c.h.b16 %v621
    %v2064 = vunpack.c.l.b16 %v622
    %v2065 = vunpack.c.h.b16 %v622
    %v2066 = vunpack.c.l.b16 %v623
    %v2067 = vunpack.c.h.b16 %v623
    %v2068 = vunpack.c.l.b16 %v624
    %v2069 = vunpack.c.h.b16 %v624
    %v2070 = vunpack.c.l.b16 %v625
    %v2071 = vunpack.c.h.b16 %v625
    %v2072 = vunpack.c.l.b16 %v626
    %v2073 = vunpack.c.h.b16 %v626
    %v2074 = vunpack.c.l.b16 %v627
    %v2075 = vunpack.c.h.b16 %v627
    %v2076 = vunpack.c.l.b16 %v628
    %v2077 = vunpack.c.h.b16 %v628
    %v2078 = vunpack.c.l.b16 %v629
    %v2079 = vunpack.c.h.b16 %v629
    %v2080 = vunpack.c.l.b16 %v630
    %v2081 = vunpack.c.h.b16 %v630
    %v2082 = vunpack.c.l.b16 %v631
    %v2083 = vunpack.c.h.b16 %v631
    %v2084 = vunpack.c.l.b16 %v632
    %v2085 = vunpack.c.h.b16 %v632
    %v2086 = vunpack.c.l.b16 %v633
    %v2087 = vunpack.c.h.b16 %v633
    %v2088 = vunpack.c.l.b16 %v634
    %v2089 = vunpack.c.h.b16 %v634
    %v2090 = vunpack.c.l.b16 %v635
    %v2091 = vunpack.c.h.b16 %v635
    %v2092 = vunpack.c.l.b16 %v636
    %v2093 = vunpack.c.h.b16 %v636
    %v2094 = vunpack.c.l.b16 %v637
    %v2095 = vunpack.c.h.b16 %v637
    %v2096 = vunpack.c.l.b16 %v638
    %v2097 = vunpack.c.h.b16 %v638
    %v2098 = vunpack.c.l.b16 %v639
    %v2099 = vunpack.c.h.b16 %v639
    %v2100 = vunpack.c.l.b16 %v640
    %v2101 = vunpack.c.h.b16 %v640
    %v2102 = vunpack.c.l.b16 %v641
    %v2103 = vunpack.c.h.b16 %v641
    %v2104 = vunpack.c.l.b16 %v642
    %v2105 = vunpack.c.h.b16 %v642
    %v2106 = vunpack.c.l.b16 %v643
    %v2107 = vunpack.c.h.b16 %v643
    %v2108 = vunpack.c.l.b16 %v644
    %v2109 = vunpack.c.h.b16 %v644
    %v2110 = vunpack.c.l.b16 %v645
    %v2111 = vunpack.c.h.b16 %v645
    %v2112 = vunpack.c.l.b16 %v646
    %v2113 = vunpack.c.h.b16 %v646
    %v2114 = vunpack.c.l.b16 %v647
    %v2115 = vunpack.c.h.b16 %v647
    %v2116 = vunpack.c.l.b16 %v648
    %v2117 = vunpack.c.h.b16 %v648
    %v2118 = vunpack.c.l.b16 %v649
    %v2119 = vunpack.c.h.b16 %v649
    %v2120 = vunpack.c.l.b16 %v650
    %v2121 = vunpack.c.h.b16 %v650
    %v2122 = vunpack.c.l.b16 %v651
    %v2123 = vunpack.c.h.b16 %v651
    %v2124 = vunpack.c.l.b16 %v652
    %v2125 = vunpack.c.h.b16 %v652
    %v2126 = vunpack.c.l.b16 %v653
    %v2127 = vunpack.c.h.b16 %v653
    %v2128 = vunpack.c.l.b16 %v654
    %v2129 = vunpack.c.h.b16 %v654
    %v2130 = vunpack.c.l.b16 %v655
    %v2131 = vunpack.c.h.b16 %v655
    %v2132 = vunpack.c.l.b16 %v656
    %v2133 = vunpack.c.h.b16 %v656
    %v2134 = vunpack.c.l.b16 %v657
    %v2135 = vunpack.c.h.b16 %v657
    %v2136 = vunpack.c.l.b16 %v658
    %v2137 = vunpack.c.h.b16 %v658
    %v2138 = vunpack.c.l.b16 %v659
    %v2139 = vunpack.c.h.b16 %v659
    %v2140 = vunpack.c.l.b16 %v660
    %v2141 = vunpack.c.h.b16 %v660
    %v2142 = vunpack.c.l.b16 %v661
    %v2143 = vunpack.c.h.b16 %v661
    %v2144 = vunpack.c.l.b16 %v662
    %v2145 = vunpack.c.h.b16 %v662
    %v2146 = vunpack.c.l.b16 %v663
    %v2147 = vunpack.c.h.b16 %v663
    %v2148 = vunpack.c.l.b16 %v664
    %v2149 = vunpack.c.h.b16 %v664
    %v2150 = vunpack.c.l.b16 %v665
    %v2151 = vunpack.c.h.b16 %v665
    %v2152 = vunpack.c.l.b16 %v666
    %v2153 = vunpack.c.h.b16 %v666
    %v2154 = vunpack.c.l.b16 %v667
    %v2155 = vunpack.c.h.b16 %v667
    %v2156 = vunpack.c.l.b16 %v668
    %v2157 = vunpack.c.h.b16 %v668
    %v2158 = vunpack.c.l.b16 %v669
    %v2159 = vunpack.c.h.b16 %v669
    %v2160 = vunpack.c.l.b16 %v670
    %v2161 = vunpack.c.h.b16 %v670
    %v2162 = vunpack.c.l.b16 %v671
    %v2163 = vunpack.c.h.b16 %v671
    %v2164 = vunpack.c.l.b16 %v672
    %v2165 = vunpack.c.h.b16 %v672
    %v2166 = vunpack.c.l.b16 %v673
    %v2167 = vunpack.c.h.b16 %v673
    %v2168 = vunpack.c.l.b16 %v674
    %v2169 = vunpack.c.h.b16 %v674
    %v2170 = vunpack.c.l.b16 %v675
    %v2171 = vunpack.c.h.b16 %v675
    %v2172 = vunpack.c.l.b16 %v676
    %v2173 = vunpack.c.h.b16 %v676
    %v2174 = vunpack.c.l.b16 %v677
    %v2175 = vunpack.c.h.b16 %v677
    %v2176 = vunpack.c.l.b16 %v678
    %v2177 = vunpack.c.h.b16 %v678
    %v2178 = vunpack.c.l.b16 %v679
    %v2179 = vunpack.c.h.b16 %v679
    %v2180 = vunpack.c.l.b16 %v680
    %v2181 = vunpack.c.h.b16 %v680
    %v2182 = vunpack.c.l.b16 %v681
    %v2183 = vunpack.c.h.b16 %v681
    %v2184 = vunpack.c.l.b16 %v682
    %v2185 = vunpack.c.h.b16 %v682
    %v2186 = vunpack.c.l.b16 %v683
    %v2187 = vunpack.c.h.b16 %v683
    %v2188 = vunpack.c.l.b16 %v684
    %v2189 = vunpack.c.h.b16 %v684
    %v2190 = vunpack.c.l.b16 %v685
    %v2191 = vunpack.c.h.b16 %v685
    %v2192 = vunpack.c.l.b16 %v686
    %v2193 = vunpack.c.h.b16 %v686
    %v2194 = vunpack.c.l.b16 %v687
    %v2195 = vunpack.c.h.b16 %v687
    %v2196 = vunpack.c.l.b16 %v688
    %v2197 = vunpack.c.h.b16 %v688
    %v2198 = vunpack.c.l.b16 %v689
    %v2199 = vunpack.c.h.b16 %v689
    %v2200 = vunpack.c.l.b16 %v690
    %v2201 = vunpack.c.h.b16 %v690
    %v2202 = vunpack.c.l.b16 %v691
    %v2203 = vunpack.c.h.b16 %v691
    %v2204 = vunpack.c.l.b16 %v692
    %v2205 = vunpack.c.h.b16 %v692
    %v2206 = vunpack.c.l.b16 %v693
    %v2207 = vunpack.c.h.b16 %v693
    %v2208 = vunpack.c.l.b16 %v694
    %v2209 = vunpack.c.h.b16 %v694
    %v2210 = vunpack.c.l.b16 %v695
    %v2211 = vunpack.c.h.b16 %v695
    %v2212 = vunpack.c.l.b16 %v696
    %v2213 = vunpack.c.h.b16 %v696
    %v2214 = vunpack.c.l.b16 %v697
    %v2215 = vunpack.c.h.b16 %v697
    %v2216 = vunpack.c.l.b16 %v698
    %v2217 = vunpack.c.h.b16 %v698
    %v2218 = vunpack.c.l.b16 %v699
    %v2219 = vunpack.c.h.b16 %v699
    %v2220 = vunpack.c.l.b16 %v700
    %v2221 = vunpack.c.h.b16 %v700
    %v2222 = vunpack.c.l.b16 %v701
    %v2223 = vunpack.c.h.b16 %v701
    %v2224 = vunpack.c.l.b16 %v702
    %v2225 = vunpack.c.h.b16 %v702
    %v2226 = vunpack.c.l.b16 %v703
    %v2227 = vunpack.c.h.b16 %v703
    %v2228 = vunpack.c.l.b16 %v704
    %v2229 = vunpack.c.h.b16 %v704
    %v2230 = vunpack.c.l.b16 %v705
    %v2231 = vunpack.c.h.b16 %v705
    %v2232 = vunpack.c.l.b16 %v706
    %v2233 = vunpack.c.h.b16 %v706
    %v2234 = vunpack.c.l.b16 %v707
    %v2235 = vunpack.c.h.b16 %v707
    %v2236 = vunpack.c.l.b16 %v708
    %v2237 = vunpack.c.h.b16 %v708
    %v2238 = vunpack.c.l.b16 %v709
    %v2239 = vunpack.c.h.b16 %v709
    %v2240 = vunpack.c.l.b16 %v710
    %v2241 = vunpack.c.h.b16 %v710
    %v2242 = vunpack.c.l.b16 %v711
    %v2243 = vunpack.c.h.b16 %v711
    %v2244 = vunpack.c.l.b16 %v712
    %v2245 = vunpack.c.h.b16 %v712
    %v2246 = vunpack.c.l.b16 %v713
    %v2247 = vunpack.c.h.b16 %v713
    %v2248 = vunpack.c.l.b16 %v714
    %v2249 = vunpack.c.h.b16 %v714
    %v2250 = vunpack.c.l.b16 %v715
    %v2251 = vunpack.c.h.b16 %v715
    %v2252 = vunpack.c.l.b16 %v716
    %v2253 = vunpack.c.h.b16 %v716
    %v2254 = vunpack.c.l.b16 %v717
    %v2255 = vunpack.c.h.b16 %v717
    %v2256 = vunpack.c.l.b16 %v718
    %v2257 = vunpack.c.h.b16 %v718
    %v2258 = vunpack.c.l.b16 %v719
    %v2259 = vunpack.c.h.b16 %v719
    %v2260 = vunpack.c.l.b16 %v720
    %v2261 = vunpack.c.h.b16 %v720
    %v2262 = vunpack.c.l.b16 %v721
    %v2263 = vunpack.c.h.b16 %v721
    %v2264 = vunpack.c.l.b16 %v722
    %v2265 = vunpack.c.h.b16 %v722
    %v2266 = vunpack.c.l.b16 %v723
    %v2267 = vunpack.c.h.b16 %v723
    %v2268 = vunpack.c.l.b16 %v724
    %v2269 = vunpack.c.h.b16 %v724
    %v2270 = vunpack.c.l.b16 %v725
    %v2271 = vunpack.c.h.b16 %v725
    %v2272 = vunpack.c.l.b16 %v726
    %v2273 = vunpack.c.h.b16 %v726
    %v2274 = vunpack.c.l.b16 %v727
    %v2275 = vunpack.c.h.b16 %v727
    %v2276 = vunpack.c.l.b16 %v728
    %v2277 = vunpack.c.h.b16 %v728
    %v2278 = vunpack.c.l.b16 %v729
    %v2279 = vunpack.c.h.b16 %v729
    %v2280 = vunpack.c.l.b16 %v730
    %v2281 = vunpack.c.h.b16 %v730
    %v2282 = vunpack.c.l.b16 %v731
    %v2283 = vunpack.c.h.b16 %v731
    %v2284 = vunpack.c.l.b16 %v732
    %v2285 = vunpack.c.h.b16 %v732
    %v2286 = vunpack.c.l.b16 %v733
    %v2287 = vunpack.c.h.b16 %v733
    %v2288 = vunpack.c.l.b16 %v734
    %v2289 = vunpack.c.h.b16 %v734
    %v2290 = vunpack.c.l.b16 %v735
    %v2291 = vunpack.c.h.b16 %v735
    %v2292 = vunpack.c.l.b16 %v736
    %v2293 = vunpack.c.h.b16 %v736
    %v2294 = vunpack.c.l.b16 %v737
    %v2295 = vunpack.c.h.b16 %v737
    %v2296 = vpack.c.b16 %v1276, %v1272
    %v2297 = vpack.c.b16 %v1277, %v1273
    %v2298 = vpack.c.b16 %v1278, %v1274
    %v2299 = vpack.c.b16 %v1279, %v1275
    %v2300 = vpack.c.b16 %v1284, %v1280
    %v2301 = vpack.c.b16 %v1285, %v1281
    %v2302 = vpack.c.b16 %v1286, %v1282
    %v2303 = vpack.c.b16 %v1287, %v1283
    %v2304 = vpack.c.b16 %v1292, %v1288
    %v2305 = vpack.c.b16 %v1293, %v1289
    %v2306 = vpack.c.b16 %v1294, %v1290
    %v2307 = vpack.c.b16 %v1295, %v1291
    %v2308 = vpack.c.b16 %v1300, %v1296
    %v2309 = vpack.c.b16 %v1301, %v1297
    %v2310 = vpack.c.b16 %v1302, %v1298
    %v2311 = vpack.c.b16 %v1303, %v1299
    %v2312 = vpack.c.b16 %v1308, %v1304
    %v2313 = vpack.c.b16 %v1309, %v1305
    %v2314 = vpack.c.b16 %v1310, %v1306
    %v2315 = vpack.c.b16 %v1311, %v1307
    %v2316 = vpack.c.b16 %v1316, %v1312
    %v2317 = vpack.c.b16 %v1317, %v1313
    %v2318 = vpack.c.b16 %v1318, %v1314
    %v2319 = vpack.c.b16 %v1319, %v1315
    %v2320 = vpack.c.b16 %v1324, %v1320
    %v2321 = vpack.c.b16 %v1325, %v1321
    %v2322 = vpack.c.b16 %v1326, %v1322
    %v2323 = vpack.c.b16 %v1327, %v1323
    %v2324 = vpack.c.b16 %v1332, %v1328
    %v2325 = vpack.c.b16 %v1333, %v1329
    %v2326 = vpack.c.b16 %v1334, %v1330
    %v2327 = vpack.c.b16 %v1335, %v1331
    %v2328 = vpack.c.b16 %v1340, %v1336
    %v2329 = vpack.c.b16 %v1341, %v1337
    %v2330 = vpack.c.b16 %v1342, %v1338
    %v2331 = vpack.c.b16 %v1343, %v1339
    %v2332 = vpack.c.b16 %v1348, %v1344
    %v2333 = vpack.c.b16 %v1349, %v1345
    %v2334 = vpack.c.b16 %v1350, %v1346
    %v2335 = vpack.c.b16 %v1351, %v1347
    %v2336 = vpack.c.b16 %v1356, %v1352
    %v2337 = vpack.c.b16 %v1357, %v1353
    %v2338 = vpack.c.b16 %v1358, %v1354
    %v2339 = vpack.c.b16 %v1359, %v1355
    %v2340 = vpack.c.b16 %v1364, %v1360
    %v2341 = vpack.c.b16 %v1365, %v1361
    %v2342 = vpack.c.b16 %v1366, %v1362
    %v2343 = vpack.c.b16 %v1367, %v1363
    %v2344 = vpack.c.b16 %v1372, %v1368
    %v2345 = vpack.c.b16 %v1373, %v1369
    %v2346 = vpack.c.b16 %v1374, %v1370
    %v2347 = vpack.c.b16 %v1375, %v1371
    %v2348 = vpack.c.b16 %v1380, %v1376
    %v2349 = vpack.c.b16 %v1381, %v1377
    %v2350 = vpack.c.b16 %v1382, %v1378
    %v2351 = vpack.c.b16 %v1383, %v1379
    %v2352 = vpack.c.b16 %v1388, %v1384
    %v2353 = vpack.c.b16 %v1389, %v1385
    %v2354 = vpack.c.b16 %v1390, %v1386
    %v2355 = vpack.c.b16 %v1391, %v1387
    %v2356 = vpack.c.b16 %v1396, %v1392
    %v2357 = vpack.c.b16 %v1397, %v1393
    %v2358 = vpack.c.b16 %v1398, %v1394
    %v2359 = vpack.c.b16 %v1399, %v1395
    %v2360 = vpack.c.b16 %v1404, %v1400
    %v2361 = vpack.c.b16 %v1405, %v1401
    %v2362 = vpack.c.b16 %v1406, %v1402
    %v2363 = vpack.c.b16 %v1407, %v1403
    %v2364 = vpack.c.b16 %v1412, %v1408
    %v2365 = vpack.c.b16 %v1413, %v1409
    %v2366 = vpack.c.b16 %v1414, %v1410
    %v2367 = vpack.c.b16 %v1415, %v1411
    %v2368 = vpack.c.b16 %v1420, %v1416
    %v2369 = vpack.c.b16 %v1421, %v1417
    %v2370 = vpack.c.b16 %v1422, %v1418
    %v2371 = vpack.c.b16 %v1423, %v1419
    %v2372 = vpack.c.b16 %v1428, %v1424
    %v2373 = vpack.c.b16 %v1429, %v1425
    %v2374 = vpack.c.b16 %v1430, %v1426
    %v2375 = vpack.c.b16 %v1431, %v1427
    %v2376 = vpack.c.b16 %v1436, %v1432
    %v2377 = vpack.c.b16 %v1437, %v1433
    %v2378 = vpack.c.b16 %v1438, %v1434
    %v2379 = vpack.c.b16 %v1439, %v1435
    %v2380 = vpack.c.b16 %v1444, %v1440
    %v2381 = vpack.c.b16 %v1445, %v1441
    %v2382 = vpack.c.b16 %v1446, %v1442
    %v2383 = vpack.c.b16 %v1447, %v1443
    %v2384 = vpack.c.b16 %v1452, %v1448
    %v2385 = vpack.c.b16 %v1453, %v1449
    %v2386 = vpack.c.b16 %v1454, %v1450
    %v2387 = vpack.c.b16 %v1455, %v1451
    %v2388 = vpack.c.b16 %v1460, %v1456
    %v2389 = vpack.c.b16 %v1461, %v1457
    %v2390 = vpack.c.b16 %v1462, %v1458
    %v2391 = vpack.c.b16 %v1463, %v1459
    %v2392 = vpack.c.b16 %v1468, %v1464
    %v2393 = vpack.c.b16 %v1469, %v1465
    %v2394 = vpack.c.b16 %v1470, %v1466
    %v2395 = vpack.c.b16 %v1471, %v1467
    %v2396 = vpack.c.b16 %v1476, %v1472
    %v2397 = vpack.c.b16 %v1477, %v1473
    %v2398 = vpack.c.b16 %v1478, %v1474
    %v2399 = vpack.c.b16 %v1479, %v1475
    %v2400 = vpack.c.b16 %v1484, %v1480
    %v2401 = vpack.c.b16 %v1485, %v1481
    %v2402 = vpack.c.b16 %v1486, %v1482
    %v2403 = vpack.c.b16 %v1487, %v1483
    %v2404 = vpack.c.b16 %v1492, %v1488
    %v2405 = vpack.c.b16 %v1493, %v1489
    %v2406 = vpack.c.b16 %v1494, %v1490
    %v2407 = vpack.c.b16 %v1495, %v1491
    %v2408 = vpack.c.b16 %v1500, %v1496
    %v2409 = vpack.c.b16 %v1501, %v1497
    %v2410 = vpack.c.b16 %v1502, %v1498
    %v2411 = vpack.c.b16 %v1503, %v1499
    %v2412 = vpack.c.b16 %v1508, %v1504
    %v2413 = vpack.c.b16 %v1509, %v1505
    %v2414 = vpack.c.b16 %v1510, %v1506
    %v2415 = vpack.c.b16 %v1511, %v1507
    %v2416 = vpack.c.b16 %v1516, %v1512
    %v2417 = vpack.c.b16 %v1517, %v1513
    %v2418 = vpack.c.b16 %v1518, %v1514
    %v2419 = vpack.c.b16 %v1519, %v1515
    %v2420 = vpack.c.b16 %v1524, %v1520
    %v2421 = vpack.c.b16 %v1525, %v1521
    %v2422 = vpack.c.b16 %v1526, %v1522
    %v2423 = vpack.c.b16 %v1527, %v1523
    %v2424 = vpack.c.b16 %v1532, %v1528
    %v2425 = vpack.c.b16 %v1533, %v1529
    %v2426 = vpack.c.b16 %v1534, %v1530
    %v2427 = vpack.c.b16 %v1535, %v1531
    %v2428 = vpack.c.b16 %v1540, %v1536
    %v2429 = vpack.c.b16 %v1541, %v1537
    %v2430 = vpack.c.b16 %v1542, %v1538
    %v2431 = vpack.c.b16 %v1543, %v1539
    %v2432 = vpack.c.b16 %v1548, %v1544
    %v2433 = vpack.c.b16 %v1549, %v1545
    %v2434 = vpack.c.b16 %v1550, %v1546
    %v2435 = vpack.c.b16 %v1551, %v1547
    %v2436 = vpack.c.b16 %v1556, %v1552
    %v2437 = vpack.c.b16 %v1557, %v1553
    %v2438 = vpack.c.b16 %v1558, %v1554
    %v2439 = vpack.c.b16 %v1559, %v1555
    %v2440 = vpack.c.b16 %v1564, %v1560
    %v2441 = vpack.c.b16 %v1565, %v1561
    %v2442 = vpack.c.b16 %v1566, %v1562
    %v2443 = vpack.c.b16 %v1567, %v1563
    %v2444 = vpack.c.b16 %v1572, %v1568
    %v2445 = vpack.c.b16 %v1573, %v1569
    %v2446 = vpack.c.b16 %v1574, %v1570
    %v2447 = vpack.c.b16 %v1575, %v1571
    %v2448 = vpack.c.b16 %v1580, %v1576
    %v2449 = vpack.c.b16 %v1581, %v1577
    %v2450 = vpack.c.b16 %v1582, %v1578
    %v2451 = vpack.c.b16 %v1583, %v1579
    %v2452 = vpack.c.b16 %v1588, %v1584
    %v2453 = vpack.c.b16 %v1589, %v1585
    %v2454 = vpack.c.b16 %v1590, %v1586
    %v2455 = vpack.c.b16 %v1591, %v1587
    %v2456 = vpack.c.b16 %v1596, %v1592
    %v2457 = vpack.c.b16 %v1597, %v1593
    %v2458 = vpack.c.b16 %v1598, %v1594
    %v2459 = vpack.c.b16 %v1599, %v1595
    %v2460 = vpack.c.b16 %v1604, %v1600
    %v2461 = vpack.c.b16 %v1605, %v1601
    %v2462 = vpack.c.b16 %v1606, %v1602
    %v2463 = vpack.c.b16 %v1607, %v1603
    %v2464 = vpack.c.b16 %v1612, %v1608
    %v2465 = vpack.c.b16 %v1613, %v1609
    %v2466 = vpack.c.b16 %v1614, %v1610
    %v2467 = vpack.c.b16 %v1615, %v1611
    %v2468 = vpack.c.b16 %v1620, %v1616
    %v2469 = vpack.c.b16 %v1621, %v1617
    %v2470 = vpack.c.b16 %v1622, %v1618
    %v2471 = vpack.c.b16 %v1623, %v1619
    %v2472 = vpack.c.b16 %v1628, %v1624
    %v2473 = vpack.c.b16 %v1629, %v1625
    %v2474 = vpack.c.b16 %v1630, %v1626
    %v2475 = vpack.c.b16 %v1631, %v1627
    %v2476 = vpack.c.b16 %v1636, %v1632
    %v2477 = vpack.c.b16 %v1637, %v1633
    %v2478 = vpack.c.b16 %v1638, %v1634
    %v2479 = vpack.c.b16 %v1639, %v1635
    %v2480 = vpack.c.b16 %v1644, %v1640
    %v2481 = vpack.c.b16 %v1645, %v1641
    %v2482 = vpack.c.b16 %v1646, %v1642
    %v2483 = vpack.c.b16 %v1647, %v1643
    %v2484 = vpack.c.b16 %v1652, %v1648
    %v2485 = vpack.c.b16 %v1653, %v1649
    %v2486 = vpack.c.b16 %v1654, %v1650
    %v2487 = vpack.c.b16 %v1655, %v1651
    %v2488 = vpack.c.b16 %v1660, %v1656
    %v2489 = vpack.c.b16 %v1661, %v1657
    %v2490 = vpack.c.b16 %v1662, %v1658
    %v2491 = vpack.c.b16 %v1663, %v1659
    %v2492 = vpack.c.b16 %v1668, %v1664
    %v2493 = vpack.c.b16 %v1669, %v1665
    %v2494 = vpack.c.b16 %v1670, %v1666
    %v2495 = vpack.c.b16 %v1671, %v1667
    %v2496 = vpack.c.b16 %v1676, %v1672
    %v2497 = vpack.c.b16 %v1677, %v1673
    %v2498 = vpack.c.b16 %v1678, %v1674
    %v2499 = vpack.c.b16 %v1679, %v1675
    %v2500 = vpack.c.b16 %v1684, %v1680
    %v2501 = vpack.c.b16 %v1685, %v1681
    %v2502 = vpack.c.b16 %v1686, %v1682
    %v2503 = vpack.c.b16 %v1687, %v1683
    %v2504 = vpack.c.b16 %v1692, %v1688
    %v2505 = vpack.c.b16 %v1693, %v1689
    %v2506 = vpack.c.b16 %v1694, %v1690
    %v2507 = vpack.c.b16 %v1695, %v1691
    %v2508 = vpack.c.b16 %v1700, %v1696
    %v2509 = vpack.c.b16 %v1701, %v1697
    %v2510 = vpack.c.b16 %v1702, %v1698
    %v2511 = vpack.c.b16 %v1703, %v1699
    %v2512 = vpack.c.b16 %v1708, %v1704
    %v2513 = vpack.c.b16 %v1709, %v1705
    %v2514 = vpack.c.b16 %v1710, %v1706
    %v2515 = vpack.c.b16 %v1711, %v1707
    %v2516 = vpack.c.b16 %v1716, %v1712
    %v2517 = vpack.c.b16 %v1717, %v1713
    %v2518 = vpack.c.b16 %v1718, %v1714
    %v2519 = vpack.c.b16 %v1719, %v1715
    %v2520 = vpack.c.b16 %v1724, %v1720
    %v2521 = vpack.c.b16 %v1725, %v1721
    %v2522 = vpack.c.b16 %v1726, %v1722
    %v2523 = vpack.c.b16 %v1727, %v1723
    %v2524 = vpack.c.b16 %v1732, %v1728
    %v2525 = vpack.c.b16 %v1733, %v1729
    %v2526 = vpack.c.b16 %v1734, %v1730
    %v2527 = vpack.c.b16 %v1735, %v1731
    %v2528 = vpack.c.b16 %v1740, %v1736
    %v2529 = vpack.c.b16 %v1741, %v1737
    %v2530 = vpack.c.b16 %v1742, %v1738
    %v2531 = vpack.c.b16 %v1743, %v1739
    %v2532 = vpack.c.b16 %v1748, %v1744
    %v2533 = vpack.c.b16 %v1749, %v1745
    %v2534 = vpack.c.b16 %v1750, %v1746
    %v2535 = vpack.c.b16 %v1751, %v1747
    %v2536 = vpack.c.b16 %v1756, %v1752
    %v2537 = vpack.c.b16 %v1757, %v1753
    %v2538 = vpack.c.b16 %v1758, %v1754
    %v2539 = vpack.c.b16 %v1759, %v1755
    %v2540 = vpack.c.b16 %v1764, %v1760
    %v2541 = vpack.c.b16 %v1765, %v1761
    %v2542 = vpack.c.b16 %v1766, %v1762
    %v2543 = vpack.c.b16 %v1767, %v1763
    %v2544 = vpack.c.b16 %v1772, %v1768
    %v2545 = vpack.c.b16 %v1773, %v1769
    %v2546 = vpack.c.b16 %v1774, %v1770
    %v2547 = vpack.c.b16 %v1775, %v1771
    %v2548 = vpack.c.b16 %v1780, %v1776
    %v2549 = vpack.c.b16 %v1781, %v1777
    %v2550 = vpack.c.b16 %v1782, %v1778
    %v2551 = vpack.c.b16 %v1783, %v1779
    %v2552 = vpack.c.b16 %v1788, %v1784
    %v2553 = vpack.c.b16 %v1789, %v1785
    %v2554 = vpack.c.b16 %v1790, %v1786
    %v2555 = vpack.c.b16 %v1791, %v1787
    %v2556 = vpack.c.b16 %v1796, %v1792
    %v2557 = vpack.c.b16 %v1797, %v1793
    %v2558 = vpack.c.b16 %v1798, %v1794
    %v2559 = vpack.c.b16 %v1799, %v1795
    %v2560 = vpack.c.b16 %v1804, %v1800
    %v2561 = vpack.c.b16 %v1805, %v1801
    %v2562 = vpack.c.b16 %v1806, %v1802
    %v2563 = vpack.c.b16 %v1807, %v1803
    %v2564 = vpack.c.b16 %v1812, %v1808
    %v2565 = vpack.c.b16 %v1813, %v1809
    %v2566 = vpack.c.b16 %v1814, %v1810
    %v2567 = vpack.c.b16 %v1815, %v1811
    %v2568 = vpack.c.b16 %v1820, %v1816
    %v2569 = vpack.c.b16 %v1821, %v1817
    %v2570 = vpack.c.b16 %v1822, %v1818
    %v2571 = vpack.c.b16 %v1823, %v1819
    %v2572 = vpack.c.b16 %v1828, %v1824
    %v2573 = vpack.c.b16 %v1829, %v1825
    %v2574 = vpack.c.b16 %v1830, %v1826
    %v2575 = vpack.c.b16 %v1831, %v1827
    %v2576 = vpack.c.b16 %v1836, %v1832
    %v2577 = vpack.c.b16 %v1837, %v1833
    %v2578 = vpack.c.b16 %v1838, %v1834
    %v2579 = vpack.c.b16 %v1839, %v1835
    %v2580 = vpack.c.b16 %v1844, %v1840
    %v2581 = vpack.c.b16 %v1845, %v1841
    %v2582 = vpack.c.b16 %v1846, %v1842
    %v2583 = vpack.c.b16 %v1847, %v1843
    %v2584 = vpack.c.b16 %v1852, %v1848
    %v2585 = vpack.c.b16 %v1853, %v1849
    %v2586 = vpack.c.b16 %v1854, %v1850
    %v2587 = vpack.c.b16 %v1855, %v1851
    %v2588 = vpack.c.b16 %v1860, %v1856
    %v2589 = vpack.c.b16 %v1861, %v1857
    %v2590 = vpack.c.b16 %v1862, %v1858
    %v2591 = vpack.c.b16 %v1863, %v1859
    %v2592 = vpack.c.b16 %v1868, %v1864
    %v2593 = vpack.c.b16 %v1869, %v1865
    %v2594 = vpack.c.b16 %v1870, %v1866
    %v2595 = vpack.c.b16 %v1871, %v1867
    %v2596 = vpack.c.b16 %v1876, %v1872
    %v2597 = vpack.c.b16 %v1877, %v1873
    %v2598 = vpack.c.b16 %v1878, %v1874
    %v2599 = vpack.c.b16 %v1879, %v1875
    %v2600 = vpack.c.b16 %v1884, %v1880
    %v2601 = vpack.c.b16 %v1885, %v1881
    %v2602 = vpack.c.b16 %v1886, %v1882
    %v2603 = vpack.c.b16 %v1887, %v1883
    %v2604 = vpack.c.b16 %v1892, %v1888
    %v2605 = vpack.c.b16 %v1893, %v1889
    %v2606 = vpack.c.b16 %v1894, %v1890
    %v2607 = vpack.c.b16 %v1895, %v1891
    %v2608 = vpack.c.b16 %v1900, %v1896
    %v2609 = vpack.c.b16 %v1901, %v1897
    %v2610 = vpack.c.b16 %v1902, %v1898
    %v2611 = vpack.c.b16 %v1903, %v1899
    %v2612 = vpack.c.b16 %v1908, %v1904
    %v2613 = vpack.c.b16 %v1909, %v1905
    %v2614 = vpack.c.b16 %v1910, %v1906
    %v2615 = vpack.c.b16 %v1911, %v1907
    %v2616 = vpack.c.b16 %v1916, %v1912
    %v2617 = vpack.c.b16 %v1917, %v1913
    %v2618 = vpack.c.b16 %v1918, %v1914
    %v2619 = vpack.c.b16 %v1919, %v1915
    %v2620 = vpack.c.b16 %v1924, %v1920
    %v2621 = vpack.c.b16 %v1925, %v1921
    %v2622 = vpack.c.b16 %v1926, %v1922
    %v2623 = vpack.c.b16 %v1927, %v1923
    %v2624 = vpack.c.b16 %v1932, %v1928
    %v2625 = vpack.c.b16 %v1933, %v1929
    %v2626 = vpack.c.b16 %v1934, %v1930
    %v2627 = vpack.c.b16 %v1935, %v1931
    %v2628 = vpack.c.b16 %v1940, %v1936
    %v2629 = vpack.c.b16 %v1941, %v1937
    %v2630 = vpack.c.b16 %v1942, %v1938
    %v2631 = vpack.c.b16 %v1943, %v1939
    %v2632 = vpack.c.b16 %v1948, %v1944
    %v2633 = vpack.c.b16 %v1949, %v1945
    %v2634 = vpack.c.b16 %v1950, %v1946
    %v2635 = vpack.c.b16 %v1951, %v1947
    %v2636 = vpack.c.b16 %v1956, %v1952
    %v2637 = vpack.c.b16 %v1957, %v1953
    %v2638 = vpack.c.b16 %v1958, %v1954
    %v2639 = vpack.c.b16 %v1959, %v1955
    %v2640 = vpack.c.b16 %v1964, %v1960
    %v2641 = vpack.c.b16 %v1965, %v1961
    %v2642 = vpack.c.b16 %v1966, %v1962
    %v2643 = vpack.c.b16 %v1967, %v1963
    %v2644 = vpack.c.b16 %v1972, %v1968
    %v2645 = vpack.c.b16 %v1973, %v1969
    %v2646 = vpack.c.b16 %v1974, %v1970
    %v2647 = vpack.c.b16 %v1975, %v1971
    %v2648 = vpack.c.b16 %v1980, %v1976
    %v2649 = vpack.c.b16 %v1981, %v1977
    %v2650 = vpack.c.b16 %v1982, %v1978
    %v2651 = vpack.c.b16 %v1983, %v1979
    %v2652 = vpack.c.b16 %v1988, %v1984
    %v2653 = vpack.c.b16 %v1989, %v1985
    %v2654 = vpack.c.b16 %v1990, %v1986
    %v2655 = vpack.c.b16 %v1991, %v1987
    %v2656 = vpack.c.b16 %v1996, %v1992
    %v2657 = vpack.c.b16 %v1997, %v1993
    %v2658 = vpack.c.b16 %v1998, %v1994
    %v2659 = vpack.c.b16 %v1999, %v1995
    %v2660 = vpack.c.b16 %v2004, %v2000
    %v2661 = vpack.c.b16 %v2005, %v2001
    %v2662 = vpack.c.b16 %v2006, %v2002
    %v2663 = vpack.c.b16 %v2007, %v2003
    %v2664 = vpack.c.b16 %v2012, %v2008
    %v2665 = vpack.c.b16 %v2013, %v2009
    %v2666 = vpack.c.b16 %v2014, %v2010
    %v2667 = vpack.c.b16 %v2015, %v2011
    %v2668 = vpack.c.b16 %v2020, %v2016
    %v2669 = vpack.c.b16 %v2021, %v2017
    %v2670 = vpack.c.b16 %v2022, %v2018
    %v2671 = vpack.c.b16 %v2023, %v2019
    %v2672 = vpack.c.b16 %v2028, %v2024
    %v2673 = vpack.c.b16 %v2029, %v2025
    %v2674 = vpack.c.b16 %v2030, %v2026
    %v2675 = vpack.c.b16 %v2031, %v2027
    %v2676 = vpack.c.b16 %v2036, %v2032
    %v2677 = vpack.c.b16 %v2037, %v2033
    %v2678 = vpack.c.b16 %v2038, %v2034
    %v2679 = vpack.c.b16 %v2039, %v2035
    %v2680 = vpack.c.b16 %v2044, %v2040
    %v2681 = vpack.c.b16 %v2045, %v2041
    %v2682 = vpack.c.b16 %v2046, %v2042
    %v2683 = vpack.c.b16 %v2047, %v2043
    %v2684 = vpack.c.b16 %v2052, %v2048
    %v2685 = vpack.c.b16 %v2053, %v2049
    %v2686 = vpack.c.b16 %v2054, %v2050
    %v2687 = vpack.c.b16 %v2055, %v2051
    %v2688 = vpack.c.b16 %v2060, %v2056
    %v2689 = vpack.c.b16 %v2061, %v2057
    %v2690 = vpack.c.b16 %v2062, %v2058
    %v2691 = vpack.c.b16 %v2063, %v2059
    %v2692 = vpack.c.b16 %v2068, %v2064
    %v2693 = vpack.c.b16 %v2069, %v2065
    %v2694 = vpack.c.b16 %v2070, %v2066
    %v2695 = vpack.c.b16 %v2071, %v2067
    %v2696 = vpack.c.b16 %v2076, %v2072
    %v2697 = vpack.c.b16 %v2077, %v2073
    %v2698 = vpack.c.b16 %v2078, %v2074
    %v2699 = vpack.c.b16 %v2079, %v2075
    %v2700 = vpack.c.b16 %v2084, %v2080
    %v2701 = vpack.c.b16 %v2085, %v2081
    %v2702 = vpack.c.b16 %v2086, %v2082
    %v2703 = vpack.c.b16 %v2087, %v2083
    %v2704 = vpack.c.b16 %v2092, %v2088
    %v2705 = vpack.c.b16 %v2093, %v2089
    %v2706 = vpack.c.b16 %v2094, %v2090
    %v2707 = vpack.c.b16 %v2095, %v2091
    %v2708 = vpack.c.b16 %v2100, %v2096
    %v2709 = vpack.c.b16 %v2101, %v2097
    %v2710 = vpack.c.b16 %v2102, %v2098
    %v2711 = vpack.c.b16 %v2103, %v2099
    %v2712 = vpack.c.b16 %v2108, %v2104
    %v2713 = vpack.c.b16 %v2109, %v2105
    %v2714 = vpack.c.b16 %v2110, %v2106
    %v2715 = vpack.c.b16 %v2111, %v2107
    %v2716 = vpack.c.b16 %v2116, %v2112
    %v2717 = vpack.c.b16 %v2117, %v2113
    %v2718 = vpack.c.b16 %v2118, %v2114
    %v2719 = vpack.c.b16 %v2119, %v2115
    %v2720 = vpack.c.b16 %v2124, %v2120
    %v2721 = vpack.c.b16 %v2125, %v2121
    %v2722 = vpack.c.b16 %v2126, %v2122
    %v2723 = vpack.c.b16 %v2127, %v2123
    %v2724 = vpack.c.b16 %v2132, %v2128
    %v2725 = vpack.c.b16 %v2133, %v2129
    %v2726 = vpack.c.b16 %v2134, %v2130
    %v2727 = vpack.c.b16 %v2135, %v2131
    %v2728 = vpack.c.b16 %v2140, %v2136
    %v2729 = vpack.c.b16 %v2141, %v2137
    %v2730 = vpack.c.b16 %v2142, %v2138
    %v2731 = vpack.c.b16 %v2143, %v2139
    %v2732 = vpack.c.b16 %v2148, %v2144
    %v2733 = vpack.c.b16 %v2149, %v2145
    %v2734 = vpack.c.b16 %v2150, %v2146
    %v2735 = vpack.c.b16 %v2151, %v2147
    %v2736 = vpack.c.b16 %v2156, %v2152
    %v2737 = vpack.c.b16 %v2157, %v2153
    %v2738 = vpack.c.b16 %v2158, %v2154
    %v2739 = vpack.c.b16 %v2159, %v2155
    %v2740 = vpack.c.b16 %v2164, %v2160
    %v2741 = vpack.c.b16 %v2165, %v2161
    %v2742 = vpack.c.b16 %v2166, %v2162
    %v2743 = vpack.c.b16 %v2167, %v2163
    %v2744 = vpack.c.b16 %v2172, %v2168
    %v2745 = vpack.c.b16 %v2173, %v2169
    %v2746 = vpack.c.b16 %v2174, %v2170
    %v2747 = vpack.c.b16 %v2175, %v2171
    %v2748 = vpack.c.b16 %v2180, %v2176
    %v2749 = vpack.c.b16 %v2181, %v2177
    %v2750 = vpack.c.b16 %v2182, %v2178
    %v2751 = vpack.c.b16 %v2183, %v2179
    %v2752 = vpack.c.b16 %v2188, %v2184
    %v2753 = vpack.c.b16 %v2189, %v2185
    %v2754 = vpack.c.b16 %v2190, %v2186
    %v2755 = vpack.c.b16 %v2191, %v2187
    %v2756 = vpack.c.b16 %v2196, %v2192
    %v2757 = vpack.c.b16 %v2197, %v2193
    %v2758 = vpack.c.b16 %v2198, %v2194
    %v2759 = vpack.c.b16 %v2199, %v2195
    %v2760 = vpack.c.b16 %v2204, %v2200
    %v2761 = vpack.c.b16 %v2205, %v2201
    %v2762 = vpack.c.b16 %v2206, %v2202
    %v2763 = vpack.c.b16 %v2207, %v2203
    %v2764 = vpack.c.b16 %v2212, %v2208
    %v2765 = vpack.c.b16 %v2213, %v2209
    %v2766 = vpack.c.b16 %v2214, %v2210
    %v2767 = vpack.c.b16 %v2215, %v2211
    %v2768 = vpack.c.b16 %v2220, %v2216
    %v2769 = vpack.c.b16 %v2221, %v2217
    %v2770 = vpack.c.b16 %v2222, %v2218
    %v2771 = vpack.c.b16 %v2223, %v2219
    %v2772 = vpack.c.b16 %v2228, %v2224
    %v2773 = vpack.c.b16 %v2229, %v2225
    %v2774 = vpack.c.b16 %v2230, %v2226
    %v2775 = vpack.c.b16 %v2231, %v2227
    %v2776 = vpack.c.b16 %v2236, %v2232
    %v2777 = vpack.c.b16 %v2237, %v2233
    %v2778 = vpack.c.b16 %v2238, %v2234
    %v2779 = vpack.c.b16 %v2239, %v2235
    %v2780 = vpack.c.b16 %v2244, %v2240
    %v2781 = vpack.c.b16 %v2245, %v2241
    %v2782 = vpack.c.b16 %v2246, %v2242
    %v2783 = vpack.c.b16 %v2247, %v2243
    %v2784 = vpack.c.b16 %v2252, %v2248
    %v2785 = vpack.c.b16 %v2253, %v2249
    %v2786 = vpack.c.b16 %v2254, %v2250
    %v2787 = vpack.c.b16 %v2255, %v2251
    %v2788 = vpack.c.b16 %v2260, %v2256
    %v2789 = vpack.c.b16 %v2261, %v2257
    %v2790 = vpack.c.b16 %v2262, %v2258
    %v2791 = vpack.c.b16 %v2263, %v2259
    %v2792 = vpack.c.b16 %v2268, %v2264
    %v2793 = vpack.c.b16 %v2269, %v2265
    %v2794 = vpack.c.b16 %v2270, %v2266
    %v2795 = vpack.c.b16 %v2271, %v2267
    %v2796 = vpack.c.b16 %v2276, %v2272
    %v2797 = vpack.c.b16 %v2277, %v2273
    %v2798 = vpack.c.b16 %v2278, %v2274
    %v2799 = vpack.c.b16 %v2279, %v2275
    %v2800 = vpack.c.b16 %v2284, %v2280
    %v2801 = vpack.c.b16 %v2285, %v2281
    %v2802 = vpack.c.b16 %v2286, %v2282
    %v2803 = vpack.c.b16 %v2287, %v2283
    %v2804 = vpack.c.b16 %v2292, %v2288
    %v2805 = vpack.c.b16 %v2293, %v2289
    %v2806 = vpack.c.b16 %v2294, %v2290
    %v2807 = vpack.c.b16 %v2295, %v2291
    %3320 = vmatprep.subr.bf16.mxu0 %v2325
    %3321 = vmatpush1.bf16.msra.mxu0 %v2324
    %3322 = vmatprep.subr.bf16.mxu0 %v2321
    %3323 = vmatpush1.bf16.msra.mxu0 %v2320
    %3324 = vmatprep.subr.bf16.mxu0 %v2317
    %3325 = vmatpush1.bf16.msra.mxu0 %v2316
    %3326 = vmatprep.subr.bf16.mxu0 %v2313
    %3327 = vmatpush1.bf16.msra.mxu0 %v2312
    %3328 = vmatprep.subr.bf16.mxu0 %v2309
    %3329 = vmatpush1.bf16.msra.mxu0 %v2308
    %3330 = vmatprep.subr.bf16.mxu0 %v2305
    %3331 = vmatpush1.bf16.msra.mxu0 %v2304
    %3332 = vmatprep.subr.bf16.mxu0 %v2301
    %3333 = vmatpush1.bf16.msra.mxu0 %v2300
    %3334 = vmatprep.subr.bf16.mxu0 %v2297
    %3335 = vmatpush1.bf16.msra.mxu0 %v2296
    %3336 = vmatprep.subr.bf16.mxu0 %v2357
    %3337 = vmatpush2.bf16.msra.mxu0 %v2356
    %3338 = vmatprep.subr.bf16.mxu0 %v2353
    %3339 = vmatpush2.bf16.msra.mxu0 %v2352
    %3340 = vmatprep.subr.bf16.mxu0 %v2349
    %3341 = vmatpush2.bf16.msra.mxu0 %v2348
    %3342 = vmatprep.subr.bf16.mxu0 %v2345
    %3343 = vmatpush2.bf16.msra.mxu0 %v2344
    %3344 = vmatprep.subr.bf16.mxu0 %v2341
    %3345 = vmatpush2.bf16.msra.mxu0 %v2340
    %3346 = vmatprep.subr.bf16.mxu0 %v2337
    %3347 = vmatpush2.bf16.msra.mxu0 %v2336
    %3348 = vmatprep.subr.bf16.mxu0 %v2333
    %3349 = vmatpush2.bf16.msra.mxu0 %v2332
    %3350 = vmatprep.subr.bf16.mxu0 %v2329
    %3351 = vmatpush2.bf16.msra.mxu0 %v2328
    %3352 = vmatprep.mubr.bf16.mxu0 %v211
    %3353 = vmatmul.mubr.bf16.gmra.mxu0 %v210
    %v3354 = vpop.f32.mrf.mxu0
    %v3355 = vadd.f32 %v743, %v3354
    %v3356 = vpop.f32.mrf.mxu0
    %v3357 = vadd.f32 %v747, %v3356
    %v3358 = vpop.f32.mrf.mxu0
    %v3359 = vadd.f32 %v743, %v3358
    %v3360 = vpop.f32.mrf.mxu0
    %v3361 = vadd.f32 %v747, %v3360
    %3362 = vdwg.mxu0
    %3363 = vmatprep.subr.bf16.mxu0 %v2389
    %3364 = vmatpush1.bf16.msra.mxu0 %v2388
    %3365 = vmatprep.subr.bf16.mxu0 %v2385
    %3366 = vmatpush1.bf16.msra.mxu0 %v2384
    %3367 = vmatprep.subr.bf16.mxu0 %v2381
    %3368 = vmatpush1.bf16.msra.mxu0 %v2380
    %3369 = vmatprep.subr.bf16.mxu0 %v2377
    %3370 = vmatpush1.bf16.msra.mxu0 %v2376
    %3371 = vmatprep.subr.bf16.mxu0 %v2373
    %3372 = vmatpush1.bf16.msra.mxu0 %v2372
    %3373 = vmatprep.subr.bf16.mxu0 %v2369
    %3374 = vmatpush1.bf16.msra.mxu0 %v2368
    %3375 = vmatprep.subr.bf16.mxu0 %v2365
    %3376 = vmatpush1.bf16.msra.mxu0 %v2364
    %3377 = vmatprep.subr.bf16.mxu0 %v2361
    %3378 = vmatpush1.bf16.msra.mxu0 %v2360
    %3379 = vmatprep.subr.bf16.mxu0 %v2421
    %3380 = vmatpush2.bf16.msra.mxu0 %v2420
    %3381 = vmatprep.subr.bf16.mxu0 %v2417
    %3382 = vmatpush2.bf16.msra.mxu0 %v2416
    %3383 = vmatprep.subr.bf16.mxu0 %v2413
    %3384 = vmatpush2.bf16.msra.mxu0 %v2412
    %3385 = vmatprep.subr.bf16.mxu0 %v2409
    %3386 = vmatpush2.bf16.msra.mxu0 %v2408
    %3387 = vmatprep.subr.bf16.mxu0 %v2405
    %3388 = vmatpush2.bf16.msra.mxu0 %v2404
    %3389 = vmatprep.subr.bf16.mxu0 %v2401
    %3390 = vmatpush2.bf16.msra.mxu0 %v2400
    %3391 = vmatprep.subr.bf16.mxu0 %v2397
    %3392 = vmatpush2.bf16.msra.mxu0 %v2396
    %3393 = vmatprep.subr.bf16.mxu0 %v2393
    %3394 = vmatpush2.bf16.msra.mxu0 %v2392
    %3395 = vmatprep.mubr.bf16.mxu0 %v213
    %3396 = vmatmul.mubr.bf16.gmra.mxu0 %v212
    %v3397 = vpop.f32.mrf.mxu0
    %v3398 = vadd.f32 %v3355, %v3397
    %v3399 = vpop.f32.mrf.mxu0
    %v3400 = vadd.f32 %v3357, %v3399
    %v3401 = vpop.f32.mrf.mxu0
    %v3402 = vadd.f32 %v3359, %v3401
    %v3403 = vpop.f32.mrf.mxu0
    %v3404 = vadd.f32 %v3361, %v3403
    %3405 = vdwg.mxu0
    %3406 = vmatprep.subr.bf16.mxu0 %v2453
    %3407 = vmatpush1.bf16.msra.mxu0 %v2452
    %3408 = vmatprep.subr.bf16.mxu0 %v2449
    %3409 = vmatpush1.bf16.msra.mxu0 %v2448
    %3410 = vmatprep.subr.bf16.mxu0 %v2445
    %3411 = vmatpush1.bf16.msra.mxu0 %v2444
    %3412 = vmatprep.subr.bf16.mxu0 %v2441
    %3413 = vmatpush1.bf16.msra.mxu0 %v2440
    %3414 = vmatprep.subr.bf16.mxu0 %v2437
    %3415 = vmatpush1.bf16.msra.mxu0 %v2436
    %3416 = vmatprep.subr.bf16.mxu0 %v2433
    %3417 = vmatpush1.bf16.msra.mxu0 %v2432
    %3418 = vmatprep.subr.bf16.mxu0 %v2429
    %3419 = vmatpush1.bf16.msra.mxu0 %v2428
    %3420 = vmatprep.subr.bf16.mxu0 %v2425
    %3421 = vmatpush1.bf16.msra.mxu0 %v2424
    %3422 = vmatprep.subr.bf16.mxu0 %v2485
    %3423 = vmatpush2.bf16.msra.mxu0 %v2484
    %3424 = vmatprep.subr.bf16.mxu0 %v2481
    %3425 = vmatpush2.bf16.msra.mxu0 %v2480
    %3426 = vmatprep.subr.bf16.mxu0 %v2477
    %3427 = vmatpush2.bf16.msra.mxu0 %v2476
    %3428 = vmatprep.subr.bf16.mxu0 %v2473
    %3429 = vmatpush2.bf16.msra.mxu0 %v2472
    %3430 = vmatprep.subr.bf16.mxu0 %v2469
    %3431 = vmatpush2.bf16.msra.mxu0 %v2468
    %3432 = vmatprep.subr.bf16.mxu0 %v2465
    %3433 = vmatpush2.bf16.msra.mxu0 %v2464
    %3434 = vmatprep.subr.bf16.mxu0 %v2461
    %3435 = vmatpush2.bf16.msra.mxu0 %v2460
    %3436 = vmatprep.subr.bf16.mxu0 %v2457
    %3437 = vmatpush2.bf16.msra.mxu0 %v2456
    %3438 = vmatprep.mubr.bf16.mxu0 %v215
    %3439 = vmatmul.mubr.bf16.gmra.mxu0 %v214
    %v3440 = vpop.f32.mrf.mxu0
    %v3441 = vadd.f32 %v3398, %v3440
    %v3442 = vpop.f32.mrf.mxu0
    %v3443 = vadd.f32 %v3400, %v3442
    %v3444 = vpop.f32.mrf.mxu0
    %v3445 = vadd.f32 %v3402, %v3444
    %v3446 = vpop.f32.mrf.mxu0
    %v3447 = vadd.f32 %v3404, %v3446
    %3448 = vdwg.mxu0
    %3449 = vmatprep.subr.bf16.mxu0 %v2517
    %3450 = vmatpush1.bf16.msra.mxu0 %v2516
    %3451 = vmatprep.subr.bf16.mxu0 %v2513
    %3452 = vmatpush1.bf16.msra.mxu0 %v2512
    %3453 = vmatprep.subr.bf16.mxu0 %v2509
    %3454 = vmatpush1.bf16.msra.mxu0 %v2508
    %3455 = vmatprep.subr.bf16.mxu0 %v2505
    %3456 = vmatpush1.bf16.msra.mxu0 %v2504
    %3457 = vmatprep.subr.bf16.mxu0 %v2501
    %3458 = vmatpush1.bf16.msra.mxu0 %v2500
    %3459 = vmatprep.subr.bf16.mxu0 %v2497
    %3460 = vmatpush1.bf16.msra.mxu0 %v2496
    %3461 = vmatprep.subr.bf16.mxu0 %v2493
    %3462 = vmatpush1.bf16.msra.mxu0 %v2492
    %3463 = vmatprep.subr.bf16.mxu0 %v2489
    %3464 = vmatpush1.bf16.msra.mxu0 %v2488
    %3465 = vmatprep.subr.bf16.mxu0 %v2549
    %3466 = vmatpush2.bf16.msra.mxu0 %v2548
    %3467 = vmatprep.subr.bf16.mxu0 %v2545
    %3468 = vmatpush2.bf16.msra.mxu0 %v2544
    %3469 = vmatprep.subr.bf16.mxu0 %v2541
    %3470 = vmatpush2.bf16.msra.mxu0 %v2540
    %3471 = vmatprep.subr.bf16.mxu0 %v2537
    %3472 = vmatpush2.bf16.msra.mxu0 %v2536
    %3473 = vmatprep.subr.bf16.mxu0 %v2533
    %3474 = vmatpush2.bf16.msra.mxu0 %v2532
    %3475 = vmatprep.subr.bf16.mxu0 %v2529
    %3476 = vmatpush2.bf16.msra.mxu0 %v2528
    %3477 = vmatprep.subr.bf16.mxu0 %v2525
    %3478 = vmatpush2.bf16.msra.mxu0 %v2524
    %3479 = vmatprep.subr.bf16.mxu0 %v2521
    %3480 = vmatpush2.bf16.msra.mxu0 %v2520
    %3481 = vmatprep.mubr.bf16.mxu0 %v217
    %3482 = vmatmul.mubr.bf16.gmra.mxu0 %v216
    %v3483 = vpop.f32.mrf.mxu0
    %v3484 = vadd.f32 %v3441, %v3483
    %v3485 = vpop.f32.mrf.mxu0
    %v3486 = vadd.f32 %v3443, %v3485
    %v3487 = vpop.f32.mrf.mxu0
    %v3488 = vadd.f32 %v3445, %v3487
    %v3489 = vpop.f32.mrf.mxu0
    %v3490 = vadd.f32 %v3447, %v3489
    %3491 = vdwg.mxu0
    %3492 = vmatprep.subr.bf16.mxu0 %v2581
    %3493 = vmatpush1.bf16.msra.mxu0 %v2580
    %3494 = vmatprep.subr.bf16.mxu0 %v2577
    %3495 = vmatpush1.bf16.msra.mxu0 %v2576
    %3496 = vmatprep.subr.bf16.mxu0 %v2573
    %3497 = vmatpush1.bf16.msra.mxu0 %v2572
    %3498 = vmatprep.subr.bf16.mxu0 %v2569
    %3499 = vmatpush1.bf16.msra.mxu0 %v2568
    %3500 = vmatprep.subr.bf16.mxu0 %v2565
    %3501 = vmatpush1.bf16.msra.mxu0 %v2564
    %3502 = vmatprep.subr.bf16.mxu0 %v2561
    %3503 = vmatpush1.bf16.msra.mxu0 %v2560
    %3504 = vmatprep.subr.bf16.mxu0 %v2557
    %3505 = vmatpush1.bf16.msra.mxu0 %v2556
    %3506 = vmatprep.subr.bf16.mxu0 %v2553
    %3507 = vmatpush1.bf16.msra.mxu0 %v2552
    %3508 = vmatprep.subr.bf16.mxu0 %v2613
    %3509 = vmatpush2.bf16.msra.mxu0 %v2612
    %3510 = vmatprep.subr.bf16.mxu0 %v2609
    %3511 = vmatpush2.bf16.msra.mxu0 %v2608
    %3512 = vmatprep.subr.bf16.mxu0 %v2605
    %3513 = vmatpush2.bf16.msra.mxu0 %v2604
    %3514 = vmatprep.subr.bf16.mxu0 %v2601
    %3515 = vmatpush2.bf16.msra.mxu0 %v2600
    %3516 = vmatprep.subr.bf16.mxu0 %v2597
    %3517 = vmatpush2.bf16.msra.mxu0 %v2596
    %3518 = vmatprep.subr.bf16.mxu0 %v2593
    %3519 = vmatpush2.bf16.msra.mxu0 %v2592
    %3520 = vmatprep.subr.bf16.mxu0 %v2589
    %3521 = vmatpush2.bf16.msra.mxu0 %v2588
    %3522 = vmatprep.subr.bf16.mxu0 %v2585
    %3523 = vmatpush2.bf16.msra.mxu0 %v2584
    %3524 = vmatprep.mubr.bf16.mxu0 %v219
    %3525 = vmatmul.mubr.bf16.gmra.mxu0 %v218
    %v3526 = vpop.f32.mrf.mxu0
    %v3527 = vadd.f32 %v3484, %v3526
    %v3528 = vpop.f32.mrf.mxu0
    %v3529 = vadd.f32 %v3486, %v3528
    %v3530 = vpop.f32.mrf.mxu0
    %v3531 = vadd.f32 %v3488, %v3530
    %v3532 = vpop.f32.mrf.mxu0
    %v3533 = vadd.f32 %v3490, %v3532
    %3534 = vdwg.mxu0
    %3535 = vmatprep.subr.bf16.mxu0 %v2645
    %3536 = vmatpush1.bf16.msra.mxu0 %v2644
    %3537 = vmatprep.subr.bf16.mxu0 %v2641
    %3538 = vmatpush1.bf16.msra.mxu0 %v2640
    %3539 = vmatprep.subr.bf16.mxu0 %v2637
    %3540 = vmatpush1.bf16.msra.mxu0 %v2636
    %3541 = vmatprep.subr.bf16.mxu0 %v2633
    %3542 = vmatpush1.bf16.msra.mxu0 %v2632
    %3543 = vmatprep.subr.bf16.mxu0 %v2629
    %3544 = vmatpush1.bf16.msra.mxu0 %v2628
    %3545 = vmatprep.subr.bf16.mxu0 %v2625
    %3546 = vmatpush1.bf16.msra.mxu0 %v2624
    %3547 = vmatprep.subr.bf16.mxu0 %v2621
    %3548 = vmatpush1.bf16.msra.mxu0 %v2620
    %3549 = vmatprep.subr.bf16.mxu0 %v2617
    %3550 = vmatpush1.bf16.msra.mxu0 %v2616
    %3551 = vmatprep.subr.bf16.mxu0 %v2677
    %3552 = vmatpush2.bf16.msra.mxu0 %v2676
    %3553 = vmatprep.subr.bf16.mxu0 %v2673
    %3554 = vmatpush2.bf16.msra.mxu0 %v2672
    %3555 = vmatprep.subr.bf16.mxu0 %v2669
    %3556 = vmatpush2.bf16.msra.mxu0 %v2668
    %3557 = vmatprep.subr.bf16.mxu0 %v2665
    %3558 = vmatpush2.bf16.msra.mxu0 %v2664
    %3559 = vmatprep.subr.bf16.mxu0 %v2661
    %3560 = vmatpush2.bf16.msra.mxu0 %v2660
    %3561 = vmatprep.subr.bf16.mxu0 %v2657
    %3562 = vmatpush2.bf16.msra.mxu0 %v2656
    %3563 = vmatprep.subr.bf16.mxu0 %v2653
    %3564 = vmatpush2.bf16.msra.mxu0 %v2652
    %3565 = vmatprep.subr.bf16.mxu0 %v2649
    %3566 = vmatpush2.bf16.msra.mxu0 %v2648
    %3567 = vmatprep.mubr.bf16.mxu0 %v221
    %3568 = vmatmul.mubr.bf16.gmra.mxu0 %v220
    %v3569 = vpop.f32.mrf.mxu0
    %v3570 = vadd.f32 %v3527, %v3569
    %v3571 = vpop.f32.mrf.mxu0
    %v3572 = vadd.f32 %v3529, %v3571
    %v3573 = vpop.f32.mrf.mxu0
    %v3574 = vadd.f32 %v3531, %v3573
    %v3575 = vpop.f32.mrf.mxu0
    %v3576 = vadd.f32 %v3533, %v3575
    %3577 = vdwg.mxu0
    %3578 = vmatprep.subr.bf16.mxu0 %v2709
    %3579 = vmatpush1.bf16.msra.mxu0 %v2708
    %3580 = vmatprep.subr.bf16.mxu0 %v2705
    %3581 = vmatpush1.bf16.msra.mxu0 %v2704
    %3582 = vmatprep.subr.bf16.mxu0 %v2701
    %3583 = vmatpush1.bf16.msra.mxu0 %v2700
    %3584 = vmatprep.subr.bf16.mxu0 %v2697
    %3585 = vmatpush1.bf16.msra.mxu0 %v2696
    %3586 = vmatprep.subr.bf16.mxu0 %v2693
    %3587 = vmatpush1.bf16.msra.mxu0 %v2692
    %3588 = vmatprep.subr.bf16.mxu0 %v2689
    %3589 = vmatpush1.bf16.msra.mxu0 %v2688
    %3590 = vmatprep.subr.bf16.mxu0 %v2685
    %3591 = vmatpush1.bf16.msra.mxu0 %v2684
    %3592 = vmatprep.subr.bf16.mxu0 %v2681
    %3593 = vmatpush1.bf16.msra.mxu0 %v2680
    %3594 = vmatprep.subr.bf16.mxu0 %v2741
    %3595 = vmatpush2.bf16.msra.mxu0 %v2740
    %3596 = vmatprep.subr.bf16.mxu0 %v2737
    %3597 = vmatpush2.bf16.msra.mxu0 %v2736
    %3598 = vmatprep.subr.bf16.mxu0 %v2733
    %3599 = vmatpush2.bf16.msra.mxu0 %v2732
    %3600 = vmatprep.subr.bf16.mxu0 %v2729
    %3601 = vmatpush2.bf16.msra.mxu0 %v2728
    %3602 = vmatprep.subr.bf16.mxu0 %v2725
    %3603 = vmatpush2.bf16.msra.mxu0 %v2724
    %3604 = vmatprep.subr.bf16.mxu0 %v2721
    %3605 = vmatpush2.bf16.msra.mxu0 %v2720
    %3606 = vmatprep.subr.bf16.mxu0 %v2717
    %3607 = vmatpush2.bf16.msra.mxu0 %v2716
    %3608 = vmatprep.subr.bf16.mxu0 %v2713
    %3609 = vmatpush2.bf16.msra.mxu0 %v2712
    %3610 = vmatprep.mubr.bf16.mxu0 %v223
    %3611 = vmatmul.mubr.bf16.gmra.mxu0 %v222
    %v3612 = vpop.f32.mrf.mxu0
    %v3613 = vadd.f32 %v3570, %v3612
    %v3614 = vpop.f32.mrf.mxu0
    %v3615 = vadd.f32 %v3572, %v3614
    %v3616 = vpop.f32.mrf.mxu0
    %v3617 = vadd.f32 %v3574, %v3616
    %v3618 = vpop.f32.mrf.mxu0
    %v3619 = vadd.f32 %v3576, %v3618
    %3620 = vdwg.mxu0
    %3621 = vmatprep.subr.bf16.mxu0 %v2773
    %3622 = vmatpush1.bf16.msra.mxu0 %v2772
    %3623 = vmatprep.subr.bf16.mxu0 %v2769
    %3624 = vmatpush1.bf16.msra.mxu0 %v2768
    %3625 = vmatprep.subr.bf16.mxu0 %v2765
    %3626 = vmatpush1.bf16.msra.mxu0 %v2764
    %3627 = vmatprep.subr.bf16.mxu0 %v2761
    %3628 = vmatpush1.bf16.msra.mxu0 %v2760
    %3629 = vmatprep.subr.bf16.mxu0 %v2757
    %3630 = vmatpush1.bf16.msra.mxu0 %v2756
    %3631 = vmatprep.subr.bf16.mxu0 %v2753
    %3632 = vmatpush1.bf16.msra.mxu0 %v2752
    %3633 = vmatprep.subr.bf16.mxu0 %v2749
    %3634 = vmatpush1.bf16.msra.mxu0 %v2748
    %3635 = vmatprep.subr.bf16.mxu0 %v2745
    %3636 = vmatpush1.bf16.msra.mxu0 %v2744
    %3637 = vmatprep.subr.bf16.mxu0 %v2805
    %3638 = vmatpush2.bf16.msra.mxu0 %v2804
    %3639 = vmatprep.subr.bf16.mxu0 %v2801
    %3640 = vmatpush2.bf16.msra.mxu0 %v2800
    %3641 = vmatprep.subr.bf16.mxu0 %v2797
    %3642 = vmatpush2.bf16.msra.mxu0 %v2796
    %3643 = vmatprep.subr.bf16.mxu0 %v2793
    %3644 = vmatpush2.bf16.msra.mxu0 %v2792
    %3645 = vmatprep.subr.bf16.mxu0 %v2789
    %3646 = vmatpush2.bf16.msra.mxu0 %v2788
    %3647 = vmatprep.subr.bf16.mxu0 %v2785
    %3648 = vmatpush2.bf16.msra.mxu0 %v2784
    %3649 = vmatprep.subr.bf16.mxu0 %v2781
    %3650 = vmatpush2.bf16.msra.mxu0 %v2780
    %3651 = vmatprep.subr.bf16.mxu0 %v2777
    %3652 = vmatpush2.bf16.msra.mxu0 %v2776
    %3653 = vmatprep.mubr.bf16.mxu0 %v225
    %3654 = vmatmul.mubr.bf16.gmra.mxu0 %v224
    %v3655 = vpop.f32.mrf.mxu0
    %v3656 = vadd.f32 %v3613, %v3655
    %v3657 = vpop.f32.mrf.mxu0
    %v3658 = vadd.f32 %v3615, %v3657
    %v3659 = vpop.f32.mrf.mxu0
    %v3660 = vadd.f32 %v3617, %v3659
    %v3661 = vpop.f32.mrf.mxu0
    %v3662 = vadd.f32 %v3619, %v3661
    %3663 = vdwg.mxu0
    %3664 = vmatprep.subr.bf16.mxu0 %v2327
    %3665 = vmatpush1.bf16.msra.mxu0 %v2326
    %3666 = vmatprep.subr.bf16.mxu0 %v2323
    %3667 = vmatpush1.bf16.msra.mxu0 %v2322
    %3668 = vmatprep.subr.bf16.mxu0 %v2319
    %3669 = vmatpush1.bf16.msra.mxu0 %v2318
    %3670 = vmatprep.subr.bf16.mxu0 %v2315
    %3671 = vmatpush1.bf16.msra.mxu0 %v2314
    %3672 = vmatprep.subr.bf16.mxu0 %v2311
    %3673 = vmatpush1.bf16.msra.mxu0 %v2310
    %3674 = vmatprep.subr.bf16.mxu0 %v2307
    %3675 = vmatpush1.bf16.msra.mxu0 %v2306
    %3676 = vmatprep.subr.bf16.mxu0 %v2303
    %3677 = vmatpush1.bf16.msra.mxu0 %v2302
    %3678 = vmatprep.subr.bf16.mxu0 %v2299
    %3679 = vmatpush1.bf16.msra.mxu0 %v2298
    %3680 = vmatprep.subr.bf16.mxu0 %v2359
    %3681 = vmatpush2.bf16.msra.mxu0 %v2358
    %3682 = vmatprep.subr.bf16.mxu0 %v2355
    %3683 = vmatpush2.bf16.msra.mxu0 %v2354
    %3684 = vmatprep.subr.bf16.mxu0 %v2351
    %3685 = vmatpush2.bf16.msra.mxu0 %v2350
    %3686 = vmatprep.subr.bf16.mxu0 %v2347
    %3687 = vmatpush2.bf16.msra.mxu0 %v2346
    %3688 = vmatprep.subr.bf16.mxu0 %v2343
    %3689 = vmatpush2.bf16.msra.mxu0 %v2342
    %3690 = vmatprep.subr.bf16.mxu0 %v2339
    %3691 = vmatpush2.bf16.msra.mxu0 %v2338
    %3692 = vmatprep.subr.bf16.mxu0 %v2335
    %3693 = vmatpush2.bf16.msra.mxu0 %v2334
    %3694 = vmatprep.subr.bf16.mxu0 %v2331
    %3695 = vmatpush2.bf16.msra.mxu0 %v2330
    %3696 = vmatprep.mubr.bf16.mxu0 %v211
    %3697 = vmatmul.mubr.bf16.gmra.mxu0 %v210
    %v3698 = vpop.f32.mrf.mxu0
    %v3699 = vadd.f32 %v751, %v3698
    %v3700 = vpop.f32.mrf.mxu0
    %v3701 = vadd.f32 %v755, %v3700
    %v3702 = vpop.f32.mrf.mxu0
    %v3703 = vadd.f32 %v751, %v3702
    %v3704 = vpop.f32.mrf.mxu0
    %v3705 = vadd.f32 %v755, %v3704
    %3706 = vdwg.mxu0
    %3707 = vmatprep.subr.bf16.mxu0 %v2391
    %3708 = vmatpush1.bf16.msra.mxu0 %v2390
    %3709 = vmatprep.subr.bf16.mxu0 %v2387
    %3710 = vmatpush1.bf16.msra.mxu0 %v2386
    %3711 = vmatprep.subr.bf16.mxu0 %v2383
    %3712 = vmatpush1.bf16.msra.mxu0 %v2382
    %3713 = vmatprep.subr.bf16.mxu0 %v2379
    %3714 = vmatpush1.bf16.msra.mxu0 %v2378
    %3715 = vmatprep.subr.bf16.mxu0 %v2375
    %3716 = vmatpush1.bf16.msra.mxu0 %v2374
    %3717 = vmatprep.subr.bf16.mxu0 %v2371
    %3718 = vmatpush1.bf16.msra.mxu0 %v2370
    %3719 = vmatprep.subr.bf16.mxu0 %v2367
    %3720 = vmatpush1.bf16.msra.mxu0 %v2366
    %3721 = vmatprep.subr.bf16.mxu0 %v2363
    %3722 = vmatpush1.bf16.msra.mxu0 %v2362
    %3723 = vmatprep.subr.bf16.mxu0 %v2423
    %3724 = vmatpush2.bf16.msra.mxu0 %v2422
    %3725 = vmatprep.subr.bf16.mxu0 %v2419
    %3726 = vmatpush2.bf16.msra.mxu0 %v2418
    %3727 = vmatprep.subr.bf16.mxu0 %v2415
    %3728 = vmatpush2.bf16.msra.mxu0 %v2414
    %3729 = vmatprep.subr.bf16.mxu0 %v2411
    %3730 = vmatpush2.bf16.msra.mxu0 %v2410
    %3731 = vmatprep.subr.bf16.mxu0 %v2407
    %3732 = vmatpush2.bf16.msra.mxu0 %v2406
    %3733 = vmatprep.subr.bf16.mxu0 %v2403
    %3734 = vmatpush2.bf16.msra.mxu0 %v2402
    %3735 = vmatprep.subr.bf16.mxu0 %v2399
    %3736 = vmatpush2.bf16.msra.mxu0 %v2398
    %3737 = vmatprep.subr.bf16.mxu0 %v2395
    %3738 = vmatpush2.bf16.msra.mxu0 %v2394
    %3739 = vmatprep.mubr.bf16.mxu0 %v213
    %3740 = vmatmul.mubr.bf16.gmra.mxu0 %v212
    %v3741 = vpop.f32.mrf.mxu0
    %v3742 = vadd.f32 %v3699, %v3741
    %v3743 = vpop.f32.mrf.mxu0
    %v3744 = vadd.f32 %v3701, %v3743
    %v3745 = vpop.f32.mrf.mxu0
    %v3746 = vadd.f32 %v3703, %v3745
    %v3747 = vpop.f32.mrf.mxu0
    %v3748 = vadd.f32 %v3705, %v3747
    %3749 = vdwg.mxu0
    %3750 = vmatprep.subr.bf16.mxu0 %v2455
    %3751 = vmatpush1.bf16.msra.mxu0 %v2454
    %3752 = vmatprep.subr.bf16.mxu0 %v2451
    %3753 = vmatpush1.bf16.msra.mxu0 %v2450
    %3754 = vmatprep.subr.bf16.mxu0 %v2447
    %3755 = vmatpush1.bf16.msra.mxu0 %v2446
    %3756 = vmatprep.subr.bf16.mxu0 %v2443
    %3757 = vmatpush1.bf16.msra.mxu0 %v2442
    %3758 = vmatprep.subr.bf16.mxu0 %v2439
    %3759 = vmatpush1.bf16.msra.mxu0 %v2438
    %3760 = vmatprep.subr.bf16.mxu0 %v2435
    %3761 = vmatpush1.bf16.msra.mxu0 %v2434
    %3762 = vmatprep.subr.bf16.mxu0 %v2431
    %3763 = vmatpush1.bf16.msra.mxu0 %v2430
    %3764 = vmatprep.subr.bf16.mxu0 %v2427
    %3765 = vmatpush1.bf16.msra.mxu0 %v2426
    %3766 = vmatprep.subr.bf16.mxu0 %v2487
    %3767 = vmatpush2.bf16.msra.mxu0 %v2486
    %3768 = vmatprep.subr.bf16.mxu0 %v2483
    %3769 = vmatpush2.bf16.msra.mxu0 %v2482
    %3770 = vmatprep.subr.bf16.mxu0 %v2479
    %3771 = vmatpush2.bf16.msra.mxu0 %v2478
    %3772 = vmatprep.subr.bf16.mxu0 %v2475
    %3773 = vmatpush2.bf16.msra.mxu0 %v2474
    %3774 = vmatprep.subr.bf16.mxu0 %v2471
    %3775 = vmatpush2.bf16.msra.mxu0 %v2470
    %3776 = vmatprep.subr.bf16.mxu0 %v2467
    %3777 = vmatpush2.bf16.msra.mxu0 %v2466
    %3778 = vmatprep.subr.bf16.mxu0 %v2463
    %3779 = vmatpush2.bf16.msra.mxu0 %v2462
    %3780 = vmatprep.subr.bf16.mxu0 %v2459
    %3781 = vmatpush2.bf16.msra.mxu0 %v2458
    %3782 = vmatprep.mubr.bf16.mxu0 %v215
    %3783 = vmatmul.mubr.bf16.gmra.mxu0 %v214
    %v3784 = vpop.f32.mrf.mxu0
    %v3785 = vadd.f32 %v3742, %v3784
    %v3786 = vpop.f32.mrf.mxu0
    %v3787 = vadd.f32 %v3744, %v3786
    %v3788 = vpop.f32.mrf.mxu0
    %v3789 = vadd.f32 %v3746, %v3788
    %v3790 = vpop.f32.mrf.mxu0
    %v3791 = vadd.f32 %v3748, %v3790
    %3792 = vdwg.mxu0
    %3793 = vmatprep.subr.bf16.mxu0 %v2519
    %3794 = vmatpush1.bf16.msra.mxu0 %v2518
    %3795 = vmatprep.subr.bf16.mxu0 %v2515
    %3796 = vmatpush1.bf16.msra.mxu0 %v2514
    %3797 = vmatprep.subr.bf16.mxu0 %v2511
    %3798 = vmatpush1.bf16.msra.mxu0 %v2510
    %3799 = vmatprep.subr.bf16.mxu0 %v2507
    %3800 = vmatpush1.bf16.msra.mxu0 %v2506
    %3801 = vmatprep.subr.bf16.mxu0 %v2503
    %3802 = vmatpush1.bf16.msra.mxu0 %v2502
    %3803 = vmatprep.subr.bf16.mxu0 %v2499
    %3804 = vmatpush1.bf16.msra.mxu0 %v2498
    %3805 = vmatprep.subr.bf16.mxu0 %v2495
    %3806 = vmatpush1.bf16.msra.mxu0 %v2494
    %3807 = vmatprep.subr.bf16.mxu0 %v2491
    %3808 = vmatpush1.bf16.msra.mxu0 %v2490
    %3809 = vmatprep.subr.bf16.mxu0 %v2551
    %3810 = vmatpush2.bf16.msra.mxu0 %v2550
    %3811 = vmatprep.subr.bf16.mxu0 %v2547
    %3812 = vmatpush2.bf16.msra.mxu0 %v2546
    %3813 = vmatprep.subr.bf16.mxu0 %v2543
    %3814 = vmatpush2.bf16.msra.mxu0 %v2542
    %3815 = vmatprep.subr.bf16.mxu0 %v2539
    %3816 = vmatpush2.bf16.msra.mxu0 %v2538
    %3817 = vmatprep.subr.bf16.mxu0 %v2535
    %3818 = vmatpush2.bf16.msra.mxu0 %v2534
    %3819 = vmatprep.subr.bf16.mxu0 %v2531
    %3820 = vmatpush2.bf16.msra.mxu0 %v2530
    %3821 = vmatprep.subr.bf16.mxu0 %v2527
    %3822 = vmatpush2.bf16.msra.mxu0 %v2526
    %3823 = vmatprep.subr.bf16.mxu0 %v2523
    %3824 = vmatpush2.bf16.msra.mxu0 %v2522
    %3825 = vmatprep.mubr.bf16.mxu0 %v217
    %3826 = vmatmul.mubr.bf16.gmra.mxu0 %v216
    %v3827 = vpop.f32.mrf.mxu0
    %v3828 = vadd.f32 %v3785, %v3827
    %v3829 = vpop.f32.mrf.mxu0
    %v3830 = vadd.f32 %v3787, %v3829
    %v3831 = vpop.f32.mrf.mxu0
    %v3832 = vadd.f32 %v3789, %v3831
    %v3833 = vpop.f32.mrf.mxu0
    %v3834 = vadd.f32 %v3791, %v3833
    %3835 = vdwg.mxu0
    %3836 = vmatprep.subr.bf16.mxu0 %v2583
    %3837 = vmatpush1.bf16.msra.mxu0 %v2582
    %3838 = vmatprep.subr.bf16.mxu0 %v2579
    %3839 = vmatpush1.bf16.msra.mxu0 %v2578
    %3840 = vmatprep.subr.bf16.mxu0 %v2575
    %3841 = vmatpush1.bf16.msra.mxu0 %v2574
    %3842 = vmatprep.subr.bf16.mxu0 %v2571
    %3843 = vmatpush1.bf16.msra.mxu0 %v2570
    %3844 = vmatprep.subr.bf16.mxu0 %v2567
    %3845 = vmatpush1.bf16.msra.mxu0 %v2566
    %3846 = vmatprep.subr.bf16.mxu0 %v2563
    %3847 = vmatpush1.bf16.msra.mxu0 %v2562
    %3848 = vmatprep.subr.bf16.mxu0 %v2559
    %3849 = vmatpush1.bf16.msra.mxu0 %v2558
    %3850 = vmatprep.subr.bf16.mxu0 %v2555
    %3851 = vmatpush1.bf16.msra.mxu0 %v2554
    %3852 = vmatprep.subr.bf16.mxu0 %v2615
    %3853 = vmatpush2.bf16.msra.mxu0 %v2614
    %3854 = vmatprep.subr.bf16.mxu0 %v2611
    %3855 = vmatpush2.bf16.msra.mxu0 %v2610
    %3856 = vmatprep.subr.bf16.mxu0 %v2607
    %3857 = vmatpush2.bf16.msra.mxu0 %v2606
    %3858 = vmatprep.subr.bf16.mxu0 %v2603
    %3859 = vmatpush2.bf16.msra.mxu0 %v2602
    %3860 = vmatprep.subr.bf16.mxu0 %v2599
    %3861 = vmatpush2.bf16.msra.mxu0 %v2598
    %3862 = vmatprep.subr.bf16.mxu0 %v2595
    %3863 = vmatpush2.bf16.msra.mxu0 %v2594
    %3864 = vmatprep.subr.bf16.mxu0 %v2591
    %3865 = vmatpush2.bf16.msra.mxu0 %v2590
    %3866 = vmatprep.subr.bf16.mxu0 %v2587
    %3867 = vmatpush2.bf16.msra.mxu0 %v2586
    %3868 = vmatprep.mubr.bf16.mxu0 %v219
    %3869 = vmatmul.mubr.bf16.gmra.mxu0 %v218
    %v3870 = vpop.f32.mrf.mxu0
    %v3871 = vadd.f32 %v3828, %v3870
    %v3872 = vpop.f32.mrf.mxu0
    %v3873 = vadd.f32 %v3830, %v3872
    %v3874 = vpop.f32.mrf.mxu0
    %v3875 = vadd.f32 %v3832, %v3874
    %v3876 = vpop.f32.mrf.mxu0
    %v3877 = vadd.f32 %v3834, %v3876
    %3878 = vdwg.mxu0
    %3879 = vmatprep.subr.bf16.mxu0 %v2647
    %3880 = vmatpush1.bf16.msra.mxu0 %v2646
    %3881 = vmatprep.subr.bf16.mxu0 %v2643
    %3882 = vmatpush1.bf16.msra.mxu0 %v2642
    %3883 = vmatprep.subr.bf16.mxu0 %v2639
    %3884 = vmatpush1.bf16.msra.mxu0 %v2638
    %3885 = vmatprep.subr.bf16.mxu0 %v2635
    %3886 = vmatpush1.bf16.msra.mxu0 %v2634
    %3887 = vmatprep.subr.bf16.mxu0 %v2631
    %3888 = vmatpush1.bf16.msra.mxu0 %v2630
    %3889 = vmatprep.subr.bf16.mxu0 %v2627
    %3890 = vmatpush1.bf16.msra.mxu0 %v2626
    %3891 = vmatprep.subr.bf16.mxu0 %v2623
    %3892 = vmatpush1.bf16.msra.mxu0 %v2622
    %3893 = vmatprep.subr.bf16.mxu0 %v2619
    %3894 = vmatpush1.bf16.msra.mxu0 %v2618
    %3895 = vmatprep.subr.bf16.mxu0 %v2679
    %3896 = vmatpush2.bf16.msra.mxu0 %v2678
    %3897 = vmatprep.subr.bf16.mxu0 %v2675
    %3898 = vmatpush2.bf16.msra.mxu0 %v2674
    %3899 = vmatprep.subr.bf16.mxu0 %v2671
    %3900 = vmatpush2.bf16.msra.mxu0 %v2670
    %3901 = vmatprep.subr.bf16.mxu0 %v2667
    %3902 = vmatpush2.bf16.msra.mxu0 %v2666
    %3903 = vmatprep.subr.bf16.mxu0 %v2663
    %3904 = vmatpush2.bf16.msra.mxu0 %v2662
    %3905 = vmatprep.subr.bf16.mxu0 %v2659
    %3906 = vmatpush2.bf16.msra.mxu0 %v2658
    %3907 = vmatprep.subr.bf16.mxu0 %v2655
    %3908 = vmatpush2.bf16.msra.mxu0 %v2654
    %3909 = vmatprep.subr.bf16.mxu0 %v2651
    %3910 = vmatpush2.bf16.msra.mxu0 %v2650
    %3911 = vmatprep.mubr.bf16.mxu0 %v221
    %3912 = vmatmul.mubr.bf16.gmra.mxu0 %v220
    %v3913 = vpop.f32.mrf.mxu0
    %v3914 = vadd.f32 %v3871, %v3913
    %v3915 = vpop.f32.mrf.mxu0
    %v3916 = vadd.f32 %v3873, %v3915
    %v3917 = vpop.f32.mrf.mxu0
    %v3918 = vadd.f32 %v3875, %v3917
    %v3919 = vpop.f32.mrf.mxu0
    %v3920 = vadd.f32 %v3877, %v3919
    %3921 = vdwg.mxu0
    %3922 = vmatprep.subr.bf16.mxu0 %v2711
    %3923 = vmatpush1.bf16.msra.mxu0 %v2710
    %3924 = vmatprep.subr.bf16.mxu0 %v2707
    %3925 = vmatpush1.bf16.msra.mxu0 %v2706
    %3926 = vmatprep.subr.bf16.mxu0 %v2703
    %3927 = vmatpush1.bf16.msra.mxu0 %v2702
    %3928 = vmatprep.subr.bf16.mxu0 %v2699
    %3929 = vmatpush1.bf16.msra.mxu0 %v2698
    %3930 = vmatprep.subr.bf16.mxu0 %v2695
    %3931 = vmatpush1.bf16.msra.mxu0 %v2694
    %3932 = vmatprep.subr.bf16.mxu0 %v2691
    %3933 = vmatpush1.bf16.msra.mxu0 %v2690
    %3934 = vmatprep.subr.bf16.mxu0 %v2687
    %3935 = vmatpush1.bf16.msra.mxu0 %v2686
    %3936 = vmatprep.subr.bf16.mxu0 %v2683
    %3937 = vmatpush1.bf16.msra.mxu0 %v2682
    %3938 = vmatprep.subr.bf16.mxu0 %v2743
    %3939 = vmatpush2.bf16.msra.mxu0 %v2742
    %3940 = vmatprep.subr.bf16.mxu0 %v2739
    %3941 = vmatpush2.bf16.msra.mxu0 %v2738
    %3942 = vmatprep.subr.bf16.mxu0 %v2735
    %3943 = vmatpush2.bf16.msra.mxu0 %v2734
    %3944 = vmatprep.subr.bf16.mxu0 %v2731
    %3945 = vmatpush2.bf16.msra.mxu0 %v2730
    %3946 = vmatprep.subr.bf16.mxu0 %v2727
    %3947 = vmatpush2.bf16.msra.mxu0 %v2726
    %3948 = vmatprep.subr.bf16.mxu0 %v2723
    %3949 = vmatpush2.bf16.msra.mxu0 %v2722
    %3950 = vmatprep.subr.bf16.mxu0 %v2719
    %3951 = vmatpush2.bf16.msra.mxu0 %v2718
    %3952 = vmatprep.subr.bf16.mxu0 %v2715
    %3953 = vmatpush2.bf16.msra.mxu0 %v2714
    %3954 = vmatprep.mubr.bf16.mxu0 %v223
    %3955 = vmatmul.mubr.bf16.gmra.mxu0 %v222
    %v3956 = vpop.f32.mrf.mxu0
    %v3957 = vadd.f32 %v3914, %v3956
    %v3958 = vpop.f32.mrf.mxu0
    %v3959 = vadd.f32 %v3916, %v3958
    %v3960 = vpop.f32.mrf.mxu0
    %v3961 = vadd.f32 %v3918, %v3960
    %v3962 = vpop.f32.mrf.mxu0
    %v3963 = vadd.f32 %v3920, %v3962
    %3964 = vdwg.mxu0
    %3965 = vmatprep.subr.bf16.mxu0 %v2775
    %3966 = vmatpush1.bf16.msra.mxu0 %v2774
    %3967 = vmatprep.subr.bf16.mxu0 %v2771
    %3968 = vmatpush1.bf16.msra.mxu0 %v2770
    %3969 = vmatprep.subr.bf16.mxu0 %v2767
    %3970 = vmatpush1.bf16.msra.mxu0 %v2766
    %3971 = vmatprep.subr.bf16.mxu0 %v2763
    %3972 = vmatpush1.bf16.msra.mxu0 %v2762
    %3973 = vmatprep.subr.bf16.mxu0 %v2759
    %3974 = vmatpush1.bf16.msra.mxu0 %v2758
    %3975 = vmatprep.subr.bf16.mxu0 %v2755
    %3976 = vmatpush1.bf16.msra.mxu0 %v2754
    %3977 = vmatprep.subr.bf16.mxu0 %v2751
    %3978 = vmatpush1.bf16.msra.mxu0 %v2750
    %3979 = vmatprep.subr.bf16.mxu0 %v2747
    %3980 = vmatpush1.bf16.msra.mxu0 %v2746
    %3981 = vmatprep.subr.bf16.mxu0 %v2807
    %3982 = vmatpush2.bf16.msra.mxu0 %v2806
    %3983 = vmatprep.subr.bf16.mxu0 %v2803
    %3984 = vmatpush2.bf16.msra.mxu0 %v2802
    %3985 = vmatprep.subr.bf16.mxu0 %v2799
    %3986 = vmatpush2.bf16.msra.mxu0 %v2798
    %3987 = vmatprep.subr.bf16.mxu0 %v2795
    %3988 = vmatpush2.bf16.msra.mxu0 %v2794
    %3989 = vmatprep.subr.bf16.mxu0 %v2791
    %3990 = vmatpush2.bf16.msra.mxu0 %v2790
    %3991 = vmatprep.subr.bf16.mxu0 %v2787
    %3992 = vmatpush2.bf16.msra.mxu0 %v2786
    %3993 = vmatprep.subr.bf16.mxu0 %v2783
    %3994 = vmatpush2.bf16.msra.mxu0 %v2782
    %3995 = vmatprep.subr.bf16.mxu0 %v2779
    %3996 = vmatpush2.bf16.msra.mxu0 %v2778
    %3997 = vmatprep.mubr.bf16.mxu0 %v225
    %3998 = vmatmul.mubr.bf16.gmra.mxu0 %v224
    %v3999 = vpop.f32.mrf.mxu0
    %v4000 = vadd.f32 %v3957, %v3999
    %v4001 = vpop.f32.mrf.mxu0
    %v4002 = vadd.f32 %v3959, %v4001
    %v4003 = vpop.f32.mrf.mxu0
    %v4004 = vadd.f32 %v3961, %v4003
    %v4005 = vpop.f32.mrf.mxu0
    %v4006 = vadd.f32 %v3963, %v4005
    %4007 = vdwg.mxu0
    %v4008 = vmax.f32 %v3656, 0.0
    %v4009 = vmax.f32 %v3658, 0.0
    %v4010 = vmax.f32 %v4000, 0.0
    %v4011 = vmax.f32 %v4002, 0.0
    %v4012 = vmax.f32 %v3660, 0.0
    %v4013 = vmax.f32 %v3662, 0.0
    %v4014 = vmax.f32 %v4004, 0.0
    %v4015 = vmax.f32 %v4006, 0.0
    %v4016 = vpack.c.bf16 %v4012, %v4008
    %v4017 = vpack.c.bf16 %v4013, %v4009
    %v4018 = vpack.c.bf16 %v4014, %v4010
    %v4019 = vpack.c.bf16 %v4015, %v4011
    %v4020 = vld [vmem:[#allocation7] sm:$0xff]
    %v4021 = vld [vmem:[#allocation7 + $0x8] sm:$0xff]
    %v4022 = vld [vmem:[#allocation7 + $0x10] sm:$0xff]
    %v4023 = vld [vmem:[#allocation7 + $0x18] sm:$0xff]
    %v4024 = vld [vmem:[#allocation7 + $0x20] sm:$0xff]
    %v4025 = vld [vmem:[#allocation7 + $0x28] sm:$0xff]
    %v4026 = vld [vmem:[#allocation7 + $0x30] sm:$0xff]
    %v4027 = vld [vmem:[#allocation7 + $0x38] sm:$0xff]
    %v4028 = vld [vmem:[#allocation7 + $0x40] sm:$0xff]
    %v4029 = vld [vmem:[#allocation7 + $0x48] sm:$0xff]
    %v4030 = vld [vmem:[#allocation7 + $0x50] sm:$0xff]
    %v4031 = vld [vmem:[#allocation7 + $0x58] sm:$0xff]
    %v4032 = vld [vmem:[#allocation7 + $0x60] sm:$0xff]
    %v4033 = vld [vmem:[#allocation7 + $0x68] sm:$0xff]
    %v4034 = vld [vmem:[#allocation7 + $0x70] sm:$0xff]
    %v4035 = vld [vmem:[#allocation7 + $0x78] sm:$0xff]
    %v4036 = vld [vmem:[#allocation7 + $0x80] sm:$0xff]
    %v4037 = vld [vmem:[#allocation7 + $0x88] sm:$0xff]
    %v4038 = vld [vmem:[#allocation7 + $0x90] sm:$0xff]
    %v4039 = vld [vmem:[#allocation7 + $0x98] sm:$0xff]
    %v4040 = vld [vmem:[#allocation7 + $0xa0] sm:$0xff]
    %v4041 = vld [vmem:[#allocation7 + $0xa8] sm:$0xff]
    %v4042 = vld [vmem:[#allocation7 + $0xb0] sm:$0xff]
    %v4043 = vld [vmem:[#allocation7 + $0xb8] sm:$0xff]
    %v4044 = vld [vmem:[#allocation7 + $0xc0] sm:$0xff]
    %v4045 = vld [vmem:[#allocation7 + $0xc8] sm:$0xff]
    %v4046 = vld [vmem:[#allocation7 + $0xd0] sm:$0xff]
    %v4047 = vld [vmem:[#allocation7 + $0xd8] sm:$0xff]
    %v4048 = vld [vmem:[#allocation7 + $0xe0] sm:$0xff]
    %v4049 = vld [vmem:[#allocation7 + $0xe8] sm:$0xff]
    %v4050 = vld [vmem:[#allocation7 + $0xf0] sm:$0xff]
    %v4051 = vld [vmem:[#allocation7 + $0xf8] sm:$0xff]
    %v4052 = vld [vmem:[#allocation7 + $0x100] sm:$0xff]
    %v4053 = vld [vmem:[#allocation7 + $0x108] sm:$0xff]
    %v4054 = vld [vmem:[#allocation7 + $0x110] sm:$0xff]
    %v4055 = vld [vmem:[#allocation7 + $0x118] sm:$0xff]
    %v4056 = vld [vmem:[#allocation7 + $0x120] sm:$0xff]
    %v4057 = vld [vmem:[#allocation7 + $0x128] sm:$0xff]
    %v4058 = vld [vmem:[#allocation7 + $0x130] sm:$0xff]
    %v4059 = vld [vmem:[#allocation7 + $0x138] sm:$0xff]
    %v4060 = vld [vmem:[#allocation7 + $0x140] sm:$0xff]
    %v4061 = vld [vmem:[#allocation7 + $0x148] sm:$0xff]
    %v4062 = vld [vmem:[#allocation7 + $0x150] sm:$0xff]
    %v4063 = vld [vmem:[#allocation7 + $0x158] sm:$0xff]
    %v4064 = vld [vmem:[#allocation7 + $0x160] sm:$0xff]
    %v4065 = vld [vmem:[#allocation7 + $0x168] sm:$0xff]
    %v4066 = vld [vmem:[#allocation7 + $0x170] sm:$0xff]
    %v4067 = vld [vmem:[#allocation7 + $0x178] sm:$0xff]
    %v4068 = vld [vmem:[#allocation7 + $0x180] sm:$0xff]
    %v4069 = vld [vmem:[#allocation7 + $0x188] sm:$0xff]
    %v4070 = vld [vmem:[#allocation7 + $0x190] sm:$0xff]
    %v4071 = vld [vmem:[#allocation7 + $0x198] sm:$0xff]
    %v4072 = vld [vmem:[#allocation7 + $0x1a0] sm:$0xff]
    %v4073 = vld [vmem:[#allocation7 + $0x1a8] sm:$0xff]
    %v4074 = vld [vmem:[#allocation7 + $0x1b0] sm:$0xff]
    %v4075 = vld [vmem:[#allocation7 + $0x1b8] sm:$0xff]
    %v4076 = vld [vmem:[#allocation7 + $0x1c0] sm:$0xff]
    %v4077 = vld [vmem:[#allocation7 + $0x1c8] sm:$0xff]
    %v4078 = vld [vmem:[#allocation7 + $0x1d0] sm:$0xff]
    %v4079 = vld [vmem:[#allocation7 + $0x1d8] sm:$0xff]
    %v4080 = vld [vmem:[#allocation7 + $0x1e0] sm:$0xff]
    %v4081 = vld [vmem:[#allocation7 + $0x1e8] sm:$0xff]
    %v4082 = vld [vmem:[#allocation7 + $0x1f0] sm:$0xff]
    %v4083 = vld [vmem:[#allocation7 + $0x1f8] sm:$0xff]
    %v4084 = vld [vmem:[#allocation9] sm:$0x3]
    %v4086 = vlaneseq
    %v4087 = vshrl.u32 %v4086, 7
    %v4088 = vsub.s32 0, %v4087
    %v4089 = vrot.slane %v4084, %v4088
    %v4090 = vlaneseq
    %v4091 = vshrl.u32 %v4090, 7
    %v4092 = vsub.s32 1, %v4091
    %v4093 = vrot.slane %v4084, %v4092
    %v4160 = vunpack.c.l.b16 %v4020
    %v4161 = vunpack.c.h.b16 %v4020
    %v4162 = vunpack.c.l.b16 %v4021
    %v4163 = vunpack.c.h.b16 %v4021
    %v4164 = vunpack.c.l.b16 %v4022
    %v4165 = vunpack.c.h.b16 %v4022
    %v4166 = vunpack.c.l.b16 %v4023
    %v4167 = vunpack.c.h.b16 %v4023
    %v4168 = vunpack.c.l.b16 %v4024
    %v4169 = vunpack.c.h.b16 %v4024
    %v4170 = vunpack.c.l.b16 %v4025
    %v4171 = vunpack.c.h.b16 %v4025
    %v4172 = vunpack.c.l.b16 %v4026
    %v4173 = vunpack.c.h.b16 %v4026
    %v4174 = vunpack.c.l.b16 %v4027
    %v4175 = vunpack.c.h.b16 %v4027
    %v4176 = vunpack.c.l.b16 %v4028
    %v4177 = vunpack.c.h.b16 %v4028
    %v4178 = vunpack.c.l.b16 %v4029
    %v4179 = vunpack.c.h.b16 %v4029
    %v4180 = vunpack.c.l.b16 %v4030
    %v4181 = vunpack.c.h.b16 %v4030
    %v4182 = vunpack.c.l.b16 %v4031
    %v4183 = vunpack.c.h.b16 %v4031
    %v4184 = vunpack.c.l.b16 %v4032
    %v4185 = vunpack.c.h.b16 %v4032
    %v4186 = vunpack.c.l.b16 %v4033
    %v4187 = vunpack.c.h.b16 %v4033
    %v4188 = vunpack.c.l.b16 %v4034
    %v4189 = vunpack.c.h.b16 %v4034
    %v4190 = vunpack.c.l.b16 %v4035
    %v4191 = vunpack.c.h.b16 %v4035
    %v4192 = vunpack.c.l.b16 %v4036
    %v4193 = vunpack.c.h.b16 %v4036
    %v4194 = vunpack.c.l.b16 %v4037
    %v4195 = vunpack.c.h.b16 %v4037
    %v4196 = vunpack.c.l.b16 %v4038
    %v4197 = vunpack.c.h.b16 %v4038
    %v4198 = vunpack.c.l.b16 %v4039
    %v4199 = vunpack.c.h.b16 %v4039
    %v4200 = vunpack.c.l.b16 %v4040
    %v4201 = vunpack.c.h.b16 %v4040
    %v4202 = vunpack.c.l.b16 %v4041
    %v4203 = vunpack.c.h.b16 %v4041
    %v4204 = vunpack.c.l.b16 %v4042
    %v4205 = vunpack.c.h.b16 %v4042
    %v4206 = vunpack.c.l.b16 %v4043
    %v4207 = vunpack.c.h.b16 %v4043
    %v4208 = vunpack.c.l.b16 %v4044
    %v4209 = vunpack.c.h.b16 %v4044
    %v4210 = vunpack.c.l.b16 %v4045
    %v4211 = vunpack.c.h.b16 %v4045
    %v4212 = vunpack.c.l.b16 %v4046
    %v4213 = vunpack.c.h.b16 %v4046
    %v4214 = vunpack.c.l.b16 %v4047
    %v4215 = vunpack.c.h.b16 %v4047
    %v4216 = vunpack.c.l.b16 %v4048
    %v4217 = vunpack.c.h.b16 %v4048
    %v4218 = vunpack.c.l.b16 %v4049
    %v4219 = vunpack.c.h.b16 %v4049
    %v4220 = vunpack.c.l.b16 %v4050
    %v4221 = vunpack.c.h.b16 %v4050
    %v4222 = vunpack.c.l.b16 %v4051
    %v4223 = vunpack.c.h.b16 %v4051
    %v4224 = vunpack.c.l.b16 %v4052
    %v4225 = vunpack.c.h.b16 %v4052
    %v4226 = vunpack.c.l.b16 %v4053
    %v4227 = vunpack.c.h.b16 %v4053
    %v4228 = vunpack.c.l.b16 %v4054
    %v4229 = vunpack.c.h.b16 %v4054
    %v4230 = vunpack.c.l.b16 %v4055
    %v4231 = vunpack.c.h.b16 %v4055
    %v4232 = vunpack.c.l.b16 %v4056
    %v4233 = vunpack.c.h.b16 %v4056
    %v4234 = vunpack.c.l.b16 %v4057
    %v4235 = vunpack.c.h.b16 %v4057
    %v4236 = vunpack.c.l.b16 %v4058
    %v4237 = vunpack.c.h.b16 %v4058
    %v4238 = vunpack.c.l.b16 %v4059
    %v4239 = vunpack.c.h.b16 %v4059
    %v4240 = vunpack.c.l.b16 %v4060
    %v4241 = vunpack.c.h.b16 %v4060
    %v4242 = vunpack.c.l.b16 %v4061
    %v4243 = vunpack.c.h.b16 %v4061
    %v4244 = vunpack.c.l.b16 %v4062
    %v4245 = vunpack.c.h.b16 %v4062
    %v4246 = vunpack.c.l.b16 %v4063
    %v4247 = vunpack.c.h.b16 %v4063
    %v4248 = vunpack.c.l.b16 %v4064
    %v4249 = vunpack.c.h.b16 %v4064
    %v4250 = vunpack.c.l.b16 %v4065
    %v4251 = vunpack.c.h.b16 %v4065
    %v4252 = vunpack.c.l.b16 %v4066
    %v4253 = vunpack.c.h.b16 %v4066
    %v4254 = vunpack.c.l.b16 %v4067
    %v4255 = vunpack.c.h.b16 %v4067
    %v4256 = vunpack.c.l.b16 %v4068
    %v4257 = vunpack.c.h.b16 %v4068
    %v4258 = vunpack.c.l.b16 %v4069
    %v4259 = vunpack.c.h.b16 %v4069
    %v4260 = vunpack.c.l.b16 %v4070
    %v4261 = vunpack.c.h.b16 %v4070
    %v4262 = vunpack.c.l.b16 %v4071
    %v4263 = vunpack.c.h.b16 %v4071
    %v4264 = vunpack.c.l.b16 %v4072
    %v4265 = vunpack.c.h.b16 %v4072
    %v4266 = vunpack.c.l.b16 %v4073
    %v4267 = vunpack.c.h.b16 %v4073
    %v4268 = vunpack.c.l.b16 %v4074
    %v4269 = vunpack.c.h.b16 %v4074
    %v4270 = vunpack.c.l.b16 %v4075
    %v4271 = vunpack.c.h.b16 %v4075
    %v4272 = vunpack.c.l.b16 %v4076
    %v4273 = vunpack.c.h.b16 %v4076
    %v4274 = vunpack.c.l.b16 %v4077
    %v4275 = vunpack.c.h.b16 %v4077
    %v4276 = vunpack.c.l.b16 %v4078
    %v4277 = vunpack.c.h.b16 %v4078
    %v4278 = vunpack.c.l.b16 %v4079
    %v4279 = vunpack.c.h.b16 %v4079
    %v4280 = vunpack.c.l.b16 %v4080
    %v4281 = vunpack.c.h.b16 %v4080
    %v4282 = vunpack.c.l.b16 %v4081
    %v4283 = vunpack.c.h.b16 %v4081
    %v4284 = vunpack.c.l.b16 %v4082
    %v4285 = vunpack.c.h.b16 %v4082
    %v4286 = vunpack.c.l.b16 %v4083
    %v4287 = vunpack.c.h.b16 %v4083
    %v4288 = vpack.c.b16 %v4162, %v4160
    %v4289 = vpack.c.b16 %v4163, %v4161
    %v4290 = vpack.c.b16 %v4166, %v4164
    %v4291 = vpack.c.b16 %v4167, %v4165
    %v4292 = vpack.c.b16 %v4170, %v4168
    %v4293 = vpack.c.b16 %v4171, %v4169
    %v4294 = vpack.c.b16 %v4174, %v4172
    %v4295 = vpack.c.b16 %v4175, %v4173
    %v4296 = vpack.c.b16 %v4178, %v4176
    %v4297 = vpack.c.b16 %v4179, %v4177
    %v4298 = vpack.c.b16 %v4182, %v4180
    %v4299 = vpack.c.b16 %v4183, %v4181
    %v4300 = vpack.c.b16 %v4186, %v4184
    %v4301 = vpack.c.b16 %v4187, %v4185
    %v4302 = vpack.c.b16 %v4190, %v4188
    %v4303 = vpack.c.b16 %v4191, %v4189
    %v4304 = vpack.c.b16 %v4194, %v4192
    %v4305 = vpack.c.b16 %v4195, %v4193
    %v4306 = vpack.c.b16 %v4198, %v4196
    %v4307 = vpack.c.b16 %v4199, %v4197
    %v4308 = vpack.c.b16 %v4202, %v4200
    %v4309 = vpack.c.b16 %v4203, %v4201
    %v4310 = vpack.c.b16 %v4206, %v4204
    %v4311 = vpack.c.b16 %v4207, %v4205
    %v4312 = vpack.c.b16 %v4210, %v4208
    %v4313 = vpack.c.b16 %v4211, %v4209
    %v4314 = vpack.c.b16 %v4214, %v4212
    %v4315 = vpack.c.b16 %v4215, %v4213
    %v4316 = vpack.c.b16 %v4218, %v4216
    %v4317 = vpack.c.b16 %v4219, %v4217
    %v4318 = vpack.c.b16 %v4222, %v4220
    %v4319 = vpack.c.b16 %v4223, %v4221
    %v4320 = vpack.c.b16 %v4226, %v4224
    %v4321 = vpack.c.b16 %v4227, %v4225
    %v4322 = vpack.c.b16 %v4230, %v4228
    %v4323 = vpack.c.b16 %v4231, %v4229
    %v4324 = vpack.c.b16 %v4234, %v4232
    %v4325 = vpack.c.b16 %v4235, %v4233
    %v4326 = vpack.c.b16 %v4238, %v4236
    %v4327 = vpack.c.b16 %v4239, %v4237
    %v4328 = vpack.c.b16 %v4242, %v4240
    %v4329 = vpack.c.b16 %v4243, %v4241
    %v4330 = vpack.c.b16 %v4246, %v4244
    %v4331 = vpack.c.b16 %v4247, %v4245
    %v4332 = vpack.c.b16 %v4250, %v4248
    %v4333 = vpack.c.b16 %v4251, %v4249
    %v4334 = vpack.c.b16 %v4254, %v4252
    %v4335 = vpack.c.b16 %v4255, %v4253
    %v4336 = vpack.c.b16 %v4258, %v4256
    %v4337 = vpack.c.b16 %v4259, %v4257
    %v4338 = vpack.c.b16 %v4262, %v4260
    %v4339 = vpack.c.b16 %v4263, %v4261
    %v4340 = vpack.c.b16 %v4266, %v4264
    %v4341 = vpack.c.b16 %v4267, %v4265
    %v4342 = vpack.c.b16 %v4270, %v4268
    %v4343 = vpack.c.b16 %v4271, %v4269
    %v4344 = vpack.c.b16 %v4274, %v4272
    %v4345 = vpack.c.b16 %v4275, %v4273
    %v4346 = vpack.c.b16 %v4278, %v4276
    %v4347 = vpack.c.b16 %v4279, %v4277
    %v4348 = vpack.c.b16 %v4282, %v4280
    %v4349 = vpack.c.b16 %v4283, %v4281
    %v4350 = vpack.c.b16 %v4286, %v4284
    %v4351 = vpack.c.b16 %v4287, %v4285
    %4416 = vmatprep.subr.bf16.mxu0 %v4303
    %4417 = vmatpush1.bf16.msra.mxu0 %v4302
    %4418 = vmatprep.subr.bf16.mxu0 %v4301
    %4419 = vmatpush1.bf16.msra.mxu0 %v4300
    %4420 = vmatprep.subr.bf16.mxu0 %v4299
    %4421 = vmatpush1.bf16.msra.mxu0 %v4298
    %4422 = vmatprep.subr.bf16.mxu0 %v4297
    %4423 = vmatpush1.bf16.msra.mxu0 %v4296
    %4424 = vmatprep.subr.bf16.mxu0 %v4295
    %4425 = vmatpush1.bf16.msra.mxu0 %v4294
    %4426 = vmatprep.subr.bf16.mxu0 %v4293
    %4427 = vmatpush1.bf16.msra.mxu0 %v4292
    %4428 = vmatprep.subr.bf16.mxu0 %v4291
    %4429 = vmatpush1.bf16.msra.mxu0 %v4290
    %4430 = vmatprep.subr.bf16.mxu0 %v4289
    %4431 = vmatpush1.bf16.msra.mxu0 %v4288
    %4432 = vmatprep.subr.bf16.mxu0 %v4319
    %4433 = vmatpush2.bf16.msra.mxu0 %v4318
    %4434 = vmatprep.subr.bf16.mxu0 %v4317
    %4435 = vmatpush2.bf16.msra.mxu0 %v4316
    %4436 = vmatprep.subr.bf16.mxu0 %v4315
    %4437 = vmatpush2.bf16.msra.mxu0 %v4314
    %4438 = vmatprep.subr.bf16.mxu0 %v4313
    %4439 = vmatpush2.bf16.msra.mxu0 %v4312
    %4440 = vmatprep.subr.bf16.mxu0 %v4311
    %4441 = vmatpush2.bf16.msra.mxu0 %v4310
    %4442 = vmatprep.subr.bf16.mxu0 %v4309
    %4443 = vmatpush2.bf16.msra.mxu0 %v4308
    %4444 = vmatprep.subr.bf16.mxu0 %v4307
    %4445 = vmatpush2.bf16.msra.mxu0 %v4306
    %4446 = vmatprep.subr.bf16.mxu0 %v4305
    %4447 = vmatpush2.bf16.msra.mxu0 %v4304
    %4448 = vmatprep.mubr.bf16.mxu0 %v4017
    %4449 = vmatmul.mubr.bf16.gmra.mxu0 %v4016
    %v4450 = vpop.f32.mrf.mxu0
    %v4451 = vadd.f32 %v4089, %v4450
    %v4452 = vpop.f32.mrf.mxu0
    %v4453 = vadd.f32 %v4093, %v4452
    %v4454 = vpop.f32.mrf.mxu0
    %v4455 = vadd.f32 %v4089, %v4454
    %v4456 = vpop.f32.mrf.mxu0
    %v4457 = vadd.f32 %v4093, %v4456
    %4458 = vdwg.mxu0
    %4459 = vmatprep.subr.bf16.mxu0 %v4335
    %4460 = vmatpush1.bf16.msra.mxu0 %v4334
    %4461 = vmatprep.subr.bf16.mxu0 %v4333
    %4462 = vmatpush1.bf16.msra.mxu0 %v4332
    %4463 = vmatprep.subr.bf16.mxu0 %v4331
    %4464 = vmatpush1.bf16.msra.mxu0 %v4330
    %4465 = vmatprep.subr.bf16.mxu0 %v4329
    %4466 = vmatpush1.bf16.msra.mxu0 %v4328
    %4467 = vmatprep.subr.bf16.mxu0 %v4327
    %4468 = vmatpush1.bf16.msra.mxu0 %v4326
    %4469 = vmatprep.subr.bf16.mxu0 %v4325
    %4470 = vmatpush1.bf16.msra.mxu0 %v4324
    %4471 = vmatprep.subr.bf16.mxu0 %v4323
    %4472 = vmatpush1.bf16.msra.mxu0 %v4322
    %4473 = vmatprep.subr.bf16.mxu0 %v4321
    %4474 = vmatpush1.bf16.msra.mxu0 %v4320
    %4475 = vmatprep.subr.bf16.mxu0 %v4351
    %4476 = vmatpush2.bf16.msra.mxu0 %v4350
    %4477 = vmatprep.subr.bf16.mxu0 %v4349
    %4478 = vmatpush2.bf16.msra.mxu0 %v4348
    %4479 = vmatprep.subr.bf16.mxu0 %v4347
    %4480 = vmatpush2.bf16.msra.mxu0 %v4346
    %4481 = vmatprep.subr.bf16.mxu0 %v4345
    %4482 = vmatpush2.bf16.msra.mxu0 %v4344
    %4483 = vmatprep.subr.bf16.mxu0 %v4343
    %4484 = vmatpush2.bf16.msra.mxu0 %v4342
    %4485 = vmatprep.subr.bf16.mxu0 %v4341
    %4486 = vmatpush2.bf16.msra.mxu0 %v4340
    %4487 = vmatprep.subr.bf16.mxu0 %v4339
    %4488 = vmatpush2.bf16.msra.mxu0 %v4338
    %4489 = vmatprep.subr.bf16.mxu0 %v4337
    %4490 = vmatpush2.bf16.msra.mxu0 %v4336
    %4491 = vmatprep.mubr.bf16.mxu0 %v4019
    %4492 = vmatmul.mubr.bf16.gmra.mxu0 %v4018
    %v4493 = vpop.f32.mrf.mxu0
    %v4494 = vadd.f32 %v4451, %v4493
    %v4495 = vpop.f32.mrf.mxu0
    %v4496 = vadd.f32 %v4453, %v4495
    %v4497 = vpop.f32.mrf.mxu0
    %v4498 = vadd.f32 %v4455, %v4497
    %v4499 = vpop.f32.mrf.mxu0
    %v4500 = vadd.f32 %v4457, %v4499
    %4501 = vdwg.mxu0
    %v4502 = vlaneseq
    %v4503 = vshrl.u32 %v4502, 7
    %v4504 = vadd.s32 %v4503, 8
    %vm4505 = vcmp.lt.s32.totalorder %v4503, 0
    %v4506 = vsub.s32 0, %v4503
    %v4507 = vsel %vm4505, %v4506, %v4503
    %v4508 = vshrl.u32 %v4507, 3
    %v4509 = vand.u32 %v4507, 7
    %v4510 = vsub.s32 0, %v4509
    %v4511 = vsel %vm4505, %v4510, %v4509
    %vm4512 = vcmp.lt.s32.totalorder %v4504, 0
    %v4513 = vsub.s32 0, %v4504
    %v4514 = vsel %vm4512, %v4513, %v4504
    %v4515 = vshrl.u32 %v4514, 3
    %v4516 = vand.u32 %v4514, 7
    %v4517 = vsub.s32 0, %v4516
    %v4518 = vsel %vm4512, %v4517, %v4516
    %vm4519 = vcmp.ne.s32.totalorder %v4511, 0
    %vm4520 = vcmp.ne.s32.totalorder %v4518, 0
    %vm4521 = vcmp.lt.s32.totalorder %v4511, 0
    %vm4522 = vcmp.lt.s32.totalorder %v4518, 0
    %vm4523 = vmand %vm4521, %vm4519
    %vm4524 = vmand %vm4522, %vm4520
    %v4525 = vadd.s32 %v4511, 8
    %v4526 = vadd.s32 %v4518, 8
    %v4527 = vsel %vm4523, %v4525, %v4511
    %v4528 = vsel %vm4524, %v4526, %v4518
    %vm4529 = vcmp.eq.s32.totalorder %v4527, 0
    %vm4530 = vcmp.eq.s32.totalorder %v4528, 0
    %vm4531 = vcmp.eq.s32.totalorder %v4527, 7
    %vm4532 = vcmp.eq.s32.totalorder %v4528, 7
    %v4533 = vrot.slane %v4494, 7
    %v4534 = vrot.slane %v4496, 7
    %v4535 = vrot.slane %v4498, 7
    %v4536 = vrot.slane %v4500, 7
    %vm4537 = vcmp.lt.s32.totalorder %v4503, 1
    %v4538 = vsel %vm4537, %v4533, %v4535
    %v4539 = vsel %vm4537, %v4534, %v4536
    %v4540 = vsel %vm4537, %v4535, %v4533
    %v4541 = vsel %vm4537, %v4536, %v4534
    %v4542 = vsel %vm4529, 1, 0
    %v4543 = vsel %vm4530, 1, 0
    %vm4544 = vcmp.eq.s32.totalorder %v4542, 1
    %vm4545 = vcmp.eq.s32.totalorder %v4543, 1
    %v4546 = vsel %vm4544, 0.0, %v4540
    %v4547 = vsel %vm4544, 0.0, %v4541
    %v4548 = vsel %vm4545, 0.0, %v4538
    %v4549 = vsel %vm4545, 0.0, %v4539
    %v4550 = vrot.slane %v4494, 1
    %v4551 = vrot.slane %v4496, 1
    %v4552 = vrot.slane %v4498, 1
    %v4553 = vrot.slane %v4500, 1
    %vm4554 = vcmp.lt.s32.totalorder %v4503, 7
    %v4555 = vsel %vm4554, %v4550, %v4552
    %v4556 = vsel %vm4554, %v4551, %v4553
    %v4557 = vsel %vm4554, %v4552, %v4550
    %v4558 = vsel %vm4554, %v4553, %v4551
    %v4559 = vsel %vm4531, 1, 0
    %v4560 = vsel %vm4532, 1, 0
    %vm4561 = vcmp.eq.s32.totalorder %v4559, 1
    %vm4562 = vcmp.eq.s32.totalorder %v4560, 1
    %v4563 = vsel %vm4561, 0.0, %v4555
    %v4564 = vsel %vm4561, 0.0, %v4556
    %v4565 = vsel %vm4562, 0.0, %v4557
    %v4566 = vsel %vm4562, 0.0, %v4558
    %v4567 = vpack.c.bf16 %v4548, %v4546
    %v4568 = vpack.c.bf16 %v4549, %v4547
    %v4569 = vld [vmem:[#allocation10] sm:$0xff]
    %v4570 = vld [vmem:[#allocation10 + $0x8] sm:$0xff]
    %v4571 = vld [vmem:[#allocation10 + $0x10] sm:$0xff]
    %v4572 = vld [vmem:[#allocation10 + $0x18] sm:$0xff]
    %v4573 = vld [vmem:[#allocation10 + $0x20] sm:$0xff]
    %v4574 = vld [vmem:[#allocation10 + $0x28] sm:$0xff]
    %v4575 = vld [vmem:[#allocation10 + $0x30] sm:$0xff]
    %v4576 = vld [vmem:[#allocation10 + $0x38] sm:$0xff]
    %v4577 = vld [vmem:[#allocation10 + $0x40] sm:$0xff]
    %v4578 = vld [vmem:[#allocation10 + $0x48] sm:$0xff]
    %v4579 = vld [vmem:[#allocation10 + $0x50] sm:$0xff]
    %v4580 = vld [vmem:[#allocation10 + $0x58] sm:$0xff]
    %v4581 = vld [vmem:[#allocation10 + $0x60] sm:$0xff]
    %v4582 = vld [vmem:[#allocation10 + $0x68] sm:$0xff]
    %v4583 = vld [vmem:[#allocation10 + $0x70] sm:$0xff]
    %v4584 = vld [vmem:[#allocation10 + $0x78] sm:$0xff]
    %v4585 = vld [vmem:[#allocation10 + $0x80] sm:$0xff]
    %v4586 = vld [vmem:[#allocation10 + $0x88] sm:$0xff]
    %v4587 = vld [vmem:[#allocation10 + $0x90] sm:$0xff]
    %v4588 = vld [vmem:[#allocation10 + $0x98] sm:$0xff]
    %v4589 = vld [vmem:[#allocation10 + $0xa0] sm:$0xff]
    %v4590 = vld [vmem:[#allocation10 + $0xa8] sm:$0xff]
    %v4591 = vld [vmem:[#allocation10 + $0xb0] sm:$0xff]
    %v4592 = vld [vmem:[#allocation10 + $0xb8] sm:$0xff]
    %v4593 = vld [vmem:[#allocation10 + $0xc0] sm:$0xff]
    %v4594 = vld [vmem:[#allocation10 + $0xc8] sm:$0xff]
    %v4595 = vld [vmem:[#allocation10 + $0xd0] sm:$0xff]
    %v4596 = vld [vmem:[#allocation10 + $0xd8] sm:$0xff]
    %v4597 = vld [vmem:[#allocation10 + $0xe0] sm:$0xff]
    %v4598 = vld [vmem:[#allocation10 + $0xe8] sm:$0xff]
    %v4599 = vld [vmem:[#allocation10 + $0xf0] sm:$0xff]
    %v4600 = vld [vmem:[#allocation10 + $0xf8] sm:$0xff]
    %v4601 = vpack.c.bf16 %v4498, %v4494
    %v4602 = vpack.c.bf16 %v4500, %v4496
    %v4603 = vld [vmem:[#allocation10 + $0x100] sm:$0xff]
    %v4604 = vld [vmem:[#allocation10 + $0x108] sm:$0xff]
    %v4605 = vld [vmem:[#allocation10 + $0x110] sm:$0xff]
    %v4606 = vld [vmem:[#allocation10 + $0x118] sm:$0xff]
    %v4607 = vld [vmem:[#allocation10 + $0x120] sm:$0xff]
    %v4608 = vld [vmem:[#allocation10 + $0x128] sm:$0xff]
    %v4609 = vld [vmem:[#allocation10 + $0x130] sm:$0xff]
    %v4610 = vld [vmem:[#allocation10 + $0x138] sm:$0xff]
    %v4611 = vld [vmem:[#allocation10 + $0x140] sm:$0xff]
    %v4612 = vld [vmem:[#allocation10 + $0x148] sm:$0xff]
    %v4613 = vld [vmem:[#allocation10 + $0x150] sm:$0xff]
    %v4614 = vld [vmem:[#allocation10 + $0x158] sm:$0xff]
    %v4615 = vld [vmem:[#allocation10 + $0x160] sm:$0xff]
    %v4616 = vld [vmem:[#allocation10 + $0x168] sm:$0xff]
    %v4617 = vld [vmem:[#allocation10 + $0x170] sm:$0xff]
    %v4618 = vld [vmem:[#allocation10 + $0x178] sm:$0xff]
    %v4619 = vld [vmem:[#allocation10 + $0x180] sm:$0xff]
    %v4620 = vld [vmem:[#allocation10 + $0x188] sm:$0xff]
    %v4621 = vld [vmem:[#allocation10 + $0x190] sm:$0xff]
    %v4622 = vld [vmem:[#allocation10 + $0x198] sm:$0xff]
    %v4623 = vld [vmem:[#allocation10 + $0x1a0] sm:$0xff]
    %v4624 = vld [vmem:[#allocation10 + $0x1a8] sm:$0xff]
    %v4625 = vld [vmem:[#allocation10 + $0x1b0] sm:$0xff]
    %v4626 = vld [vmem:[#allocation10 + $0x1b8] sm:$0xff]
    %v4627 = vld [vmem:[#allocation10 + $0x1c0] sm:$0xff]
    %v4628 = vld [vmem:[#allocation10 + $0x1c8] sm:$0xff]
    %v4629 = vld [vmem:[#allocation10 + $0x1d0] sm:$0xff]
    %v4630 = vld [vmem:[#allocation10 + $0x1d8] sm:$0xff]
    %v4631 = vld [vmem:[#allocation10 + $0x1e0] sm:$0xff]
    %v4632 = vld [vmem:[#allocation10 + $0x1e8] sm:$0xff]
    %v4633 = vld [vmem:[#allocation10 + $0x1f0] sm:$0xff]
    %v4634 = vld [vmem:[#allocation10 + $0x1f8] sm:$0xff]
    %v4667 = vunpack.c.l.b16 %v4603
    %v4668 = vunpack.c.h.b16 %v4603
    %v4669 = vunpack.c.l.b16 %v4604
    %v4670 = vunpack.c.h.b16 %v4604
    %v4671 = vunpack.c.l.b16 %v4605
    %v4672 = vunpack.c.h.b16 %v4605
    %v4673 = vunpack.c.l.b16 %v4606
    %v4674 = vunpack.c.h.b16 %v4606
    %v4675 = vunpack.c.l.b16 %v4607
    %v4676 = vunpack.c.h.b16 %v4607
    %v4677 = vunpack.c.l.b16 %v4608
    %v4678 = vunpack.c.h.b16 %v4608
    %v4679 = vunpack.c.l.b16 %v4609
    %v4680 = vunpack.c.h.b16 %v4609
    %v4681 = vunpack.c.l.b16 %v4610
    %v4682 = vunpack.c.h.b16 %v4610
    %v4683 = vunpack.c.l.b16 %v4611
    %v4684 = vunpack.c.h.b16 %v4611
    %v4685 = vunpack.c.l.b16 %v4612
    %v4686 = vunpack.c.h.b16 %v4612
    %v4687 = vunpack.c.l.b16 %v4613
    %v4688 = vunpack.c.h.b16 %v4613
    %v4689 = vunpack.c.l.b16 %v4614
    %v4690 = vunpack.c.h.b16 %v4614
    %v4691 = vunpack.c.l.b16 %v4615
    %v4692 = vunpack.c.h.b16 %v4615
    %v4693 = vunpack.c.l.b16 %v4616
    %v4694 = vunpack.c.h.b16 %v4616
    %v4695 = vunpack.c.l.b16 %v4617
    %v4696 = vunpack.c.h.b16 %v4617
    %v4697 = vunpack.c.l.b16 %v4618
    %v4698 = vunpack.c.h.b16 %v4618
    %v4699 = vunpack.c.l.b16 %v4619
    %v4700 = vunpack.c.h.b16 %v4619
    %v4701 = vunpack.c.l.b16 %v4620
    %v4702 = vunpack.c.h.b16 %v4620
    %v4703 = vunpack.c.l.b16 %v4621
    %v4704 = vunpack.c.h.b16 %v4621
    %v4705 = vunpack.c.l.b16 %v4622
    %v4706 = vunpack.c.h.b16 %v4622
    %v4707 = vunpack.c.l.b16 %v4623
    %v4708 = vunpack.c.h.b16 %v4623
    %v4709 = vunpack.c.l.b16 %v4624
    %v4710 = vunpack.c.h.b16 %v4624
    %v4711 = vunpack.c.l.b16 %v4625
    %v4712 = vunpack.c.h.b16 %v4625
    %v4713 = vunpack.c.l.b16 %v4626
    %v4714 = vunpack.c.h.b16 %v4626
    %v4715 = vunpack.c.l.b16 %v4627
    %v4716 = vunpack.c.h.b16 %v4627
    %v4717 = vunpack.c.l.b16 %v4628
    %v4718 = vunpack.c.h.b16 %v4628
    %v4719 = vunpack.c.l.b16 %v4629
    %v4720 = vunpack.c.h.b16 %v4629
    %v4721 = vunpack.c.l.b16 %v4630
    %v4722 = vunpack.c.h.b16 %v4630
    %v4723 = vunpack.c.l.b16 %v4631
    %v4724 = vunpack.c.h.b16 %v4631
    %v4725 = vunpack.c.l.b16 %v4632
    %v4726 = vunpack.c.h.b16 %v4632
    %v4727 = vunpack.c.l.b16 %v4633
    %v4728 = vunpack.c.h.b16 %v4633
    %v4729 = vunpack.c.l.b16 %v4634
    %v4730 = vunpack.c.h.b16 %v4634
    %v4731 = vpack.c.b16 %v4669, %v4667
    %v4732 = vpack.c.b16 %v4670, %v4668
    %v4733 = vpack.c.b16 %v4673, %v4671
    %v4734 = vpack.c.b16 %v4674, %v4672
    %v4735 = vpack.c.b16 %v4677, %v4675
    %v4736 = vpack.c.b16 %v4678, %v4676
    %v4737 = vpack.c.b16 %v4681, %v4679
    %v4738 = vpack.c.b16 %v4682, %v4680
    %v4739 = vpack.c.b16 %v4685, %v4683
    %v4740 = vpack.c.b16 %v4686, %v4684
    %v4741 = vpack.c.b16 %v4689, %v4687
    %v4742 = vpack.c.b16 %v4690, %v4688
    %v4743 = vpack.c.b16 %v4693, %v4691
    %v4744 = vpack.c.b16 %v4694, %v4692
    %v4745 = vpack.c.b16 %v4697, %v4695
    %v4746 = vpack.c.b16 %v4698, %v4696
    %v4747 = vpack.c.b16 %v4701, %v4699
    %v4748 = vpack.c.b16 %v4702, %v4700
    %v4749 = vpack.c.b16 %v4705, %v4703
    %v4750 = vpack.c.b16 %v4706, %v4704
    %v4751 = vpack.c.b16 %v4709, %v4707
    %v4752 = vpack.c.b16 %v4710, %v4708
    %v4753 = vpack.c.b16 %v4713, %v4711
    %v4754 = vpack.c.b16 %v4714, %v4712
    %v4755 = vpack.c.b16 %v4717, %v4715
    %v4756 = vpack.c.b16 %v4718, %v4716
    %v4757 = vpack.c.b16 %v4721, %v4719
    %v4758 = vpack.c.b16 %v4722, %v4720
    %v4759 = vpack.c.b16 %v4725, %v4723
    %v4760 = vpack.c.b16 %v4726, %v4724
    %v4761 = vpack.c.b16 %v4729, %v4727
    %v4762 = vpack.c.b16 %v4730, %v4728
    %4795 = vmatprep.subr.bf16.mxu0 %v4746
    %4796 = vmatpush1.bf16.msra.mxu0 %v4745
    %4797 = vmatprep.subr.bf16.mxu0 %v4744
    %4798 = vmatpush1.bf16.msra.mxu0 %v4743
    %4799 = vmatprep.subr.bf16.mxu0 %v4742
    %4800 = vmatpush1.bf16.msra.mxu0 %v4741
    %4801 = vmatprep.subr.bf16.mxu0 %v4740
    %4802 = vmatpush1.bf16.msra.mxu0 %v4739
    %4803 = vmatprep.subr.bf16.mxu0 %v4738
    %4804 = vmatpush1.bf16.msra.mxu0 %v4737
    %4805 = vmatprep.subr.bf16.mxu0 %v4736
    %4806 = vmatpush1.bf16.msra.mxu0 %v4735
    %4807 = vmatprep.subr.bf16.mxu0 %v4734
    %4808 = vmatpush1.bf16.msra.mxu0 %v4733
    %4809 = vmatprep.subr.bf16.mxu0 %v4732
    %4810 = vmatpush1.bf16.msra.mxu0 %v4731
    %4811 = vmatprep.subr.bf16.mxu0 %v4762
    %4812 = vmatpush2.bf16.msra.mxu0 %v4761
    %4813 = vmatprep.subr.bf16.mxu0 %v4760
    %4814 = vmatpush2.bf16.msra.mxu0 %v4759
    %4815 = vmatprep.subr.bf16.mxu0 %v4758
    %4816 = vmatpush2.bf16.msra.mxu0 %v4757
    %4817 = vmatprep.subr.bf16.mxu0 %v4756
    %4818 = vmatpush2.bf16.msra.mxu0 %v4755
    %4819 = vmatprep.subr.bf16.mxu0 %v4754
    %4820 = vmatpush2.bf16.msra.mxu0 %v4753
    %4821 = vmatprep.subr.bf16.mxu0 %v4752
    %4822 = vmatpush2.bf16.msra.mxu0 %v4751
    %4823 = vmatprep.subr.bf16.mxu0 %v4750
    %4824 = vmatpush2.bf16.msra.mxu0 %v4749
    %4825 = vmatprep.subr.bf16.mxu0 %v4748
    %4826 = vmatpush2.bf16.msra.mxu0 %v4747
    %4827 = vmatprep.mubr.bf16.mxu0 %v4602
    %4828 = vmatmul.mubr.bf16.gmra.mxu0 %v4601
    %v4829 = vpop.f32.mrf.mxu0
    %v4830 = vadd.f32 0.0, %v4829
    %v4831 = vpop.f32.mrf.mxu0
    %v4832 = vadd.f32 0.0, %v4831
    %v4833 = vpop.f32.mrf.mxu0
    %v4834 = vadd.f32 0.0, %v4833
    %v4835 = vpop.f32.mrf.mxu0
    %v4836 = vadd.f32 0.0, %v4835
    %4837 = vdwg.mxu0
    %v4870 = vunpack.c.l.b16 %v4569
    %v4871 = vunpack.c.h.b16 %v4569
    %v4872 = vunpack.c.l.b16 %v4570
    %v4873 = vunpack.c.h.b16 %v4570
    %v4874 = vunpack.c.l.b16 %v4571
    %v4875 = vunpack.c.h.b16 %v4571
    %v4876 = vunpack.c.l.b16 %v4572
    %v4877 = vunpack.c.h.b16 %v4572
    %v4878 = vunpack.c.l.b16 %v4573
    %v4879 = vunpack.c.h.b16 %v4573
    %v4880 = vunpack.c.l.b16 %v4574
    %v4881 = vunpack.c.h.b16 %v4574
    %v4882 = vunpack.c.l.b16 %v4575
    %v4883 = vunpack.c.h.b16 %v4575
    %v4884 = vunpack.c.l.b16 %v4576
    %v4885 = vunpack.c.h.b16 %v4576
    %v4886 = vunpack.c.l.b16 %v4577
    %v4887 = vunpack.c.h.b16 %v4577
    %v4888 = vunpack.c.l.b16 %v4578
    %v4889 = vunpack.c.h.b16 %v4578
    %v4890 = vunpack.c.l.b16 %v4579
    %v4891 = vunpack.c.h.b16 %v4579
    %v4892 = vunpack.c.l.b16 %v4580
    %v4893 = vunpack.c.h.b16 %v4580
    %v4894 = vunpack.c.l.b16 %v4581
    %v4895 = vunpack.c.h.b16 %v4581
    %v4896 = vunpack.c.l.b16 %v4582
    %v4897 = vunpack.c.h.b16 %v4582
    %v4898 = vunpack.c.l.b16 %v4583
    %v4899 = vunpack.c.h.b16 %v4583
    %v4900 = vunpack.c.l.b16 %v4584
    %v4901 = vunpack.c.h.b16 %v4584
    %v4902 = vunpack.c.l.b16 %v4585
    %v4903 = vunpack.c.h.b16 %v4585
    %v4904 = vunpack.c.l.b16 %v4586
    %v4905 = vunpack.c.h.b16 %v4586
    %v4906 = vunpack.c.l.b16 %v4587
    %v4907 = vunpack.c.h.b16 %v4587
    %v4908 = vunpack.c.l.b16 %v4588
    %v4909 = vunpack.c.h.b16 %v4588
    %v4910 = vunpack.c.l.b16 %v4589
    %v4911 = vunpack.c.h.b16 %v4589
    %v4912 = vunpack.c.l.b16 %v4590
    %v4913 = vunpack.c.h.b16 %v4590
    %v4914 = vunpack.c.l.b16 %v4591
    %v4915 = vunpack.c.h.b16 %v4591
    %v4916 = vunpack.c.l.b16 %v4592
    %v4917 = vunpack.c.h.b16 %v4592
    %v4918 = vunpack.c.l.b16 %v4593
    %v4919 = vunpack.c.h.b16 %v4593
    %v4920 = vunpack.c.l.b16 %v4594
    %v4921 = vunpack.c.h.b16 %v4594
    %v4922 = vunpack.c.l.b16 %v4595
    %v4923 = vunpack.c.h.b16 %v4595
    %v4924 = vunpack.c.l.b16 %v4596
    %v4925 = vunpack.c.h.b16 %v4596
    %v4926 = vunpack.c.l.b16 %v4597
    %v4927 = vunpack.c.h.b16 %v4597
    %v4928 = vunpack.c.l.b16 %v4598
    %v4929 = vunpack.c.h.b16 %v4598
    %v4930 = vunpack.c.l.b16 %v4599
    %v4931 = vunpack.c.h.b16 %v4599
    %v4932 = vunpack.c.l.b16 %v4600
    %v4933 = vunpack.c.h.b16 %v4600
    %v4934 = vpack.c.b16 %v4872, %v4870
    %v4935 = vpack.c.b16 %v4873, %v4871
    %v4936 = vpack.c.b16 %v4876, %v4874
    %v4937 = vpack.c.b16 %v4877, %v4875
    %v4938 = vpack.c.b16 %v4880, %v4878
    %v4939 = vpack.c.b16 %v4881, %v4879
    %v4940 = vpack.c.b16 %v4884, %v4882
    %v4941 = vpack.c.b16 %v4885, %v4883
    %v4942 = vpack.c.b16 %v4888, %v4886
    %v4943 = vpack.c.b16 %v4889, %v4887
    %v4944 = vpack.c.b16 %v4892, %v4890
    %v4945 = vpack.c.b16 %v4893, %v4891
    %v4946 = vpack.c.b16 %v4896, %v4894
    %v4947 = vpack.c.b16 %v4897, %v4895
    %v4948 = vpack.c.b16 %v4900, %v4898
    %v4949 = vpack.c.b16 %v4901, %v4899
    %v4950 = vpack.c.b16 %v4904, %v4902
    %v4951 = vpack.c.b16 %v4905, %v4903
    %v4952 = vpack.c.b16 %v4908, %v4906
    %v4953 = vpack.c.b16 %v4909, %v4907
    %v4954 = vpack.c.b16 %v4912, %v4910
    %v4955 = vpack.c.b16 %v4913, %v4911
    %v4956 = vpack.c.b16 %v4916, %v4914
    %v4957 = vpack.c.b16 %v4917, %v4915
    %v4958 = vpack.c.b16 %v4920, %v4918
    %v4959 = vpack.c.b16 %v4921, %v4919
    %v4960 = vpack.c.b16 %v4924, %v4922
    %v4961 = vpack.c.b16 %v4925, %v4923
    %v4962 = vpack.c.b16 %v4928, %v4926
    %v4963 = vpack.c.b16 %v4929, %v4927
    %v4964 = vpack.c.b16 %v4932, %v4930
    %v4965 = vpack.c.b16 %v4933, %v4931
    %4998 = vmatprep.subr.bf16.mxu0 %v4949
    %4999 = vmatpush1.bf16.msra.mxu0 %v4948
    %5000 = vmatprep.subr.bf16.mxu0 %v4947
    %5001 = vmatpush1.bf16.msra.mxu0 %v4946
    %5002 = vmatprep.subr.bf16.mxu0 %v4945
    %5003 = vmatpush1.bf16.msra.mxu0 %v4944
    %5004 = vmatprep.subr.bf16.mxu0 %v4943
    %5005 = vmatpush1.bf16.msra.mxu0 %v4942
    %5006 = vmatprep.subr.bf16.mxu0 %v4941
    %5007 = vmatpush1.bf16.msra.mxu0 %v4940
    %5008 = vmatprep.subr.bf16.mxu0 %v4939
    %5009 = vmatpush1.bf16.msra.mxu0 %v4938
    %5010 = vmatprep.subr.bf16.mxu0 %v4937
    %5011 = vmatpush1.bf16.msra.mxu0 %v4936
    %5012 = vmatprep.subr.bf16.mxu0 %v4935
    %5013 = vmatpush1.bf16.msra.mxu0 %v4934
    %5014 = vmatprep.subr.bf16.mxu0 %v4965
    %5015 = vmatpush2.bf16.msra.mxu0 %v4964
    %5016 = vmatprep.subr.bf16.mxu0 %v4963
    %5017 = vmatpush2.bf16.msra.mxu0 %v4962
    %5018 = vmatprep.subr.bf16.mxu0 %v4961
    %5019 = vmatpush2.bf16.msra.mxu0 %v4960
    %5020 = vmatprep.subr.bf16.mxu0 %v4959
    %5021 = vmatpush2.bf16.msra.mxu0 %v4958
    %5022 = vmatprep.subr.bf16.mxu0 %v4957
    %5023 = vmatpush2.bf16.msra.mxu0 %v4956
    %5024 = vmatprep.subr.bf16.mxu0 %v4955
    %5025 = vmatpush2.bf16.msra.mxu0 %v4954
    %5026 = vmatprep.subr.bf16.mxu0 %v4953
    %5027 = vmatpush2.bf16.msra.mxu0 %v4952
    %5028 = vmatprep.subr.bf16.mxu0 %v4951
    %5029 = vmatpush2.bf16.msra.mxu0 %v4950
    %5030 = vmatprep.mubr.bf16.mxu0 %v4568
    %5031 = vmatmul.mubr.bf16.gmra.mxu0 %v4567
    %v5032 = vpop.f32.mrf.mxu0
    %v5033 = vadd.f32 %v4830, %v5032
    %v5034 = vpop.f32.mrf.mxu0
    %v5035 = vadd.f32 %v4832, %v5034
    %v5036 = vpop.f32.mrf.mxu0
    %v5037 = vadd.f32 %v4834, %v5036
    %v5038 = vpop.f32.mrf.mxu0
    %v5039 = vadd.f32 %v4836, %v5038
    %5040 = vdwg.mxu0
    %v5041 = vpack.c.bf16 %v4565, %v4563
    %v5042 = vpack.c.bf16 %v4566, %v4564
    %v5043 = vld [vmem:[#allocation10 + $0x200] sm:$0xff]
    %v5044 = vld [vmem:[#allocation10 + $0x208] sm:$0xff]
    %v5045 = vld [vmem:[#allocation10 + $0x210] sm:$0xff]
    %v5046 = vld [vmem:[#allocation10 + $0x218] sm:$0xff]
    %v5047 = vld [vmem:[#allocation10 + $0x220] sm:$0xff]
    %v5048 = vld [vmem:[#allocation10 + $0x228] sm:$0xff]
    %v5049 = vld [vmem:[#allocation10 + $0x230] sm:$0xff]
    %v5050 = vld [vmem:[#allocation10 + $0x238] sm:$0xff]
    %v5051 = vld [vmem:[#allocation10 + $0x240] sm:$0xff]
    %v5052 = vld [vmem:[#allocation10 + $0x248] sm:$0xff]
    %v5053 = vld [vmem:[#allocation10 + $0x250] sm:$0xff]
    %v5054 = vld [vmem:[#allocation10 + $0x258] sm:$0xff]
    %v5055 = vld [vmem:[#allocation10 + $0x260] sm:$0xff]
    %v5056 = vld [vmem:[#allocation10 + $0x268] sm:$0xff]
    %v5057 = vld [vmem:[#allocation10 + $0x270] sm:$0xff]
    %v5058 = vld [vmem:[#allocation10 + $0x278] sm:$0xff]
    %v5059 = vld [vmem:[#allocation10 + $0x280] sm:$0xff]
    %v5060 = vld [vmem:[#allocation10 + $0x288] sm:$0xff]
    %v5061 = vld [vmem:[#allocation10 + $0x290] sm:$0xff]
    %v5062 = vld [vmem:[#allocation10 + $0x298] sm:$0xff]
    %v5063 = vld [vmem:[#allocation10 + $0x2a0] sm:$0xff]
    %v5064 = vld [vmem:[#allocation10 + $0x2a8] sm:$0xff]
    %v5065 = vld [vmem:[#allocation10 + $0x2b0] sm:$0xff]
    %v5066 = vld [vmem:[#allocation10 + $0x2b8] sm:$0xff]
    %v5067 = vld [vmem:[#allocation10 + $0x2c0] sm:$0xff]
    %v5068 = vld [vmem:[#allocation10 + $0x2c8] sm:$0xff]
    %v5069 = vld [vmem:[#allocation10 + $0x2d0] sm:$0xff]
    %v5070 = vld [vmem:[#allocation10 + $0x2d8] sm:$0xff]
    %v5071 = vld [vmem:[#allocation10 + $0x2e0] sm:$0xff]
    %v5072 = vld [vmem:[#allocation10 + $0x2e8] sm:$0xff]
    %v5073 = vld [vmem:[#allocation10 + $0x2f0] sm:$0xff]
    %v5074 = vld [vmem:[#allocation10 + $0x2f8] sm:$0xff]
    %v5107 = vunpack.c.l.b16 %v5043
    %v5108 = vunpack.c.h.b16 %v5043
    %v5109 = vunpack.c.l.b16 %v5044
    %v5110 = vunpack.c.h.b16 %v5044
    %v5111 = vunpack.c.l.b16 %v5045
    %v5112 = vunpack.c.h.b16 %v5045
    %v5113 = vunpack.c.l.b16 %v5046
    %v5114 = vunpack.c.h.b16 %v5046
    %v5115 = vunpack.c.l.b16 %v5047
    %v5116 = vunpack.c.h.b16 %v5047
    %v5117 = vunpack.c.l.b16 %v5048
    %v5118 = vunpack.c.h.b16 %v5048
    %v5119 = vunpack.c.l.b16 %v5049
    %v5120 = vunpack.c.h.b16 %v5049
    %v5121 = vunpack.c.l.b16 %v5050
    %v5122 = vunpack.c.h.b16 %v5050
    %v5123 = vunpack.c.l.b16 %v5051
    %v5124 = vunpack.c.h.b16 %v5051
    %v5125 = vunpack.c.l.b16 %v5052
    %v5126 = vunpack.c.h.b16 %v5052
    %v5127 = vunpack.c.l.b16 %v5053
    %v5128 = vunpack.c.h.b16 %v5053
    %v5129 = vunpack.c.l.b16 %v5054
    %v5130 = vunpack.c.h.b16 %v5054
    %v5131 = vunpack.c.l.b16 %v5055
    %v5132 = vunpack.c.h.b16 %v5055
    %v5133 = vunpack.c.l.b16 %v5056
    %v5134 = vunpack.c.h.b16 %v5056
    %v5135 = vunpack.c.l.b16 %v5057
    %v5136 = vunpack.c.h.b16 %v5057
    %v5137 = vunpack.c.l.b16 %v5058
    %v5138 = vunpack.c.h.b16 %v5058
    %v5139 = vunpack.c.l.b16 %v5059
    %v5140 = vunpack.c.h.b16 %v5059
    %v5141 = vunpack.c.l.b16 %v5060
    %v5142 = vunpack.c.h.b16 %v5060
    %v5143 = vunpack.c.l.b16 %v5061
    %v5144 = vunpack.c.h.b16 %v5061
    %v5145 = vunpack.c.l.b16 %v5062
    %v5146 = vunpack.c.h.b16 %v5062
    %v5147 = vunpack.c.l.b16 %v5063
    %v5148 = vunpack.c.h.b16 %v5063
    %v5149 = vunpack.c.l.b16 %v5064
    %v5150 = vunpack.c.h.b16 %v5064
    %v5151 = vunpack.c.l.b16 %v5065
    %v5152 = vunpack.c.h.b16 %v5065
    %v5153 = vunpack.c.l.b16 %v5066
    %v5154 = vunpack.c.h.b16 %v5066
    %v5155 = vunpack.c.l.b16 %v5067
    %v5156 = vunpack.c.h.b16 %v5067
    %v5157 = vunpack.c.l.b16 %v5068
    %v5158 = vunpack.c.h.b16 %v5068
    %v5159 = vunpack.c.l.b16 %v5069
    %v5160 = vunpack.c.h.b16 %v5069
    %v5161 = vunpack.c.l.b16 %v5070
    %v5162 = vunpack.c.h.b16 %v5070
    %v5163 = vunpack.c.l.b16 %v5071
    %v5164 = vunpack.c.h.b16 %v5071
    %v5165 = vunpack.c.l.b16 %v5072
    %v5166 = vunpack.c.h.b16 %v5072
    %v5167 = vunpack.c.l.b16 %v5073
    %v5168 = vunpack.c.h.b16 %v5073
    %v5169 = vunpack.c.l.b16 %v5074
    %v5170 = vunpack.c.h.b16 %v5074
    %v5171 = vpack.c.b16 %v5109, %v5107
    %v5172 = vpack.c.b16 %v5110, %v5108
    %v5173 = vpack.c.b16 %v5113, %v5111
    %v5174 = vpack.c.b16 %v5114, %v5112
    %v5175 = vpack.c.b16 %v5117, %v5115
    %v5176 = vpack.c.b16 %v5118, %v5116
    %v5177 = vpack.c.b16 %v5121, %v5119
    %v5178 = vpack.c.b16 %v5122, %v5120
    %v5179 = vpack.c.b16 %v5125, %v5123
    %v5180 = vpack.c.b16 %v5126, %v5124
    %v5181 = vpack.c.b16 %v5129, %v5127
    %v5182 = vpack.c.b16 %v5130, %v5128
    %v5183 = vpack.c.b16 %v5133, %v5131
    %v5184 = vpack.c.b16 %v5134, %v5132
    %v5185 = vpack.c.b16 %v5137, %v5135
    %v5186 = vpack.c.b16 %v5138, %v5136
    %v5187 = vpack.c.b16 %v5141, %v5139
    %v5188 = vpack.c.b16 %v5142, %v5140
    %v5189 = vpack.c.b16 %v5145, %v5143
    %v5190 = vpack.c.b16 %v5146, %v5144
    %v5191 = vpack.c.b16 %v5149, %v5147
    %v5192 = vpack.c.b16 %v5150, %v5148
    %v5193 = vpack.c.b16 %v5153, %v5151
    %v5194 = vpack.c.b16 %v5154, %v5152
    %v5195 = vpack.c.b16 %v5157, %v5155
    %v5196 = vpack.c.b16 %v5158, %v5156
    %v5197 = vpack.c.b16 %v5161, %v5159
    %v5198 = vpack.c.b16 %v5162, %v5160
    %v5199 = vpack.c.b16 %v5165, %v5163
    %v5200 = vpack.c.b16 %v5166, %v5164
    %v5201 = vpack.c.b16 %v5169, %v5167
    %v5202 = vpack.c.b16 %v5170, %v5168
    %5235 = vmatprep.subr.bf16.mxu0 %v5186
    %5236 = vmatpush1.bf16.msra.mxu0 %v5185
    %5237 = vmatprep.subr.bf16.mxu0 %v5184
    %5238 = vmatpush1.bf16.msra.mxu0 %v5183
    %5239 = vmatprep.subr.bf16.mxu0 %v5182
    %5240 = vmatpush1.bf16.msra.mxu0 %v5181
    %5241 = vmatprep.subr.bf16.mxu0 %v5180
    %5242 = vmatpush1.bf16.msra.mxu0 %v5179
    %5243 = vmatprep.subr.bf16.mxu0 %v5178
    %5244 = vmatpush1.bf16.msra.mxu0 %v5177
    %5245 = vmatprep.subr.bf16.mxu0 %v5176
    %5246 = vmatpush1.bf16.msra.mxu0 %v5175
    %5247 = vmatprep.subr.bf16.mxu0 %v5174
    %5248 = vmatpush1.bf16.msra.mxu0 %v5173
    %5249 = vmatprep.subr.bf16.mxu0 %v5172
    %5250 = vmatpush1.bf16.msra.mxu0 %v5171
    %5251 = vmatprep.subr.bf16.mxu0 %v5202
    %5252 = vmatpush2.bf16.msra.mxu0 %v5201
    %5253 = vmatprep.subr.bf16.mxu0 %v5200
    %5254 = vmatpush2.bf16.msra.mxu0 %v5199
    %5255 = vmatprep.subr.bf16.mxu0 %v5198
    %5256 = vmatpush2.bf16.msra.mxu0 %v5197
    %5257 = vmatprep.subr.bf16.mxu0 %v5196
    %5258 = vmatpush2.bf16.msra.mxu0 %v5195
    %5259 = vmatprep.subr.bf16.mxu0 %v5194
    %5260 = vmatpush2.bf16.msra.mxu0 %v5193
    %5261 = vmatprep.subr.bf16.mxu0 %v5192
    %5262 = vmatpush2.bf16.msra.mxu0 %v5191
    %5263 = vmatprep.subr.bf16.mxu0 %v5190
    %5264 = vmatpush2.bf16.msra.mxu0 %v5189
    %5265 = vmatprep.subr.bf16.mxu0 %v5188
    %5266 = vmatpush2.bf16.msra.mxu0 %v5187
    %5267 = vmatprep.mubr.bf16.mxu0 %v5042
    %5268 = vmatmul.mubr.bf16.gmra.mxu0 %v5041
    %v5269 = vpop.f32.mrf.mxu0
    %v5270 = vadd.f32 0.0, %v5269
    %v5271 = vpop.f32.mrf.mxu0
    %v5272 = vadd.f32 0.0, %v5271
    %v5273 = vpop.f32.mrf.mxu0
    %v5274 = vadd.f32 0.0, %v5273
    %v5275 = vpop.f32.mrf.mxu0
    %v5276 = vadd.f32 0.0, %v5275
    %5277 = vdwg.mxu0
    %v5278 = vadd.f32 %v5033, %v5270
    %v5279 = vadd.f32 %v5035, %v5272
    %v5280 = vadd.f32 %v5037, %v5274
    %v5281 = vadd.f32 %v5039, %v5276
    %v5282 = vld [vmem:[#allocation12] sm:$0x3]
    %v5284 = vlaneseq
    %v5285 = vshrl.u32 %v5284, 7
    %v5286 = vsub.s32 0, %v5285
    %v5287 = vrot.slane %v5282, %v5286
    %v5288 = vlaneseq
    %v5289 = vshrl.u32 %v5288, 7
    %v5290 = vsub.s32 1, %v5289
    %v5291 = vrot.slane %v5282, %v5290
    %v5294 = vadd.f32 %v5278, %v5287
    %v5295 = vadd.f32 %v5279, %v5291
    %v5296 = vadd.f32 %v5280, %v5287
    %v5297 = vadd.f32 %v5281, %v5291
    %v5298 = vmax.f32 %v5294, 0.0
    %v5299 = vmax.f32 %v5295, 0.0
    %v5300 = vmax.f32 %v5296, 0.0
    %v5301 = vmax.f32 %v5297, 0.0
    %v5302 = vrot.slane %v5298, 7
    %v5303 = vrot.slane %v5299, 7
    %v5304 = vrot.slane %v5300, 7
    %v5305 = vrot.slane %v5301, 7
    %v5306 = vsel %vm4537, %v5302, %v5304
    %v5307 = vsel %vm4537, %v5303, %v5305
    %v5308 = vsel %vm4537, %v5304, %v5302
    %v5309 = vsel %vm4537, %v5305, %v5303
    %v5310 = vsel %vm4544, 0.0, %v5308
    %v5311 = vsel %vm4544, 0.0, %v5309
    %v5312 = vsel %vm4545, 0.0, %v5306
    %v5313 = vsel %vm4545, 0.0, %v5307
    %v5314 = vrot.slane %v5298, 1
    %v5315 = vrot.slane %v5299, 1
    %v5316 = vrot.slane %v5300, 1
    %v5317 = vrot.slane %v5301, 1
    %v5318 = vsel %vm4554, %v5314, %v5316
    %v5319 = vsel %vm4554, %v5315, %v5317
    %v5320 = vsel %vm4554, %v5316, %v5314
    %v5321 = vsel %vm4554, %v5317, %v5315
    %v5322 = vsel %vm4561, 0.0, %v5318
    %v5323 = vsel %vm4561, 0.0, %v5319
    %v5324 = vsel %vm4562, 0.0, %v5320
    %v5325 = vsel %vm4562, 0.0, %v5321
    %v5326 = vpack.c.bf16 %v5312, %v5310
    %v5327 = vpack.c.bf16 %v5313, %v5311
    %v5328 = vld [vmem:[#allocation13] sm:$0xf]
    %v5329 = vld [vmem:[#allocation13 + $0x4] sm:$0xf]
    %v5330 = vld [vmem:[#allocation13 + $0x8] sm:$0xf]
    %v5331 = vld [vmem:[#allocation13 + $0xc] sm:$0xf]
    %v5332 = vld [vmem:[#allocation13 + $0x10] sm:$0xf]
    %v5333 = vld [vmem:[#allocation13 + $0x14] sm:$0xf]
    %v5334 = vld [vmem:[#allocation13 + $0x18] sm:$0xf]
    %v5335 = vld [vmem:[#allocation13 + $0x1c] sm:$0xf]
    %v5336 = vld [vmem:[#allocation13 + $0x20] sm:$0xf]
    %v5337 = vld [vmem:[#allocation13 + $0x24] sm:$0xf]
    %v5338 = vld [vmem:[#allocation13 + $0x28] sm:$0xf]
    %v5339 = vld [vmem:[#allocation13 + $0x2c] sm:$0xf]
    %v5340 = vld [vmem:[#allocation13 + $0x30] sm:$0xf]
    %v5341 = vld [vmem:[#allocation13 + $0x34] sm:$0xf]
    %v5342 = vld [vmem:[#allocation13 + $0x38] sm:$0xf]
    %v5343 = vld [vmem:[#allocation13 + $0x3c] sm:$0xf]
    %v5344 = vld [vmem:[#allocation13 + $0x40] sm:$0xf]
    %v5345 = vld [vmem:[#allocation13 + $0x44] sm:$0xf]
    %v5346 = vld [vmem:[#allocation13 + $0x48] sm:$0xf]
    %v5347 = vld [vmem:[#allocation13 + $0x4c] sm:$0xf]
    %v5348 = vld [vmem:[#allocation13 + $0x50] sm:$0xf]
    %v5349 = vld [vmem:[#allocation13 + $0x54] sm:$0xf]
    %v5350 = vld [vmem:[#allocation13 + $0x58] sm:$0xf]
    %v5351 = vld [vmem:[#allocation13 + $0x5c] sm:$0xf]
    %v5352 = vld [vmem:[#allocation13 + $0x60] sm:$0xf]
    %v5353 = vld [vmem:[#allocation13 + $0x64] sm:$0xf]
    %v5354 = vld [vmem:[#allocation13 + $0x68] sm:$0xf]
    %v5355 = vld [vmem:[#allocation13 + $0x6c] sm:$0xf]
    %v5356 = vld [vmem:[#allocation13 + $0x70] sm:$0xf]
    %v5357 = vld [vmem:[#allocation13 + $0x74] sm:$0xf]
    %v5358 = vld [vmem:[#allocation13 + $0x78] sm:$0xf]
    %v5359 = vld [vmem:[#allocation13 + $0x7c] sm:$0xf]
    %v5360 = vpack.c.bf16 %v5300, %v5298
    %v5361 = vpack.c.bf16 %v5301, %v5299
    %v5362 = vld [vmem:[#allocation13 + $0x80] sm:$0xf]
    %v5363 = vld [vmem:[#allocation13 + $0x84] sm:$0xf]
    %v5364 = vld [vmem:[#allocation13 + $0x88] sm:$0xf]
    %v5365 = vld [vmem:[#allocation13 + $0x8c] sm:$0xf]
    %v5366 = vld [vmem:[#allocation13 + $0x90] sm:$0xf]
    %v5367 = vld [vmem:[#allocation13 + $0x94] sm:$0xf]
    %v5368 = vld [vmem:[#allocation13 + $0x98] sm:$0xf]
    %v5369 = vld [vmem:[#allocation13 + $0x9c] sm:$0xf]
    %v5370 = vld [vmem:[#allocation13 + $0xa0] sm:$0xf]
    %v5371 = vld [vmem:[#allocation13 + $0xa4] sm:$0xf]
    %v5372 = vld [vmem:[#allocation13 + $0xa8] sm:$0xf]
    %v5373 = vld [vmem:[#allocation13 + $0xac] sm:$0xf]
    %v5374 = vld [vmem:[#allocation13 + $0xb0] sm:$0xf]
    %v5375 = vld [vmem:[#allocation13 + $0xb4] sm:$0xf]
    %v5376 = vld [vmem:[#allocation13 + $0xb8] sm:$0xf]
    %v5377 = vld [vmem:[#allocation13 + $0xbc] sm:$0xf]
    %v5378 = vld [vmem:[#allocation13 + $0xc0] sm:$0xf]
    %v5379 = vld [vmem:[#allocation13 + $0xc4] sm:$0xf]
    %v5380 = vld [vmem:[#allocation13 + $0xc8] sm:$0xf]
    %v5381 = vld [vmem:[#allocation13 + $0xcc] sm:$0xf]
    %v5382 = vld [vmem:[#allocation13 + $0xd0] sm:$0xf]
    %v5383 = vld [vmem:[#allocation13 + $0xd4] sm:$0xf]
    %v5384 = vld [vmem:[#allocation13 + $0xd8] sm:$0xf]
    %v5385 = vld [vmem:[#allocation13 + $0xdc] sm:$0xf]
    %v5386 = vld [vmem:[#allocation13 + $0xe0] sm:$0xf]
    %v5387 = vld [vmem:[#allocation13 + $0xe4] sm:$0xf]
    %v5388 = vld [vmem:[#allocation13 + $0xe8] sm:$0xf]
    %v5389 = vld [vmem:[#allocation13 + $0xec] sm:$0xf]
    %v5390 = vld [vmem:[#allocation13 + $0xf0] sm:$0xf]
    %v5391 = vld [vmem:[#allocation13 + $0xf4] sm:$0xf]
    %v5392 = vld [vmem:[#allocation13 + $0xf8] sm:$0xf]
    %v5393 = vld [vmem:[#allocation13 + $0xfc] sm:$0xf]
    %v5426 = vunpack.c.l.b16 %v5362
    %v5427 = vunpack.c.l.b16 %v5363
    %v5428 = vunpack.c.l.b16 %v5364
    %v5429 = vunpack.c.l.b16 %v5365
    %v5430 = vunpack.c.l.b16 %v5366
    %v5431 = vunpack.c.l.b16 %v5367
    %v5432 = vunpack.c.l.b16 %v5368
    %v5433 = vunpack.c.l.b16 %v5369
    %v5434 = vunpack.c.l.b16 %v5370
    %v5435 = vunpack.c.l.b16 %v5371
    %v5436 = vunpack.c.l.b16 %v5372
    %v5437 = vunpack.c.l.b16 %v5373
    %v5438 = vunpack.c.l.b16 %v5374
    %v5439 = vunpack.c.l.b16 %v5375
    %v5440 = vunpack.c.l.b16 %v5376
    %v5441 = vunpack.c.l.b16 %v5377
    %v5442 = vunpack.c.l.b16 %v5378
    %v5443 = vunpack.c.l.b16 %v5379
    %v5444 = vunpack.c.l.b16 %v5380
    %v5445 = vunpack.c.l.b16 %v5381
    %v5446 = vunpack.c.l.b16 %v5382
    %v5447 = vunpack.c.l.b16 %v5383
    %v5448 = vunpack.c.l.b16 %v5384
    %v5449 = vunpack.c.l.b16 %v5385
    %v5450 = vunpack.c.l.b16 %v5386
    %v5451 = vunpack.c.l.b16 %v5387
    %v5452 = vunpack.c.l.b16 %v5388
    %v5453 = vunpack.c.l.b16 %v5389
    %v5454 = vunpack.c.l.b16 %v5390
    %v5455 = vunpack.c.l.b16 %v5391
    %v5456 = vunpack.c.l.b16 %v5392
    %v5457 = vunpack.c.l.b16 %v5393
    %v5458 = vpack.c.b16 %v5427, %v5426
    %v5459 = vpack.c.b16 %v5429, %v5428
    %v5460 = vpack.c.b16 %v5431, %v5430
    %v5461 = vpack.c.b16 %v5433, %v5432
    %v5462 = vpack.c.b16 %v5435, %v5434
    %v5463 = vpack.c.b16 %v5437, %v5436
    %v5464 = vpack.c.b16 %v5439, %v5438
    %v5465 = vpack.c.b16 %v5441, %v5440
    %v5466 = vpack.c.b16 %v5443, %v5442
    %v5467 = vpack.c.b16 %v5445, %v5444
    %v5468 = vpack.c.b16 %v5447, %v5446
    %v5469 = vpack.c.b16 %v5449, %v5448
    %v5470 = vpack.c.b16 %v5451, %v5450
    %v5471 = vpack.c.b16 %v5453, %v5452
    %v5472 = vpack.c.b16 %v5455, %v5454
    %v5473 = vpack.c.b16 %v5457, %v5456
    %5490 = vmatprep.subr.bf16.mxu0 0
    %5491 = vmatpush1.bf16.msra.mxu0 %v5465
    %5492 = vmatprep.subr.bf16.mxu0 0
    %5493 = vmatpush1.bf16.msra.mxu0 %v5464
    %5494 = vmatprep.subr.bf16.mxu0 0
    %5495 = vmatpush1.bf16.msra.mxu0 %v5463
    %5496 = vmatprep.subr.bf16.mxu0 0
    %5497 = vmatpush1.bf16.msra.mxu0 %v5462
    %5498 = vmatprep.subr.bf16.mxu0 0
    %5499 = vmatpush1.bf16.msra.mxu0 %v5461
    %5500 = vmatprep.subr.bf16.mxu0 0
    %5501 = vmatpush1.bf16.msra.mxu0 %v5460
    %5502 = vmatprep.subr.bf16.mxu0 0
    %5503 = vmatpush1.bf16.msra.mxu0 %v5459
    %5504 = vmatprep.subr.bf16.mxu0 0
    %5505 = vmatpush1.bf16.msra.mxu0 %v5458
    %5506 = vmatprep.subr.bf16.mxu0 0
    %5507 = vmatpush2.bf16.msra.mxu0 %v5473
    %5508 = vmatprep.subr.bf16.mxu0 0
    %5509 = vmatpush2.bf16.msra.mxu0 %v5472
    %5510 = vmatprep.subr.bf16.mxu0 0
    %5511 = vmatpush2.bf16.msra.mxu0 %v5471
    %5512 = vmatprep.subr.bf16.mxu0 0
    %5513 = vmatpush2.bf16.msra.mxu0 %v5470
    %5514 = vmatprep.subr.bf16.mxu0 0
    %5515 = vmatpush2.bf16.msra.mxu0 %v5469
    %5516 = vmatprep.subr.bf16.mxu0 0
    %5517 = vmatpush2.bf16.msra.mxu0 %v5468
    %5518 = vmatprep.subr.bf16.mxu0 0
    %5519 = vmatpush2.bf16.msra.mxu0 %v5467
    %5520 = vmatprep.subr.bf16.mxu0 0
    %5521 = vmatpush2.bf16.msra.mxu0 %v5466
    %5522 = vmatprep.mubr.bf16.mxu0 %v5361
    %5523 = vmatmul.mubr.bf16.gmra.mxu0 %v5360
    %v5524 = vpop.f32.mrf.mxu0
    %v5525 = vadd.f32 0.0, %v5524
    %v5526 = vpop.f32.mrf.mxu0
    %v5527 = vpop.f32.mrf.mxu0
    %v5528 = vadd.f32 0.0, %v5527
    %v5529 = vpop.f32.mrf.mxu0
    %5530 = vdwg.mxu0
    %v5563 = vunpack.c.l.b16 %v5328
    %v5564 = vunpack.c.l.b16 %v5329
    %v5565 = vunpack.c.l.b16 %v5330
    %v5566 = vunpack.c.l.b16 %v5331
    %v5567 = vunpack.c.l.b16 %v5332
    %v5568 = vunpack.c.l.b16 %v5333
    %v5569 = vunpack.c.l.b16 %v5334
    %v5570 = vunpack.c.l.b16 %v5335
    %v5571 = vunpack.c.l.b16 %v5336
    %v5572 = vunpack.c.l.b16 %v5337
    %v5573 = vunpack.c.l.b16 %v5338
    %v5574 = vunpack.c.l.b16 %v5339
    %v5575 = vunpack.c.l.b16 %v5340
    %v5576 = vunpack.c.l.b16 %v5341
    %v5577 = vunpack.c.l.b16 %v5342
    %v5578 = vunpack.c.l.b16 %v5343
    %v5579 = vunpack.c.l.b16 %v5344
    %v5580 = vunpack.c.l.b16 %v5345
    %v5581 = vunpack.c.l.b16 %v5346
    %v5582 = vunpack.c.l.b16 %v5347
    %v5583 = vunpack.c.l.b16 %v5348
    %v5584 = vunpack.c.l.b16 %v5349
    %v5585 = vunpack.c.l.b16 %v5350
    %v5586 = vunpack.c.l.b16 %v5351
    %v5587 = vunpack.c.l.b16 %v5352
    %v5588 = vunpack.c.l.b16 %v5353
    %v5589 = vunpack.c.l.b16 %v5354
    %v5590 = vunpack.c.l.b16 %v5355
    %v5591 = vunpack.c.l.b16 %v5356
    %v5592 = vunpack.c.l.b16 %v5357
    %v5593 = vunpack.c.l.b16 %v5358
    %v5594 = vunpack.c.l.b16 %v5359
    %v5595 = vpack.c.b16 %v5564, %v5563
    %v5596 = vpack.c.b16 %v5566, %v5565
    %v5597 = vpack.c.b16 %v5568, %v5567
    %v5598 = vpack.c.b16 %v5570, %v5569
    %v5599 = vpack.c.b16 %v5572, %v5571
    %v5600 = vpack.c.b16 %v5574, %v5573
    %v5601 = vpack.c.b16 %v5576, %v5575
    %v5602 = vpack.c.b16 %v5578, %v5577
    %v5603 = vpack.c.b16 %v5580, %v5579
    %v5604 = vpack.c.b16 %v5582, %v5581
    %v5605 = vpack.c.b16 %v5584, %v5583
    %v5606 = vpack.c.b16 %v5586, %v5585
    %v5607 = vpack.c.b16 %v5588, %v5587
    %v5608 = vpack.c.b16 %v5590, %v5589
    %v5609 = vpack.c.b16 %v5592, %v5591
    %v5610 = vpack.c.b16 %v5594, %v5593
    %5627 = vmatprep.subr.bf16.mxu0 0
    %5628 = vmatpush1.bf16.msra.mxu0 %v5602
    %5629 = vmatprep.subr.bf16.mxu0 0
    %5630 = vmatpush1.bf16.msra.mxu0 %v5601
    %5631 = vmatprep.subr.bf16.mxu0 0
    %5632 = vmatpush1.bf16.msra.mxu0 %v5600
    %5633 = vmatprep.subr.bf16.mxu0 0
    %5634 = vmatpush1.bf16.msra.mxu0 %v5599
    %5635 = vmatprep.subr.bf16.mxu0 0
    %5636 = vmatpush1.bf16.msra.mxu0 %v5598
    %5637 = vmatprep.subr.bf16.mxu0 0
    %5638 = vmatpush1.bf16.msra.mxu0 %v5597
    %5639 = vmatprep.subr.bf16.mxu0 0
    %5640 = vmatpush1.bf16.msra.mxu0 %v5596
    %5641 = vmatprep.subr.bf16.mxu0 0
    %5642 = vmatpush1.bf16.msra.mxu0 %v5595
    %5643 = vmatprep.subr.bf16.mxu0 0
    %5644 = vmatpush2.bf16.msra.mxu0 %v5610
    %5645 = vmatprep.subr.bf16.mxu0 0
    %5646 = vmatpush2.bf16.msra.mxu0 %v5609
    %5647 = vmatprep.subr.bf16.mxu0 0
    %5648 = vmatpush2.bf16.msra.mxu0 %v5608
    %5649 = vmatprep.subr.bf16.mxu0 0
    %5650 = vmatpush2.bf16.msra.mxu0 %v5607
    %5651 = vmatprep.subr.bf16.mxu0 0
    %5652 = vmatpush2.bf16.msra.mxu0 %v5606
    %5653 = vmatprep.subr.bf16.mxu0 0
    %5654 = vmatpush2.bf16.msra.mxu0 %v5605
    %5655 = vmatprep.subr.bf16.mxu0 0
    %5656 = vmatpush2.bf16.msra.mxu0 %v5604
    %5657 = vmatprep.subr.bf16.mxu0 0
    %5658 = vmatpush2.bf16.msra.mxu0 %v5603
    %5659 = vmatprep.mubr.bf16.mxu0 %v5327
    %5660 = vmatmul.mubr.bf16.gmra.mxu0 %v5326
    %v5661 = vpop.f32.mrf.mxu0
    %v5662 = vadd.f32 %v5525, %v5661
    %v5663 = vpop.f32.mrf.mxu0
    %v5664 = vpop.f32.mrf.mxu0
    %v5665 = vadd.f32 %v5528, %v5664
    %v5666 = vpop.f32.mrf.mxu0
    %5667 = vdwg.mxu0
    %v5668 = vpack.c.bf16 %v5324, %v5322
    %v5669 = vpack.c.bf16 %v5325, %v5323
    %v5670 = vld [vmem:[#allocation13 + $0x100] sm:$0xf]
    %v5671 = vld [vmem:[#allocation13 + $0x104] sm:$0xf]
    %v5672 = vld [vmem:[#allocation13 + $0x108] sm:$0xf]
    %v5673 = vld [vmem:[#allocation13 + $0x10c] sm:$0xf]
    %v5674 = vld [vmem:[#allocation13 + $0x110] sm:$0xf]
    %v5675 = vld [vmem:[#allocation13 + $0x114] sm:$0xf]
    %v5676 = vld [vmem:[#allocation13 + $0x118] sm:$0xf]
    %v5677 = vld [vmem:[#allocation13 + $0x11c] sm:$0xf]
    %v5678 = vld [vmem:[#allocation13 + $0x120] sm:$0xf]
    %v5679 = vld [vmem:[#allocation13 + $0x124] sm:$0xf]
    %v5680 = vld [vmem:[#allocation13 + $0x128] sm:$0xf]
    %v5681 = vld [vmem:[#allocation13 + $0x12c] sm:$0xf]
    %v5682 = vld [vmem:[#allocation13 + $0x130] sm:$0xf]
    %v5683 = vld [vmem:[#allocation13 + $0x134] sm:$0xf]
    %v5684 = vld [vmem:[#allocation13 + $0x138] sm:$0xf]
    %v5685 = vld [vmem:[#allocation13 + $0x13c] sm:$0xf]
    %v5686 = vld [vmem:[#allocation13 + $0x140] sm:$0xf]
    %v5687 = vld [vmem:[#allocation13 + $0x144] sm:$0xf]
    %v5688 = vld [vmem:[#allocation13 + $0x148] sm:$0xf]
    %v5689 = vld [vmem:[#allocation13 + $0x14c] sm:$0xf]
    %v5690 = vld [vmem:[#allocation13 + $0x150] sm:$0xf]
    %v5691 = vld [vmem:[#allocation13 + $0x154] sm:$0xf]
    %v5692 = vld [vmem:[#allocation13 + $0x158] sm:$0xf]
    %v5693 = vld [vmem:[#allocation13 + $0x15c] sm:$0xf]
    %v5694 = vld [vmem:[#allocation13 + $0x160] sm:$0xf]
    %v5695 = vld [vmem:[#allocation13 + $0x164] sm:$0xf]
    %v5696 = vld [vmem:[#allocation13 + $0x168] sm:$0xf]
    %v5697 = vld [vmem:[#allocation13 + $0x16c] sm:$0xf]
    %v5698 = vld [vmem:[#allocation13 + $0x170] sm:$0xf]
    %v5699 = vld [vmem:[#allocation13 + $0x174] sm:$0xf]
    %v5700 = vld [vmem:[#allocation13 + $0x178] sm:$0xf]
    %v5701 = vld [vmem:[#allocation13 + $0x17c] sm:$0xf]
    %v5734 = vunpack.c.l.b16 %v5670
    %v5735 = vunpack.c.l.b16 %v5671
    %v5736 = vunpack.c.l.b16 %v5672
    %v5737 = vunpack.c.l.b16 %v5673
    %v5738 = vunpack.c.l.b16 %v5674
    %v5739 = vunpack.c.l.b16 %v5675
    %v5740 = vunpack.c.l.b16 %v5676
    %v5741 = vunpack.c.l.b16 %v5677
    %v5742 = vunpack.c.l.b16 %v5678
    %v5743 = vunpack.c.l.b16 %v5679
    %v5744 = vunpack.c.l.b16 %v5680
    %v5745 = vunpack.c.l.b16 %v5681
    %v5746 = vunpack.c.l.b16 %v5682
    %v5747 = vunpack.c.l.b16 %v5683
    %v5748 = vunpack.c.l.b16 %v5684
    %v5749 = vunpack.c.l.b16 %v5685
    %v5750 = vunpack.c.l.b16 %v5686
    %v5751 = vunpack.c.l.b16 %v5687
    %v5752 = vunpack.c.l.b16 %v5688
    %v5753 = vunpack.c.l.b16 %v5689
    %v5754 = vunpack.c.l.b16 %v5690
    %v5755 = vunpack.c.l.b16 %v5691
    %v5756 = vunpack.c.l.b16 %v5692
    %v5757 = vunpack.c.l.b16 %v5693
    %v5758 = vunpack.c.l.b16 %v5694
    %v5759 = vunpack.c.l.b16 %v5695
    %v5760 = vunpack.c.l.b16 %v5696
    %v5761 = vunpack.c.l.b16 %v5697
    %v5762 = vunpack.c.l.b16 %v5698
    %v5763 = vunpack.c.l.b16 %v5699
    %v5764 = vunpack.c.l.b16 %v5700
    %v5765 = vunpack.c.l.b16 %v5701
    %v5766 = vpack.c.b16 %v5735, %v5734
    %v5767 = vpack.c.b16 %v5737, %v5736
    %v5768 = vpack.c.b16 %v5739, %v5738
    %v5769 = vpack.c.b16 %v5741, %v5740
    %v5770 = vpack.c.b16 %v5743, %v5742
    %v5771 = vpack.c.b16 %v5745, %v5744
    %v5772 = vpack.c.b16 %v5747, %v5746
    %v5773 = vpack.c.b16 %v5749, %v5748
    %v5774 = vpack.c.b16 %v5751, %v5750
    %v5775 = vpack.c.b16 %v5753, %v5752
    %v5776 = vpack.c.b16 %v5755, %v5754
    %v5777 = vpack.c.b16 %v5757, %v5756
    %v5778 = vpack.c.b16 %v5759, %v5758
    %v5779 = vpack.c.b16 %v5761, %v5760
    %v5780 = vpack.c.b16 %v5763, %v5762
    %v5781 = vpack.c.b16 %v5765, %v5764
    %5798 = vmatprep.subr.bf16.mxu0 0
    %5799 = vmatpush1.bf16.msra.mxu0 %v5773
    %5800 = vmatprep.subr.bf16.mxu0 0
    %5801 = vmatpush1.bf16.msra.mxu0 %v5772
    %5802 = vmatprep.subr.bf16.mxu0 0
    %5803 = vmatpush1.bf16.msra.mxu0 %v5771
    %5804 = vmatprep.subr.bf16.mxu0 0
    %5805 = vmatpush1.bf16.msra.mxu0 %v5770
    %5806 = vmatprep.subr.bf16.mxu0 0
    %5807 = vmatpush1.bf16.msra.mxu0 %v5769
    %5808 = vmatprep.subr.bf16.mxu0 0
    %5809 = vmatpush1.bf16.msra.mxu0 %v5768
    %5810 = vmatprep.subr.bf16.mxu0 0
    %5811 = vmatpush1.bf16.msra.mxu0 %v5767
    %5812 = vmatprep.subr.bf16.mxu0 0
    %5813 = vmatpush1.bf16.msra.mxu0 %v5766
    %5814 = vmatprep.subr.bf16.mxu0 0
    %5815 = vmatpush2.bf16.msra.mxu0 %v5781
    %5816 = vmatprep.subr.bf16.mxu0 0
    %5817 = vmatpush2.bf16.msra.mxu0 %v5780
    %5818 = vmatprep.subr.bf16.mxu0 0
    %5819 = vmatpush2.bf16.msra.mxu0 %v5779
    %5820 = vmatprep.subr.bf16.mxu0 0
    %5821 = vmatpush2.bf16.msra.mxu0 %v5778
    %5822 = vmatprep.subr.bf16.mxu0 0
    %5823 = vmatpush2.bf16.msra.mxu0 %v5777
    %5824 = vmatprep.subr.bf16.mxu0 0
    %5825 = vmatpush2.bf16.msra.mxu0 %v5776
    %5826 = vmatprep.subr.bf16.mxu0 0
    %5827 = vmatpush2.bf16.msra.mxu0 %v5775
    %5828 = vmatprep.subr.bf16.mxu0 0
    %5829 = vmatpush2.bf16.msra.mxu0 %v5774
    %5830 = vmatprep.mubr.bf16.mxu0 %v5669
    %5831 = vmatmul.mubr.bf16.gmra.mxu0 %v5668
    %v5832 = vpop.f32.mrf.mxu0
    %v5833 = vadd.f32 0.0, %v5832
    %v5834 = vpop.f32.mrf.mxu0
    %v5835 = vpop.f32.mrf.mxu0
    %v5836 = vadd.f32 0.0, %v5835
    %v5837 = vpop.f32.mrf.mxu0
    %5838 = vdwg.mxu0
    %v5839 = vadd.f32 %v5662, %v5833
    %v5840 = vadd.f32 %v5665, %v5836
    %v5841 = vld [vmem:[#allocation15] sm:$0x1]
    %v5843 = vlaneseq
    %v5844 = vshrl.u32 %v5843, 7
    %v5845 = vsub.s32 0, %v5844
    %v5846 = vrot.slane %v5841, %v5845
    %v5848 = vadd.f32 %v5839, %v5846
    %v5849 = vadd.f32 %v5840, %v5846
    %v5850 = vrot.slane %v5848, 4
    %v5851 = vmax.f32 %v5848, %v5850
    %v5852 = vrot.slane %v5851, 2
    %v5853 = vmax.f32 %v5851, %v5852
    %v5854 = vrot.slane %v5853, 1
    %v5855 = vmax.f32 %v5853, %v5854
    %v5856 = vrot.slane %v5849, 4
    %v5857 = vmax.f32 %v5849, %v5856
    %v5858 = vrot.slane %v5857, 2
    %v5859 = vmax.f32 %v5857, %v5858
    %v5860 = vrot.slane %v5859, 1
    %v5861 = vmax.f32 %v5859, %v5860
    %v5862 = vpack.c.bf16 %v5855, %v5855
    %v5863 = vpack.c.bf16 %v5861, %v5861
    %v5864 = vld [vmem:[#allocation16] sm:$0xf]
    %v5865 = vld [vmem:[#allocation16 + $0x4] sm:$0xf]
    %v5866 = vld [vmem:[#allocation16 + $0x8] sm:$0xf]
    %v5867 = vld [vmem:[#allocation16 + $0xc] sm:$0xf]
    %v5868 = vld [vmem:[#allocation16 + $0x10] sm:$0xf]
    %v5869 = vld [vmem:[#allocation16 + $0x14] sm:$0xf]
    %v5870 = vld [vmem:[#allocation16 + $0x18] sm:$0xf]
    %v5871 = vld [vmem:[#allocation16 + $0x1c] sm:$0xf]
    %v5872 = vld [vmem:[#allocation16 + $0x20] sm:$0xf]
    %v5873 = vld [vmem:[#allocation16 + $0x24] sm:$0xf]
    %v5874 = vld [vmem:[#allocation16 + $0x28] sm:$0xf]
    %v5875 = vld [vmem:[#allocation16 + $0x2c] sm:$0xf]
    %v5876 = vld [vmem:[#allocation16 + $0x30] sm:$0xf]
    %v5877 = vld [vmem:[#allocation16 + $0x34] sm:$0xf]
    %v5878 = vld [vmem:[#allocation16 + $0x38] sm:$0xf]
    %v5879 = vld [vmem:[#allocation16 + $0x3c] sm:$0xf]
    %v5880 = vld [vmem:[#allocation18] sm:$0x1]
    %v5882 = vlaneseq
    %v5883 = vshrl.u32 %v5882, 7
    %v5884 = vsub.s32 0, %v5883
    %v5885 = vrot.slane %v5880, %v5884
    %v5889 = vunpack.c.l.b16 %v5862
    %v5890 = vunpack.c.l.b16 %v5863
    %vm5891 = vcmask 1041409
    %v5892 = vsel %vm5891, %v5890, %v5889
    %v5893 = vpack.c.b16 %v5892, %v5892
    %v5911 = vunpack.c.l.b16 %v5864
    %v5912 = vunpack.c.l.b16 %v5865
    %v5913 = vunpack.c.l.b16 %v5866
    %v5914 = vunpack.c.l.b16 %v5867
    %v5915 = vunpack.c.l.b16 %v5868
    %v5916 = vunpack.c.l.b16 %v5869
    %v5917 = vunpack.c.l.b16 %v5870
    %v5918 = vunpack.c.l.b16 %v5871
    %v5919 = vunpack.c.l.b16 %v5872
    %v5920 = vunpack.c.l.b16 %v5873
    %v5921 = vunpack.c.l.b16 %v5874
    %v5922 = vunpack.c.l.b16 %v5875
    %v5923 = vunpack.c.l.b16 %v5876
    %v5924 = vunpack.c.l.b16 %v5877
    %v5925 = vunpack.c.l.b16 %v5878
    %v5926 = vunpack.c.l.b16 %v5879
    %v5927 = vpack.c.b16 %v5912, %v5911
    %v5928 = vpack.c.b16 %v5914, %v5913
    %v5929 = vpack.c.b16 %v5916, %v5915
    %v5930 = vpack.c.b16 %v5918, %v5917
    %v5931 = vpack.c.b16 %v5920, %v5919
    %v5932 = vpack.c.b16 %v5922, %v5921
    %v5933 = vpack.c.b16 %v5924, %v5923
    %v5934 = vpack.c.b16 %v5926, %v5925
    %5943 = vmatprep.subr.bf16.mxu0 0
    %5944 = vmatpush1.bf16.msra.mxu0 %v5934
    %5945 = vmatprep.subr.bf16.mxu0 0
    %5946 = vmatpush1.bf16.msra.mxu0 %v5933
    %5947 = vmatprep.subr.bf16.mxu0 0
    %5948 = vmatpush1.bf16.msra.mxu0 %v5932
    %5949 = vmatprep.subr.bf16.mxu0 0
    %5950 = vmatpush1.bf16.msra.mxu0 %v5931
    %5951 = vmatprep.subr.bf16.mxu0 0
    %5952 = vmatpush1.bf16.msra.mxu0 %v5930
    %5953 = vmatprep.subr.bf16.mxu0 0
    %5954 = vmatpush1.bf16.msra.mxu0 %v5929
    %5955 = vmatprep.subr.bf16.mxu0 0
    %5956 = vmatpush1.bf16.msra.mxu0 %v5928
    %5957 = vmatprep.subr.bf16.mxu0 0
    %5958 = vmatpush1.bf16.msra.mxu0 %v5927
    %5959 = vmatprep.subr.bf16.mxu0 0
    %5960 = vmatpush2.bf16.msra.mxu0 0
    %5961 = vmatprep.subr.bf16.mxu0 0
    %5962 = vmatpush2.bf16.msra.mxu0 0
    %5963 = vmatprep.subr.bf16.mxu0 0
    %5964 = vmatpush2.bf16.msra.mxu0 0
    %5965 = vmatprep.subr.bf16.mxu0 0
    %5966 = vmatpush2.bf16.msra.mxu0 0
    %5967 = vmatprep.subr.bf16.mxu0 0
    %5968 = vmatpush2.bf16.msra.mxu0 0
    %5969 = vmatprep.subr.bf16.mxu0 0
    %5970 = vmatpush2.bf16.msra.mxu0 0
    %5971 = vmatprep.subr.bf16.mxu0 0
    %5972 = vmatpush2.bf16.msra.mxu0 0
    %5973 = vmatprep.subr.bf16.mxu0 0
    %5974 = vmatpush2.bf16.msra.mxu0 0
    %5975 = vmatprep.mubr.bf16.mxu0 0
    %5976 = vmatmul.mubr.bf16.gmra.mxu0 %v5893
    %v5977 = vpop.f32.mrf.mxu0
    %v5978 = vadd.f32 %v5885, %v5977
    %v5979 = vpop.f32.mrf.mxu0
    %v5980 = vpop.f32.mrf.mxu0
    %v5981 = vpop.f32.mrf.mxu0
    %5982 = vdwg.mxu0
    %v5983 = vlaneseq
    %v5984 = vand.u32 %v5983, 127
    %vm5985 = vcmp.eq.s32.totalorder %v5984, 4
    %v5986 = vxor.u32 %v5978, 2147483648
    %v5987 = vmul.f32 %v5986, 1.442695
    %v5988 = vpow.pop %v5987
    %v5989 = vadd.f32 %v5988, 1.0
    %v5990 = vrcp.pop %v5989
    %v5991 = vmul.f32 1.0, %v5990
    %v5992 = vsel %vm5985, 1, 0
    %vm5993 = vcmp.eq.s32.totalorder %v5992, 1
    %v5994 = vsel %vm5993, %v5991, %v5978
    %5995 = vst [vmem:[%s11] sm:$0x3] %v5994
    // Predicated region
    $region90: #{rmsnet_forward.1} parent=1 // pred_check
      _
    $region91: #{rmsnet_forward.1} parent=1 // pred_check_branch
      %5997 = sbr.rel (0) target = $region93
    $region92: #{rmsnet_forward.1} parent=1 // pred_region
      _
    $region93: #{rmsnet_forward.1} parent=1 // pred_fallthru
      _
    // Predicated region
    $region94: #{rmsnet_forward.1} parent=1 // pred_check
      _
    $region95: #{rmsnet_forward.1} parent=1 // pred_check_branch
      %5999 = sbr.rel (0) target = $region97
    $region96: #{rmsnet_forward.1} parent=1 // pred_region
      _
    $region97: #{rmsnet_forward.1} parent=1 // pred_fallthru
      _
    %6000 = vsyncpa [#allocation3], 1
    %6001 = vsyncpa [#allocation5], 1
    %6002 = vsyncpa [#allocation8], 1
    %6003 = vsyncpa [#allocation11], 1
    %6004 = vsyncpa [#allocation14], 1
    %6005 = vsyncpa [#allocation17], 1

</llo_original>
